<compile_context>
chip_gen: v5e
topology: v5e:2x2
jax: 0.10.0
libtpu: 0.0.40
codegen_flags: <defaults>
</compile_context>

<pallas_src>
import functools

import jax
import jax.numpy as jnp
from jax.experimental import pallas as pl
from jax.experimental.pallas import tpu as pltpu

# decoder: 12 -> 32 -> 64 -> 128 -> 784
LAYER_DIMS = [12, 32, 64, 128, 784]
NUM_LAYERS = len(LAYER_DIMS) - 1            # 4
IN_DIM = LAYER_DIMS[0]                      # 12
OUT_DIM = LAYER_DIMS[-1]                    # 784
OUT_DIM_PADDED = 896                        # 7 * 128, lane-dense output


def _decoder_kernel(x_ref, *refs):
    # refs = (w0, b0, w1, b1, w2, b2, w3, b3, out_ref)
    out_ref = refs[-1]
    wb = refs[:-1]

    h = x_ref[...].astype(jnp.float32)                 # (tile, 12)
    for layer in range(NUM_LAYERS):
        w = wb[2 * layer][...]                         # bf16 (in, out[_padded])
        b = wb[2 * layer + 1][...]                     # f32  (1, out[_padded])
        # bf16 operands -> MXU native rate; accumulate in f32.
        h = jnp.dot(h.astype(jnp.bfloat16), w,
                    preferred_element_type=jnp.float32) + b
        if layer == NUM_LAYERS - 1:
            h = jax.nn.sigmoid(h)                      # final Sigmoid (EUP, f32)
        else:
            h = jnp.maximum(h, 0.0)                    # ReLU (VPU, f32)
    out_ref[...] = h.astype(out_ref.dtype)


@functools.partial(jax.jit, static_argnames=("batch_tile",))
def decoder_forward(x, params, batch_tile=256):
    """x: (B, 12) float32. params: list of (W (in,out) f32, b (out,) f32)."""
    B, F = x.shape
    assert F == IN_DIM

    # Pad batch to a multiple of batch_tile (shapes are static under jit).
    num_tiles = pl.cdiv(B, batch_tile)
    B_pad = num_tiles * batch_tile
    if B_pad != B:
        x = jnp.pad(x, ((0, B_pad - B), (0, 0)))

    # Flatten params into interleaved (w, b) inputs.
    #  - weights cast to bf16 (MXU operands)
    #  - last layer's W/b zero-padded 784 -> 896 for lane-dense output stores
    #  - biases reshaped to (1, out) f32
    flat_inputs = []
    in_specs = [pl.BlockSpec((batch_tile, IN_DIM), lambda i: (i, 0))]
    for layer, (w, b) in enumerate(params):
        if layer == NUM_LAYERS - 1:
            w = jnp.pad(w, ((0, 0), (0, OUT_DIM_PADDED - OUT_DIM)))
            b = jnp.pad(b, ((0, OUT_DIM_PADDED - OUT_DIM),))
        w_bf16 = w.astype(jnp.bfloat16)
        b_2d = b.astype(jnp.float32).reshape(1, -1)
        flat_inputs.append(w_bf16)
        flat_inputs.append(b_2d)
        # Full-array blocks, constant index_map -> weights stay VMEM-resident.
        in_specs.append(pl.BlockSpec(w_bf16.shape, lambda i: (0, 0)))
        in_specs.append(pl.BlockSpec(b_2d.shape, lambda i: (0, 0)))

    out = pl.pallas_call(
        _decoder_kernel,
        out_shape=jax.ShapeDtypeStruct((B_pad, OUT_DIM_PADDED), jnp.float32),
        grid_spec=pltpu.PrefetchScalarGridSpec(
            num_scalar_prefetch=0,
            grid=(num_tiles,),
            in_specs=in_specs,
            out_specs=pl.BlockSpec((batch_tile, OUT_DIM_PADDED),
                                   lambda i: (i, 0)),
        ),
        compiler_params=pltpu.CompilerParams(
            dimension_semantics=("parallel",),
            # ~4 MB actually needed at batch_tile=256; 32 MiB is explicit and
            # safe on v5e (16 MiB default scope) and v7x (64 MiB physical).
            vmem_limit_bytes=32 * 1024 * 1024,
        ),
    )(x, *flat_inputs)

    # Trim batch padding and the 784 -> 896 lane padding.
    return out[:B, :OUT_DIM]


def init_params(key):
    """PyTorch nn.Linear default init: U(-1/sqrt(fan_in), 1/sqrt(fan_in))."""
    params = []
    for layer in range(NUM_LAYERS):
        fan_in = LAYER_DIMS[layer]
        fan_out = LAYER_DIMS[layer + 1]
        key, kw, kb = jax.random.split(key, 3)
        bound = 1.0 / (fan_in ** 0.5)
        w = jax.random.uniform(kw, (fan_in, fan_out), jnp.float32, -bound, bound)
        b = jax.random.uniform(kb, (fan_out,), jnp.float32, -bound, bound)
        params.append((w, b))
    return params


def reference_forward_f32(x, params):
    h = x
    for layer, (w, b) in enumerate(params):
        h = h @ w + b
        h = jax.nn.sigmoid(h) if layer == NUM_LAYERS - 1 else jnp.maximum(h, 0.0)
    return h


def reference_forward_bf16(x, params):
    """Reference matching the kernel's numerics (bf16 operands, f32 accum)."""
    h = x.astype(jnp.float32)
    for layer, (w, b) in enumerate(params):
        h = jnp.dot(h.astype(jnp.bfloat16), w.astype(jnp.bfloat16),
                    preferred_element_type=jnp.float32) + b
        h = jax.nn.sigmoid(h) if layer == NUM_LAYERS - 1 else jnp.maximum(h, 0.0)
    return h


if __name__ == "__main__":
    key = jax.random.PRNGKey(0)
    key, kx = jax.random.split(key)

    B = 512  # 2 grid steps at batch_tile=256 -> both v7x TensorCores busy
    x = jax.random.normal(kx, (B, IN_DIM), dtype=jnp.float32)
    params = init_params(key)

    out = jax.block_until_ready(decoder_forward(x, params, batch_tile=256))
    assert out.shape == (B, OUT_DIM)

    ref_bf16 = reference_forward_bf16(x, params)   # numerics-matched reference
    ref_f32 = reference_forward_f32(x, params)     # exact f32 reference
    assert jnp.allclose(out, ref_bf16, atol=2e-3, rtol=2e-3), \
        "mismatch vs bf16-matched reference"
    assert float(jnp.max(jnp.abs(out - ref_f32))) < 5e-2, \
        "mismatch vs f32 reference (beyond bf16 rounding budget)"

    print("KERNEL_OK")
</pallas_src>

<mosaic_0001>
module attributes {stable_mosaic.version = 11 : i64} {
  func.func @_decoder_kernel(%arg0: i32, %arg1: memref<256x12xf32, #tpu.memory_space<vmem>>, %arg2: memref<12x32xbf16, #tpu.memory_space<vmem>>, %arg3: memref<1x32xf32, #tpu.memory_space<vmem>>, %arg4: memref<32x64xbf16, #tpu.memory_space<vmem>>, %arg5: memref<1x64xf32, #tpu.memory_space<vmem>>, %arg6: memref<64x128xbf16, #tpu.memory_space<vmem>>, %arg7: memref<1x128xf32, #tpu.memory_space<vmem>>, %arg8: memref<128x896xbf16, #tpu.memory_space<vmem>>, %arg9: memref<1x896xf32, #tpu.memory_space<vmem>>, %arg10: memref<256x896xf32, #tpu.memory_space<vmem>>) attributes {dimension_semantics = [#tpu.dimension_semantics<parallel>], iteration_bounds = array<i64: 2>, scalar_prefetch = 0 : i64, scratch_operands = 0 : i64, tpu.core_type = #tpu.core_type<tc>, window_params = [{transform_indices = @transform_0, window_bounds = array<i64: 256, 12>}, {pipeline_mode = #tpu.pipeline_mode<synchronous>, transform_indices = @transform_1, window_bounds = array<i64: 12, 32>}, {pipeline_mode = #tpu.pipeline_mode<synchronous>, transform_indices = @transform_2, window_bounds = array<i64: 1, 32>}, {pipeline_mode = #tpu.pipeline_mode<synchronous>, transform_indices = @transform_3, window_bounds = array<i64: 32, 64>}, {pipeline_mode = #tpu.pipeline_mode<synchronous>, transform_indices = @transform_4, window_bounds = array<i64: 1, 64>}, {pipeline_mode = #tpu.pipeline_mode<synchronous>, transform_indices = @transform_5, window_bounds = array<i64: 64, 128>}, {pipeline_mode = #tpu.pipeline_mode<synchronous>, transform_indices = @transform_6, window_bounds = array<i64: 1, 128>}, {pipeline_mode = #tpu.pipeline_mode<synchronous>, transform_indices = @transform_7, window_bounds = array<i64: 128, 896>}, {pipeline_mode = #tpu.pipeline_mode<synchronous>, transform_indices = @transform_8, window_bounds = array<i64: 1, 896>}, {transform_indices = @transform_9, window_bounds = array<i64: 256, 896>}]} {
    %c0 = arith.constant 0 : index
    %c0_0 = arith.constant 0 : index
    %0 = vector.load %arg1[%c0, %c0_0] : memref<256x12xf32, #tpu.memory_space<vmem>>, vector<256x12xf32>
    %c0_1 = arith.constant 0 : index
    %c0_2 = arith.constant 0 : index
    %1 = vector.load %arg2[%c0_1, %c0_2] : memref<12x32xbf16, #tpu.memory_space<vmem>>, vector<12x32xbf16>
    %c0_3 = arith.constant 0 : index
    %c0_4 = arith.constant 0 : index
    %2 = vector.load %arg3[%c0_3, %c0_4] : memref<1x32xf32, #tpu.memory_space<vmem>>, vector<1x32xf32>
    %3 = arith.truncf %0 : vector<256x12xf32> to vector<256x12xbf16>
    %cst = arith.constant dense<0.000000e+00> : vector<256x32xf32>
    %4 = tpu.matmul %3, %1, %cst {dimension_numbers = #tpu.dot_dimension_numbers<[1], [0], [0], [1], [0, 0, 1, 1], [], []>} : vector<256x12xbf16>, vector<12x32xbf16>, vector<256x32xf32> -> vector<256x32xf32>
    %5 = vector.broadcast %2 : vector<1x32xf32> to vector<256x32xf32>
    %6 = arith.addf %4, %5 : vector<256x32xf32>
    %cst_5 = arith.constant 0.000000e+00 : f32
    %7 = vector.broadcast %cst_5 : f32 to vector<256x32xf32>
    %8 = arith.maximumf %6, %7 : vector<256x32xf32>
    %c0_6 = arith.constant 0 : index
    %c0_7 = arith.constant 0 : index
    %9 = vector.load %arg4[%c0_6, %c0_7] : memref<32x64xbf16, #tpu.memory_space<vmem>>, vector<32x64xbf16>
    %c0_8 = arith.constant 0 : index
    %c0_9 = arith.constant 0 : index
    %10 = vector.load %arg5[%c0_8, %c0_9] : memref<1x64xf32, #tpu.memory_space<vmem>>, vector<1x64xf32>
    %11 = arith.truncf %8 : vector<256x32xf32> to vector<256x32xbf16>
    %cst_10 = arith.constant dense<0.000000e+00> : vector<256x64xf32>
    %12 = tpu.matmul %11, %9, %cst_10 {dimension_numbers = #tpu.dot_dimension_numbers<[1], [0], [0], [1], [0, 0, 1, 1], [], []>} : vector<256x32xbf16>, vector<32x64xbf16>, vector<256x64xf32> -> vector<256x64xf32>
    %13 = vector.broadcast %10 : vector<1x64xf32> to vector<256x64xf32>
    %14 = arith.addf %12, %13 : vector<256x64xf32>
    %cst_11 = arith.constant 0.000000e+00 : f32
    %15 = vector.broadcast %cst_11 : f32 to vector<256x64xf32>
    %16 = arith.maximumf %14, %15 : vector<256x64xf32>
    %c0_12 = arith.constant 0 : index
    %c0_13 = arith.constant 0 : index
    %17 = vector.load %arg6[%c0_12, %c0_13] : memref<64x128xbf16, #tpu.memory_space<vmem>>, vector<64x128xbf16>
    %c0_14 = arith.constant 0 : index
    %c0_15 = arith.constant 0 : index
    %18 = vector.load %arg7[%c0_14, %c0_15] : memref<1x128xf32, #tpu.memory_space<vmem>>, vector<1x128xf32>
    %19 = arith.truncf %16 : vector<256x64xf32> to vector<256x64xbf16>
    %cst_16 = arith.constant dense<0.000000e+00> : vector<256x128xf32>
    %20 = tpu.matmul %19, %17, %cst_16 {dimension_numbers = #tpu.dot_dimension_numbers<[1], [0], [0], [1], [0, 0, 1, 1], [], []>} : vector<256x64xbf16>, vector<64x128xbf16>, vector<256x128xf32> -> vector<256x128xf32>
    %21 = vector.broadcast %18 : vector<1x128xf32> to vector<256x128xf32>
    %22 = arith.addf %20, %21 : vector<256x128xf32>
    %cst_17 = arith.constant 0.000000e+00 : f32
    %23 = vector.broadcast %cst_17 : f32 to vector<256x128xf32>
    %24 = arith.maximumf %22, %23 : vector<256x128xf32>
    %c0_18 = arith.constant 0 : index
    %c0_19 = arith.constant 0 : index
    %25 = vector.load %arg8[%c0_18, %c0_19] : memref<128x896xbf16, #tpu.memory_space<vmem>>, vector<128x896xbf16>
    %c0_20 = arith.constant 0 : index
    %c0_21 = arith.constant 0 : index
    %26 = vector.load %arg9[%c0_20, %c0_21] : memref<1x896xf32, #tpu.memory_space<vmem>>, vector<1x896xf32>
    %27 = arith.truncf %24 : vector<256x128xf32> to vector<256x128xbf16>
    %cst_22 = arith.constant dense<0.000000e+00> : vector<256x896xf32>
    %28 = tpu.matmul %27, %25, %cst_22 {dimension_numbers = #tpu.dot_dimension_numbers<[1], [0], [0], [1], [0, 0, 1, 1], [], []>} : vector<256x128xbf16>, vector<128x896xbf16>, vector<256x896xf32> -> vector<256x896xf32>
    %29 = vector.broadcast %26 : vector<1x896xf32> to vector<256x896xf32>
    %30 = arith.addf %28, %29 : vector<256x896xf32>
    %31 = arith.negf %30 : vector<256x896xf32>
    %32 = math.exp %31 : vector<256x896xf32>
    %cst_23 = arith.constant 1.000000e+00 : f32
    %33 = vector.broadcast %cst_23 : f32 to vector<256x896xf32>
    %34 = arith.addf %33, %32 : vector<256x896xf32>
    %35 = arith.divf %33, %34 : vector<256x896xf32>
    %c0_24 = arith.constant 0 : index
    %c0_25 = arith.constant 0 : index
    %36 = vector.load %arg10[%c0_24, %c0_25] : memref<256x896xf32, #tpu.memory_space<vmem>>, vector<256x896xf32>
    tpu.vector_store %arg10[%c0_24, %c0_25], %35 {strides = array<i32>} : memref<256x896xf32, #tpu.memory_space<vmem>>, vector<256x896xf32>,
    return
  }
  func.func @transform_0(%arg0: i32) -> (i32, i32) {
    %c0_i32 = arith.constant 0 : i32
    %c0_i32_0 = arith.constant 0 : i32
    return %arg0, %c0_i32 : i32, i32
  }
  func.func @transform_1(%arg0: i32) -> (i32, i32) {
    %c0_i32 = arith.constant 0 : i32
    %c0_i32_0 = arith.constant 0 : i32
    %c0_i32_1 = arith.constant 0 : i32
    return %c0_i32, %c0_i32_0 : i32, i32
  }
  func.func @transform_2(%arg0: i32) -> (i32, i32) {
    %c0_i32 = arith.constant 0 : i32
    %c0_i32_0 = arith.constant 0 : i32
    %c0_i32_1 = arith.constant 0 : i32
    return %c0_i32, %c0_i32_0 : i32, i32
  }
  func.func @transform_3(%arg0: i32) -> (i32, i32) {
    %c0_i32 = arith.constant 0 : i32
    %c0_i32_0 = arith.constant 0 : i32
    %c0_i32_1 = arith.constant 0 : i32
    return %c0_i32, %c0_i32_0 : i32, i32
  }
  func.func @transform_4(%arg0: i32) -> (i32, i32) {
    %c0_i32 = arith.constant 0 : i32
    %c0_i32_0 = arith.constant 0 : i32
    %c0_i32_1 = arith.constant 0 : i32
    return %c0_i32, %c0_i32_0 : i32, i32
  }
  func.func @transform_5(%arg0: i32) -> (i32, i32) {
    %c0_i32 = arith.constant 0 : i32
    %c0_i32_0 = arith.constant 0 : i32
    %c0_i32_1 = arith.constant 0 : i32
    return %c0_i32, %c0_i32_0 : i32, i32
  }
  func.func @transform_6(%arg0: i32) -> (i32, i32) {
    %c0_i32 = arith.constant 0 : i32
    %c0_i32_0 = arith.constant 0 : i32
    %c0_i32_1 = arith.constant 0 : i32
    return %c0_i32, %c0_i32_0 : i32, i32
  }
  func.func @transform_7(%arg0: i32) -> (i32, i32) {
    %c0_i32 = arith.constant 0 : i32
    %c0_i32_0 = arith.constant 0 : i32
    %c0_i32_1 = arith.constant 0 : i32
    return %c0_i32, %c0_i32_0 : i32, i32
  }
  func.func @transform_8(%arg0: i32) -> (i32, i32) {
    %c0_i32 = arith.constant 0 : i32
    %c0_i32_0 = arith.constant 0 : i32
    %c0_i32_1 = arith.constant 0 : i32
    return %c0_i32, %c0_i32_0 : i32, i32
  }
  func.func @transform_9(%arg0: i32) -> (i32, i32) {
    %c0_i32 = arith.constant 0 : i32
    %c0_i32_0 = arith.constant 0 : i32
    return %arg0, %c0_i32 : i32, i32
  }
}

</mosaic_0001>

<llo_original>
// kernel: decoder_forward.1
$region0: #{decoder_forward.1}
  #allocation0 [shape = 'u32[]', space=smem, size = 0x4, offset = 0x4, fixed_abs, tag = 'smem constant byte address 0x4 - core index']
  #allocation1 [shape = 'u32[72,128]{1,0:T(1,128)}', space=vmem, size = 0x9000, scoped, tag = 'internal scratch']
  %s0 = inlined_call_operand.vmem [shape: f32[512,12], index: 0, kind: input, shape index: {}]
  %s1 = inlined_call_operand.vmem [shape: bf16[12,32], index: 1, kind: input, shape index: {}]
  %s2 = inlined_call_operand.vmem [shape: f32[1,32], index: 2, kind: input, shape index: {}]
  %s3 = inlined_call_operand.vmem [shape: bf16[32,64], index: 3, kind: input, shape index: {}]
  %s4 = inlined_call_operand.vmem [shape: f32[1,64], index: 4, kind: input, shape index: {}]
  %s5 = inlined_call_operand.vmem [shape: bf16[64,128], index: 5, kind: input, shape index: {}]
  %s6 = inlined_call_operand.vmem [shape: f32[1,128], index: 6, kind: input, shape index: {}]
  %s7 = inlined_call_operand.vmem [shape: bf16[128,896], index: 7, kind: input, shape index: {}]
  %s8 = inlined_call_operand.vmem [shape: f32[1,896], index: 8, kind: input, shape index: {}]
  %s9 = inlined_call_operand.vmem [shape: f32[512,896], index: 9, kind: output, shape index: {}]
  %s10 = sld [smem:[#allocation0]]
  $region69: #{decoder_forward.1} parent=0
    _
  %s12 = ssub.s32 1, %s10
  %s13 = scalar_select 0, %s12, %s10
  loop: start=0, step=1, limit=4
  $region2: #{decoder_forward.1} parent=0 // loop_pre_header
    _
  $region3: #{decoder_forward.1} parent=0 // loop_header
    %s15 = sphi 0, %s19
    %p16 = scmp.ge.s32.totalorder %s15, 4
    %s25 = sphi 0, %s27
    %s28 = sphi 0, %s25
    %s29 = sphi 0, %s28
    %s45 = sphi 0, %s29
    %s49 = sphi 0, %s49
    %s51 = sphi 0, %s49
    %s52 = sphi 0, %s51
    %s66 = sphi 0, %s52
    %s70 = sphi 0, %s70
    %s72 = sphi 0, %s70
    %s73 = sphi 0, %s72
    %s87 = sphi 0, %s73
    %s91 = sphi 0, %s91
    %s93 = sphi 0, %s91
    %s94 = sphi 0, %s93
    %s108 = sphi 0, %s94
    %s112 = sphi 0, %s112
    %s114 = sphi 0, %s112
    %s115 = sphi 0, %s114
    %s129 = sphi 0, %s115
    %s133 = sphi 0, %s133
    %s135 = sphi 0, %s133
    %s136 = sphi 0, %s135
    %s150 = sphi 0, %s136
    %s154 = sphi 0, %s154
    %s156 = sphi 0, %s154
    %s157 = sphi 0, %s156
    %s171 = sphi 0, %s157
    %s175 = sphi 0, %s175
    %s177 = sphi 0, %s175
    %s178 = sphi 0, %s177
    %s192 = sphi 0, %s178
    %s196 = sphi 0, %s196
    %s198 = sphi 0, %s196
    %s199 = sphi 0, %s198
    %s213 = sphi 0, %s199
    %s219 = sphi 0, %s221
    %s222 = sphi 0, %s219
    %s223 = sphi 0, %s222
    %s239 = sphi 0, %s223
  $region4: #{decoder_forward.1} parent=0 // loop_header_branch
    %18 = sbr.rel (%p16) target = $region8
  $region5: #{decoder_forward.1} parent=0 // loop_body
    %s20 = ssub.s32 %s15, 1
    %s21 = ssub.s32 %s15, 2
    %s22 = sadd.s32 %s15, 1
    %s23 = ssub.s32 %s15, %s22
    %p24 = scmp.eq.s32.totalorder %s23, 0
    %s26 = sadd.s32 %s25, 1
    %s27 = scalar_select %p24, %s25, %s26
    %p30 = pneg %p24
    %p31 = scmp.eq.s32.totalorder %s15, 1
    %p32 = por %p30, %p31
    %p33 = scmp.ne.s32.totalorder %s25, %s28
    %p34 = scmp.eq.s32.totalorder %s15, 0
    %p35 = por %p33, %p34
    %p36 = scmp.ne.s32.totalorder %s25, %s28
    %p37 = scmp.eq.s32.totalorder %s20, 1
    %p38 = por %p36, %p37
    %p39 = scmp.ne.s32.totalorder %s28, %s29
    %p40 = scmp.eq.s32.totalorder %s20, 0
    %p41 = por %p39, %p40
    %p42 = scmp.ne.s32.totalorder %s28, %s29
    %p43 = scmp.eq.s32.totalorder %s21, 1
    %p44 = por %p42, %p43
    %p46 = scmp.ne.s32.totalorder %s29, %s45
    %p47 = scmp.eq.s32.totalorder %s21, 0
    %p48 = por %p46, %p47
    %s50 = sadd.s32 %s49, 1
    %p53 = scmp.eq.s32.totalorder %s15, 1
    %p54 = scmp.ne.s32.totalorder %s49, %s51
    %p55 = scmp.eq.s32.totalorder %s15, 0
    %p56 = por %p54, %p55
    %p57 = scmp.ne.s32.totalorder %s49, %s51
    %p58 = scmp.eq.s32.totalorder %s20, 1
    %p59 = por %p57, %p58
    %p60 = scmp.ne.s32.totalorder %s51, %s52
    %p61 = scmp.eq.s32.totalorder %s20, 0
    %p62 = por %p60, %p61
    %p63 = scmp.ne.s32.totalorder %s51, %s52
    %p64 = scmp.eq.s32.totalorder %s21, 1
    %p65 = por %p63, %p64
    %p67 = scmp.ne.s32.totalorder %s52, %s66
    %p68 = scmp.eq.s32.totalorder %s21, 0
    %p69 = por %p67, %p68
    %s71 = sadd.s32 %s70, 1
    %p74 = scmp.eq.s32.totalorder %s15, 1
    %p75 = scmp.ne.s32.totalorder %s70, %s72
    %p76 = scmp.eq.s32.totalorder %s15, 0
    %p77 = por %p75, %p76
    %p78 = scmp.ne.s32.totalorder %s70, %s72
    %p79 = scmp.eq.s32.totalorder %s20, 1
    %p80 = por %p78, %p79
    %p81 = scmp.ne.s32.totalorder %s72, %s73
    %p82 = scmp.eq.s32.totalorder %s20, 0
    %p83 = por %p81, %p82
    %p84 = scmp.ne.s32.totalorder %s72, %s73
    %p85 = scmp.eq.s32.totalorder %s21, 1
    %p86 = por %p84, %p85
    %p88 = scmp.ne.s32.totalorder %s73, %s87
    %p89 = scmp.eq.s32.totalorder %s21, 0
    %p90 = por %p88, %p89
    %s92 = sadd.s32 %s91, 1
    %p95 = scmp.eq.s32.totalorder %s15, 1
    %p96 = scmp.ne.s32.totalorder %s91, %s93
    %p97 = scmp.eq.s32.totalorder %s15, 0
    %p98 = por %p96, %p97
    %p99 = scmp.ne.s32.totalorder %s91, %s93
    %p100 = scmp.eq.s32.totalorder %s20, 1
    %p101 = por %p99, %p100
    %p102 = scmp.ne.s32.totalorder %s93, %s94
    %p103 = scmp.eq.s32.totalorder %s20, 0
    %p104 = por %p102, %p103
    %p105 = scmp.ne.s32.totalorder %s93, %s94
    %p106 = scmp.eq.s32.totalorder %s21, 1
    %p107 = por %p105, %p106
    %p109 = scmp.ne.s32.totalorder %s94, %s108
    %p110 = scmp.eq.s32.totalorder %s21, 0
    %p111 = por %p109, %p110
    %s113 = sadd.s32 %s112, 1
    %p116 = scmp.eq.s32.totalorder %s15, 1
    %p117 = scmp.ne.s32.totalorder %s112, %s114
    %p118 = scmp.eq.s32.totalorder %s15, 0
    %p119 = por %p117, %p118
    %p120 = scmp.ne.s32.totalorder %s112, %s114
    %p121 = scmp.eq.s32.totalorder %s20, 1
    %p122 = por %p120, %p121
    %p123 = scmp.ne.s32.totalorder %s114, %s115
    %p124 = scmp.eq.s32.totalorder %s20, 0
    %p125 = por %p123, %p124
    %p126 = scmp.ne.s32.totalorder %s114, %s115
    %p127 = scmp.eq.s32.totalorder %s21, 1
    %p128 = por %p126, %p127
    %p130 = scmp.ne.s32.totalorder %s115, %s129
    %p131 = scmp.eq.s32.totalorder %s21, 0
    %p132 = por %p130, %p131
    %s134 = sadd.s32 %s133, 1
    %p137 = scmp.eq.s32.totalorder %s15, 1
    %p138 = scmp.ne.s32.totalorder %s133, %s135
    %p139 = scmp.eq.s32.totalorder %s15, 0
    %p140 = por %p138, %p139
    %p141 = scmp.ne.s32.totalorder %s133, %s135
    %p142 = scmp.eq.s32.totalorder %s20, 1
    %p143 = por %p141, %p142
    %p144 = scmp.ne.s32.totalorder %s135, %s136
    %p145 = scmp.eq.s32.totalorder %s20, 0
    %p146 = por %p144, %p145
    %p147 = scmp.ne.s32.totalorder %s135, %s136
    %p148 = scmp.eq.s32.totalorder %s21, 1
    %p149 = por %p147, %p148
    %p151 = scmp.ne.s32.totalorder %s136, %s150
    %p152 = scmp.eq.s32.totalorder %s21, 0
    %p153 = por %p151, %p152
    %s155 = sadd.s32 %s154, 1
    %p158 = scmp.eq.s32.totalorder %s15, 1
    %p159 = scmp.ne.s32.totalorder %s154, %s156
    %p160 = scmp.eq.s32.totalorder %s15, 0
    %p161 = por %p159, %p160
    %p162 = scmp.ne.s32.totalorder %s154, %s156
    %p163 = scmp.eq.s32.totalorder %s20, 1
    %p164 = por %p162, %p163
    %p165 = scmp.ne.s32.totalorder %s156, %s157
    %p166 = scmp.eq.s32.totalorder %s20, 0
    %p167 = por %p165, %p166
    %p168 = scmp.ne.s32.totalorder %s156, %s157
    %p169 = scmp.eq.s32.totalorder %s21, 1
    %p170 = por %p168, %p169
    %p172 = scmp.ne.s32.totalorder %s157, %s171
    %p173 = scmp.eq.s32.totalorder %s21, 0
    %p174 = por %p172, %p173
    %s176 = sadd.s32 %s175, 1
    %p179 = scmp.eq.s32.totalorder %s15, 1
    %p180 = scmp.ne.s32.totalorder %s175, %s177
    %p181 = scmp.eq.s32.totalorder %s15, 0
    %p182 = por %p180, %p181
    %p183 = scmp.ne.s32.totalorder %s175, %s177
    %p184 = scmp.eq.s32.totalorder %s20, 1
    %p185 = por %p183, %p184
    %p186 = scmp.ne.s32.totalorder %s177, %s178
    %p187 = scmp.eq.s32.totalorder %s20, 0
    %p188 = por %p186, %p187
    %p189 = scmp.ne.s32.totalorder %s177, %s178
    %p190 = scmp.eq.s32.totalorder %s21, 1
    %p191 = por %p189, %p190
    %p193 = scmp.ne.s32.totalorder %s178, %s192
    %p194 = scmp.eq.s32.totalorder %s21, 0
    %p195 = por %p193, %p194
    %s197 = sadd.s32 %s196, 1
    %p200 = scmp.eq.s32.totalorder %s15, 1
    %p201 = scmp.ne.s32.totalorder %s196, %s198
    %p202 = scmp.eq.s32.totalorder %s15, 0
    %p203 = por %p201, %p202
    %p204 = scmp.ne.s32.totalorder %s196, %s198
    %p205 = scmp.eq.s32.totalorder %s20, 1
    %p206 = por %p204, %p205
    %p207 = scmp.ne.s32.totalorder %s198, %s199
    %p208 = scmp.eq.s32.totalorder %s20, 0
    %p209 = por %p207, %p208
    %p210 = scmp.ne.s32.totalorder %s198, %s199
    %p211 = scmp.eq.s32.totalorder %s21, 1
    %p212 = por %p210, %p211
    %p214 = scmp.ne.s32.totalorder %s199, %s213
    %p215 = scmp.eq.s32.totalorder %s21, 0
    %p216 = por %p214, %p215
    %s217 = ssub.s32 %s15, %s22
    %p218 = scmp.eq.s32.totalorder %s217, 0
    %s220 = sadd.s32 %s219, 1
    %s221 = scalar_select %p218, %s219, %s220
    %p224 = pneg %p218
    %p225 = scmp.eq.s32.totalorder %s15, 1
    %p226 = por %p224, %p225
    %p227 = scmp.ne.s32.totalorder %s219, %s222
    %p228 = scmp.eq.s32.totalorder %s15, 0
    %p229 = por %p227, %p228
    %p230 = scmp.ne.s32.totalorder %s219, %s222
    %p231 = scmp.eq.s32.totalorder %s20, 1
    %p232 = por %p230, %p231
    %p233 = scmp.ne.s32.totalorder %s222, %s223
    %p234 = scmp.eq.s32.totalorder %s20, 0
    %p235 = por %p233, %p234
    %p236 = scmp.ne.s32.totalorder %s222, %s223
    %p237 = scmp.eq.s32.totalorder %s21, 1
    %p238 = por %p236, %p237
    %p240 = scmp.ne.s32.totalorder %s223, %s239
    %p241 = scmp.eq.s32.totalorder %s21, 0
    %p242 = por %p240, %p241
    %p243 = scmp.le.s32.totalorder 1, %s15
    %p244 = scmp.lt.s32.totalorder %s15, 3
    %p245 = pnand %p243, %p244
    %p246 = pneg %p245
    // Predicated region
    $region9: #{decoder_forward.1} parent=5 // pred_check
      _
    $region10: #{decoder_forward.1} parent=5 // pred_check_branch
      %248 = sbr.rel (%p245) target = $region12
    $region11: #{decoder_forward.1} parent=5 // pred_region
      %s249 = ssub.s32 %s15, 1
      // Predicated region
      $region13: #{decoder_forward.1} parent=11 // pred_check
        %p250 = pneg %p62
      $region14: #{decoder_forward.1} parent=11 // pred_check_branch
        %252 = sbr.rel (%p250) target = $region16
      $region15: #{decoder_forward.1} parent=11 // pred_region
        _
      $region16: #{decoder_forward.1} parent=11 // pred_fallthru
        _
      // Predicated region
      $region17: #{decoder_forward.1} parent=11 // pred_check
        %p253 = pneg %p83
      $region18: #{decoder_forward.1} parent=11 // pred_check_branch
        %255 = sbr.rel (%p253) target = $region20
      $region19: #{decoder_forward.1} parent=11 // pred_region
        _
      $region20: #{decoder_forward.1} parent=11 // pred_fallthru
        _
      // Predicated region
      $region21: #{decoder_forward.1} parent=11 // pred_check
        %p256 = pneg %p104
      $region22: #{decoder_forward.1} parent=11 // pred_check_branch
        %258 = sbr.rel (%p256) target = $region24
      $region23: #{decoder_forward.1} parent=11 // pred_region
        _
      $region24: #{decoder_forward.1} parent=11 // pred_fallthru
        _
      // Predicated region
      $region25: #{decoder_forward.1} parent=11 // pred_check
        %p259 = pneg %p125
      $region26: #{decoder_forward.1} parent=11 // pred_check_branch
        %261 = sbr.rel (%p259) target = $region28
      $region27: #{decoder_forward.1} parent=11 // pred_region
        _
      $region28: #{decoder_forward.1} parent=11 // pred_fallthru
        _
      // Predicated region
      $region29: #{decoder_forward.1} parent=11 // pred_check
        %p262 = pneg %p146
      $region30: #{decoder_forward.1} parent=11 // pred_check_branch
        %264 = sbr.rel (%p262) target = $region32
      $region31: #{decoder_forward.1} parent=11 // pred_region
        _
      $region32: #{decoder_forward.1} parent=11 // pred_fallthru
        _
      // Predicated region
      $region33: #{decoder_forward.1} parent=11 // pred_check
        %p265 = pneg %p167
      $region34: #{decoder_forward.1} parent=11 // pred_check_branch
        %267 = sbr.rel (%p265) target = $region36
      $region35: #{decoder_forward.1} parent=11 // pred_region
        _
      $region36: #{decoder_forward.1} parent=11 // pred_fallthru
        _
      // Predicated region
      $region37: #{decoder_forward.1} parent=11 // pred_check
        %p268 = pneg %p188
      $region38: #{decoder_forward.1} parent=11 // pred_check_branch
        %270 = sbr.rel (%p268) target = $region40
      $region39: #{decoder_forward.1} parent=11 // pred_region
        _
      $region40: #{decoder_forward.1} parent=11 // pred_fallthru
        _
      // Predicated region
      $region41: #{decoder_forward.1} parent=11 // pred_check
        %p271 = pneg %p209
      $region42: #{decoder_forward.1} parent=11 // pred_check_branch
        %273 = sbr.rel (%p271) target = $region44
      $region43: #{decoder_forward.1} parent=11 // pred_region
        _
      $region44: #{decoder_forward.1} parent=11 // pred_fallthru
        _
    $region12: #{decoder_forward.1} parent=5 // pred_fallthru
      _
    %p274 = scmp.lt.s32.totalorder %s15, 2
    // Predicated region
    $region45: #{decoder_forward.1} parent=5 // pred_check
      %p275 = pneg %p274
    $region46: #{decoder_forward.1} parent=5 // pred_check_branch
      %277 = sbr.rel (%p275) target = $region48
    $region47: #{decoder_forward.1} parent=5 // pred_region
      // Predicated region
      $region49: #{decoder_forward.1} parent=47 // pred_check
        %p278 = pneg %p35
      $region50: #{decoder_forward.1} parent=47 // pred_check_branch
        %280 = sbr.rel (%p278) target = $region52
      $region51: #{decoder_forward.1} parent=47 // pred_region
        %s281 = smul.u32 32, %s15
        %p282 = scmp.lt.s32.totalorder %s281, 63
        %s283 = scalar_select %p282, %s281, 63
        %s284 = smul.addr %s283, 8
        %s285 = scalar_lea.vmem %s0, %s284
        %s286 = smul.u32 32, %s15
      $region52: #{decoder_forward.1} parent=47 // pred_fallthru
        _
    $region48: #{decoder_forward.1} parent=5 // pred_fallthru
      _
    %p287 = scmp.le.s32.totalorder 1, %s15
    %p288 = scmp.lt.s32.totalorder %s15, 3
    %p289 = pnand %p287, %p288
    %p290 = pneg %p289
    // Predicated region
    $region53: #{decoder_forward.1} parent=5 // pred_check
      _
    $region54: #{decoder_forward.1} parent=5 // pred_check_branch
      %292 = sbr.rel (%p289) target = $region56
    $region55: #{decoder_forward.1} parent=5 // pred_region
      %s293 = ssub.s32 %s15, 1
      %s294 = smul.u32 32, %s20
      %p295 = scmp.lt.s32.totalorder %s294, 63
      %s296 = scalar_select %p295, %s294, 63
      %s297 = smul.addr %s296, 8
      %s298 = scalar_lea.vmem %s0, %s297
      %p299 = pneg %p41
      %p300 = pneg %p38
      %p301 = pneg %p62
      %p302 = pneg %p59
      %p303 = pneg %p83
      %p304 = pneg %p80
      %p305 = pneg %p104
      %p306 = pneg %p101
      %p307 = pneg %p125
      %p308 = pneg %p122
      %p309 = pneg %p146
      %p310 = pneg %p143
      %p311 = pneg %p167
      %p312 = pneg %p164
      %p313 = pneg %p188
      %p314 = pneg %p185
      %p315 = pneg %p209
      %p316 = pneg %p206
      %p317 = pneg %p235
      %p318 = pneg %p232
      %s319 = smul.u32 32, %s20
      %p320 = scmp.lt.s32.totalorder %s319, 63
      %s321 = scalar_select %p320, %s319, 63
      %s322 = smul.addr %s321, 7
      %s323 = smul.addr %s322, 8
      %s324 = scalar_lea.vmem %s9, %s323
      %s325 = smul.u32 32, %s20
      %p326 = scmp.lt.s32.totalorder %s325, 63
      %s327 = scalar_select %p326, %s325, 63
      %s328 = smul.addr %s327, 8
      %s329 = scalar_lea.vmem %s0, %s328
      %s330 = smul.u32 32, %s20
      %s331 = smul.u32 32, %s20
      %p332 = scmp.lt.s32.totalorder %s331, 63
      %s333 = scalar_select %p332, %s331, 63
      %s334 = smul.addr %s333, 7
      %s335 = smul.addr %s334, 8
      %s336 = scalar_lea.vmem %s9, %s335
      %s337 = smul.u32 32, %s20
      %v339 = vld [vmem:[%s329] sm:$0xff]
      %v340 = vld [vmem:[%s329 + $0x8] sm:$0xff]
      %v341 = vld [vmem:[%s329 + $0x10] sm:$0xff]
      %v342 = vld [vmem:[%s329 + $0x18] sm:$0xff]
      %v343 = vld [vmem:[%s329 + $0x20] sm:$0xff]
      %v344 = vld [vmem:[%s329 + $0x28] sm:$0xff]
      %v345 = vld [vmem:[%s329 + $0x30] sm:$0xff]
      %v346 = vld [vmem:[%s329 + $0x38] sm:$0xff]
      %v347 = vld [vmem:[%s329 + $0x40] sm:$0xff]
      %v348 = vld [vmem:[%s329 + $0x48] sm:$0xff]
      %v349 = vld [vmem:[%s329 + $0x50] sm:$0xff]
      %v350 = vld [vmem:[%s329 + $0x58] sm:$0xff]
      %v351 = vld [vmem:[%s329 + $0x60] sm:$0xff]
      %v352 = vld [vmem:[%s329 + $0x68] sm:$0xff]
      %v353 = vld [vmem:[%s329 + $0x70] sm:$0xff]
      %v354 = vld [vmem:[%s329 + $0x78] sm:$0xff]
      %v355 = vld [vmem:[%s329 + $0x80] sm:$0xff]
      %v356 = vld [vmem:[%s329 + $0x88] sm:$0xff]
      %v357 = vld [vmem:[%s329 + $0x90] sm:$0xff]
      %v358 = vld [vmem:[%s329 + $0x98] sm:$0xff]
      %v359 = vld [vmem:[%s329 + $0xa0] sm:$0xff]
      %v360 = vld [vmem:[%s329 + $0xa8] sm:$0xff]
      %v361 = vld [vmem:[%s329 + $0xb0] sm:$0xff]
      %v362 = vld [vmem:[%s329 + $0xb8] sm:$0xff]
      %v363 = vld [vmem:[%s329 + $0xc0] sm:$0xff]
      %v364 = vld [vmem:[%s329 + $0xc8] sm:$0xff]
      %v365 = vld [vmem:[%s329 + $0xd0] sm:$0xff]
      %v366 = vld [vmem:[%s329 + $0xd8] sm:$0xff]
      %v367 = vld [vmem:[%s329 + $0xe0] sm:$0xff]
      %v368 = vld [vmem:[%s329 + $0xe8] sm:$0xff]
      %v369 = vld [vmem:[%s329 + $0xf0] sm:$0xff]
      %v370 = vld [vmem:[%s329 + $0xf8] sm:$0xff]
      %v371 = vld [vmem:[%s1] sm:$0xf]
      %v372 = vld [vmem:[%s1 + $0x4] sm:$0x3]
      %v373 = vld [vmem:[%s2] sm:$0x1]
      %v374 = vpack.c.bf16 %v340, %v339
      %v375 = vpack.c.bf16 %v342, %v341
      %v376 = vpack.c.bf16 %v344, %v343
      %v377 = vpack.c.bf16 %v346, %v345
      %v378 = vpack.c.bf16 %v348, %v347
      %v379 = vpack.c.bf16 %v350, %v349
      %v380 = vpack.c.bf16 %v352, %v351
      %v381 = vpack.c.bf16 %v354, %v353
      %v382 = vpack.c.bf16 %v356, %v355
      %v383 = vpack.c.bf16 %v358, %v357
      %v384 = vpack.c.bf16 %v360, %v359
      %v385 = vpack.c.bf16 %v362, %v361
      %v386 = vpack.c.bf16 %v364, %v363
      %v387 = vpack.c.bf16 %v366, %v365
      %v388 = vpack.c.bf16 %v368, %v367
      %v389 = vpack.c.bf16 %v370, %v369
      %v391 = vperm.slane %v373, 0
      %v395 = vunpack.c.l.b16 %v371
      %v396 = vunpack.c.l.b16 %v372
      %v397 = vpack.c.b16 %v396, %v395
      %vm398 = vcmask 97280
      %v400 = vsel %vm398, %v374, 0
      %v403 = vsel %vm398, %v375, 0
      %v406 = vsel %vm398, %v376, 0
      %v409 = vsel %vm398, %v377, 0
      %v412 = vsel %vm398, %v378, 0
      %v415 = vsel %vm398, %v379, 0
      %v418 = vsel %vm398, %v380, 0
      %v421 = vsel %vm398, %v381, 0
      %v424 = vsel %vm398, %v382, 0
      %v427 = vsel %vm398, %v383, 0
      %v430 = vsel %vm398, %v384, 0
      %v433 = vsel %vm398, %v385, 0
      %v436 = vsel %vm398, %v386, 0
      %v439 = vsel %vm398, %v387, 0
      %v442 = vsel %vm398, %v388, 0
      %v445 = vsel %vm398, %v389, 0
      %vm447 = vcmask 1045504
      %v449 = vsel %vm447, %v397, 0
      %451 = vmatpush.bf16.msra.mxu0 0
      %452 = vmatpush.bf16.msra.mxu0 0
      %453 = vmatpush.bf16.msra.mxu0 0
      %454 = vmatpush.bf16.msra.mxu0 0
      %455 = vmatpush.bf16.msra.mxu0 0
      %456 = vmatpush.bf16.msra.mxu0 0
      %457 = vmatpush.bf16.msra.mxu0 0
      %458 = vmatpush.bf16.msra.mxu0 %v449
      %459 = vmatmul.bf16.gmra.mxu0 %v400
      %v460 = vpop.f32.mrf.mxu0
      %v461 = vadd.f32 %v391, %v460
      %v462 = vpop.f32.mrf.mxu0
      %v463 = vadd.f32 %v391, %v462
      %464 = vmatmul.bf16.gmra.mxu0 %v403
      %v465 = vpop.f32.mrf.mxu0
      %v466 = vadd.f32 %v391, %v465
      %v467 = vpop.f32.mrf.mxu0
      %v468 = vadd.f32 %v391, %v467
      %469 = vmatmul.bf16.gmra.mxu0 %v406
      %v470 = vpop.f32.mrf.mxu0
      %v471 = vadd.f32 %v391, %v470
      %v472 = vpop.f32.mrf.mxu0
      %v473 = vadd.f32 %v391, %v472
      %474 = vmatmul.bf16.gmra.mxu0 %v409
      %v475 = vpop.f32.mrf.mxu0
      %v476 = vadd.f32 %v391, %v475
      %v477 = vpop.f32.mrf.mxu0
      %v478 = vadd.f32 %v391, %v477
      %479 = vmatmul.bf16.gmra.mxu0 %v412
      %v480 = vpop.f32.mrf.mxu0
      %v481 = vadd.f32 %v391, %v480
      %v482 = vpop.f32.mrf.mxu0
      %v483 = vadd.f32 %v391, %v482
      %484 = vmatmul.bf16.gmra.mxu0 %v415
      %v485 = vpop.f32.mrf.mxu0
      %v486 = vadd.f32 %v391, %v485
      %v487 = vpop.f32.mrf.mxu0
      %v488 = vadd.f32 %v391, %v487
      %489 = vmatmul.bf16.gmra.mxu0 %v418
      %v490 = vpop.f32.mrf.mxu0
      %v491 = vadd.f32 %v391, %v490
      %v492 = vpop.f32.mrf.mxu0
      %v493 = vadd.f32 %v391, %v492
      %494 = vmatmul.bf16.gmra.mxu0 %v421
      %v495 = vpop.f32.mrf.mxu0
      %v496 = vadd.f32 %v391, %v495
      %v497 = vpop.f32.mrf.mxu0
      %v498 = vadd.f32 %v391, %v497
      %499 = vmatmul.bf16.gmra.mxu0 %v424
      %v500 = vpop.f32.mrf.mxu0
      %v501 = vadd.f32 %v391, %v500
      %v502 = vpop.f32.mrf.mxu0
      %v503 = vadd.f32 %v391, %v502
      %504 = vmatmul.bf16.gmra.mxu0 %v427
      %v505 = vpop.f32.mrf.mxu0
      %v506 = vadd.f32 %v391, %v505
      %v507 = vpop.f32.mrf.mxu0
      %v508 = vadd.f32 %v391, %v507
      %509 = vmatmul.bf16.gmra.mxu0 %v430
      %v510 = vpop.f32.mrf.mxu0
      %v511 = vadd.f32 %v391, %v510
      %v512 = vpop.f32.mrf.mxu0
      %v513 = vadd.f32 %v391, %v512
      %514 = vmatmul.bf16.gmra.mxu0 %v433
      %v515 = vpop.f32.mrf.mxu0
      %v516 = vadd.f32 %v391, %v515
      %v517 = vpop.f32.mrf.mxu0
      %v518 = vadd.f32 %v391, %v517
      %519 = vmatmul.bf16.gmra.mxu0 %v436
      %v520 = vpop.f32.mrf.mxu0
      %v521 = vadd.f32 %v391, %v520
      %v522 = vpop.f32.mrf.mxu0
      %v523 = vadd.f32 %v391, %v522
      %524 = vmatmul.bf16.gmra.mxu0 %v439
      %v525 = vpop.f32.mrf.mxu0
      %v526 = vadd.f32 %v391, %v525
      %v527 = vpop.f32.mrf.mxu0
      %v528 = vadd.f32 %v391, %v527
      %529 = vmatmul.bf16.gmra.mxu0 %v442
      %v530 = vpop.f32.mrf.mxu0
      %v531 = vadd.f32 %v391, %v530
      %v532 = vpop.f32.mrf.mxu0
      %v533 = vadd.f32 %v391, %v532
      %534 = vmatmul.bf16.gmra.mxu0 %v445
      %v535 = vpop.f32.mrf.mxu0
      %v536 = vadd.f32 %v391, %v535
      %v537 = vpop.f32.mrf.mxu0
      %v538 = vadd.f32 %v391, %v537
      %539 = vdwg.mxu0
      %v540 = vmax.f32 %v461, 0.0
      %v541 = vmax.f32 %v463, 0.0
      %v542 = vmax.f32 %v466, 0.0
      %v543 = vmax.f32 %v468, 0.0
      %v544 = vmax.f32 %v471, 0.0
      %v545 = vmax.f32 %v473, 0.0
      %v546 = vmax.f32 %v476, 0.0
      %v547 = vmax.f32 %v478, 0.0
      %v548 = vmax.f32 %v481, 0.0
      %v549 = vmax.f32 %v483, 0.0
      %v550 = vmax.f32 %v486, 0.0
      %v551 = vmax.f32 %v488, 0.0
      %v552 = vmax.f32 %v491, 0.0
      %v553 = vmax.f32 %v493, 0.0
      %v554 = vmax.f32 %v496, 0.0
      %v555 = vmax.f32 %v498, 0.0
      %v556 = vmax.f32 %v501, 0.0
      %v557 = vmax.f32 %v503, 0.0
      %v558 = vmax.f32 %v506, 0.0
      %v559 = vmax.f32 %v508, 0.0
      %v560 = vmax.f32 %v511, 0.0
      %v561 = vmax.f32 %v513, 0.0
      %v562 = vmax.f32 %v516, 0.0
      %v563 = vmax.f32 %v518, 0.0
      %v564 = vmax.f32 %v521, 0.0
      %v565 = vmax.f32 %v523, 0.0
      %v566 = vmax.f32 %v526, 0.0
      %v567 = vmax.f32 %v528, 0.0
      %v568 = vmax.f32 %v531, 0.0
      %v569 = vmax.f32 %v533, 0.0
      %v570 = vmax.f32 %v536, 0.0
      %v571 = vmax.f32 %v538, 0.0
      %v572 = vld [vmem:[%s3] sm:$0xf]
      %v573 = vld [vmem:[%s3 + $0x4] sm:$0xf]
      %v574 = vld [vmem:[%s3 + $0x8] sm:$0xf]
      %v575 = vld [vmem:[%s3 + $0xc] sm:$0xf]
      %v576 = vld [vmem:[%s4] sm:$0x1]
      %v577 = vpack.c.bf16 %v541, %v540
      %v578 = vpack.c.bf16 %v543, %v542
      %v579 = vpack.c.bf16 %v545, %v544
      %v580 = vpack.c.bf16 %v547, %v546
      %v581 = vpack.c.bf16 %v549, %v548
      %v582 = vpack.c.bf16 %v551, %v550
      %v583 = vpack.c.bf16 %v553, %v552
      %v584 = vpack.c.bf16 %v555, %v554
      %v585 = vpack.c.bf16 %v557, %v556
      %v586 = vpack.c.bf16 %v559, %v558
      %v587 = vpack.c.bf16 %v561, %v560
      %v588 = vpack.c.bf16 %v563, %v562
      %v589 = vpack.c.bf16 %v565, %v564
      %v590 = vpack.c.bf16 %v567, %v566
      %v591 = vpack.c.bf16 %v569, %v568
      %v592 = vpack.c.bf16 %v571, %v570
      %v594 = vperm.slane %v576, 0
      %v600 = vunpack.c.l.b16 %v572
      %v601 = vunpack.c.l.b16 %v573
      %v602 = vunpack.c.l.b16 %v574
      %v603 = vunpack.c.l.b16 %v575
      %v604 = vpack.c.b16 %v601, %v600
      %v605 = vpack.c.b16 %v603, %v602
      %vm608 = vcmask 261120
      %v610 = vsel %vm608, %v577, 0
      %v613 = vsel %vm608, %v578, 0
      %v616 = vsel %vm608, %v579, 0
      %v619 = vsel %vm608, %v580, 0
      %v622 = vsel %vm608, %v581, 0
      %v625 = vsel %vm608, %v582, 0
      %v628 = vsel %vm608, %v583, 0
      %v631 = vsel %vm608, %v584, 0
      %v634 = vsel %vm608, %v585, 0
      %v637 = vsel %vm608, %v586, 0
      %v640 = vsel %vm608, %v587, 0
      %v643 = vsel %vm608, %v588, 0
      %v646 = vsel %vm608, %v589, 0
      %v649 = vsel %vm608, %v590, 0
      %v652 = vsel %vm608, %v591, 0
      %v655 = vsel %vm608, %v592, 0
      %657 = vmatpush.bf16.msra.mxu0 0
      %658 = vmatpush.bf16.msra.mxu0 0
      %659 = vmatpush.bf16.msra.mxu0 0
      %660 = vmatpush.bf16.msra.mxu0 0
      %661 = vmatpush.bf16.msra.mxu0 0
      %662 = vmatpush.bf16.msra.mxu0 0
      %663 = vmatpush.bf16.msra.mxu0 %v605
      %664 = vmatpush.bf16.msra.mxu0 %v604
      %665 = vmatmul.bf16.gmra.mxu0 %v610
      %v666 = vpop.f32.mrf.mxu0
      %v667 = vadd.f32 %v594, %v666
      %v668 = vpop.f32.mrf.mxu0
      %v669 = vadd.f32 %v594, %v668
      %670 = vmatmul.bf16.gmra.mxu0 %v613
      %v671 = vpop.f32.mrf.mxu0
      %v672 = vadd.f32 %v594, %v671
      %v673 = vpop.f32.mrf.mxu0
      %v674 = vadd.f32 %v594, %v673
      %675 = vmatmul.bf16.gmra.mxu0 %v616
      %v676 = vpop.f32.mrf.mxu0
      %v677 = vadd.f32 %v594, %v676
      %v678 = vpop.f32.mrf.mxu0
      %v679 = vadd.f32 %v594, %v678
      %680 = vmatmul.bf16.gmra.mxu0 %v619
      %v681 = vpop.f32.mrf.mxu0
      %v682 = vadd.f32 %v594, %v681
      %v683 = vpop.f32.mrf.mxu0
      %v684 = vadd.f32 %v594, %v683
      %685 = vmatmul.bf16.gmra.mxu0 %v622
      %v686 = vpop.f32.mrf.mxu0
      %v687 = vadd.f32 %v594, %v686
      %v688 = vpop.f32.mrf.mxu0
      %v689 = vadd.f32 %v594, %v688
      %690 = vmatmul.bf16.gmra.mxu0 %v625
      %v691 = vpop.f32.mrf.mxu0
      %v692 = vadd.f32 %v594, %v691
      %v693 = vpop.f32.mrf.mxu0
      %v694 = vadd.f32 %v594, %v693
      %695 = vmatmul.bf16.gmra.mxu0 %v628
      %v696 = vpop.f32.mrf.mxu0
      %v697 = vadd.f32 %v594, %v696
      %v698 = vpop.f32.mrf.mxu0
      %v699 = vadd.f32 %v594, %v698
      %700 = vmatmul.bf16.gmra.mxu0 %v631
      %v701 = vpop.f32.mrf.mxu0
      %v702 = vadd.f32 %v594, %v701
      %v703 = vpop.f32.mrf.mxu0
      %v704 = vadd.f32 %v594, %v703
      %705 = vmatmul.bf16.gmra.mxu0 %v634
      %v706 = vpop.f32.mrf.mxu0
      %v707 = vadd.f32 %v594, %v706
      %v708 = vpop.f32.mrf.mxu0
      %v709 = vadd.f32 %v594, %v708
      %710 = vmatmul.bf16.gmra.mxu0 %v637
      %v711 = vpop.f32.mrf.mxu0
      %v712 = vadd.f32 %v594, %v711
      %v713 = vpop.f32.mrf.mxu0
      %v714 = vadd.f32 %v594, %v713
      %715 = vmatmul.bf16.gmra.mxu0 %v640
      %v716 = vpop.f32.mrf.mxu0
      %v717 = vadd.f32 %v594, %v716
      %v718 = vpop.f32.mrf.mxu0
      %v719 = vadd.f32 %v594, %v718
      %720 = vmatmul.bf16.gmra.mxu0 %v643
      %v721 = vpop.f32.mrf.mxu0
      %v722 = vadd.f32 %v594, %v721
      %v723 = vpop.f32.mrf.mxu0
      %v724 = vadd.f32 %v594, %v723
      %725 = vmatmul.bf16.gmra.mxu0 %v646
      %v726 = vpop.f32.mrf.mxu0
      %v727 = vadd.f32 %v594, %v726
      %v728 = vpop.f32.mrf.mxu0
      %v729 = vadd.f32 %v594, %v728
      %730 = vmatmul.bf16.gmra.mxu0 %v649
      %v731 = vpop.f32.mrf.mxu0
      %v732 = vadd.f32 %v594, %v731
      %v733 = vpop.f32.mrf.mxu0
      %v734 = vadd.f32 %v594, %v733
      %735 = vmatmul.bf16.gmra.mxu0 %v652
      %v736 = vpop.f32.mrf.mxu0
      %v737 = vadd.f32 %v594, %v736
      %v738 = vpop.f32.mrf.mxu0
      %v739 = vadd.f32 %v594, %v738
      %740 = vmatmul.bf16.gmra.mxu0 %v655
      %v741 = vpop.f32.mrf.mxu0
      %v742 = vadd.f32 %v594, %v741
      %v743 = vpop.f32.mrf.mxu0
      %v744 = vadd.f32 %v594, %v743
      %745 = vdwg.mxu0
      %v746 = vmax.f32 %v667, 0.0
      %v747 = vmax.f32 %v669, 0.0
      %v748 = vmax.f32 %v672, 0.0
      %v749 = vmax.f32 %v674, 0.0
      %v750 = vmax.f32 %v677, 0.0
      %v751 = vmax.f32 %v679, 0.0
      %v752 = vmax.f32 %v682, 0.0
      %v753 = vmax.f32 %v684, 0.0
      %v754 = vmax.f32 %v687, 0.0
      %v755 = vmax.f32 %v689, 0.0
      %v756 = vmax.f32 %v692, 0.0
      %v757 = vmax.f32 %v694, 0.0
      %v758 = vmax.f32 %v697, 0.0
      %v759 = vmax.f32 %v699, 0.0
      %v760 = vmax.f32 %v702, 0.0
      %v761 = vmax.f32 %v704, 0.0
      %v762 = vmax.f32 %v707, 0.0
      %v763 = vmax.f32 %v709, 0.0
      %v764 = vmax.f32 %v712, 0.0
      %v765 = vmax.f32 %v714, 0.0
      %v766 = vmax.f32 %v717, 0.0
      %v767 = vmax.f32 %v719, 0.0
      %v768 = vmax.f32 %v722, 0.0
      %v769 = vmax.f32 %v724, 0.0
      %v770 = vmax.f32 %v727, 0.0
      %v771 = vmax.f32 %v729, 0.0
      %v772 = vmax.f32 %v732, 0.0
      %v773 = vmax.f32 %v734, 0.0
      %v774 = vmax.f32 %v737, 0.0
      %v775 = vmax.f32 %v739, 0.0
      %v776 = vmax.f32 %v742, 0.0
      %v777 = vmax.f32 %v744, 0.0
      %v778 = vld [vmem:[%s5] sm:$0xf]
      %v779 = vld [vmem:[%s5 + $0x4] sm:$0xf]
      %v780 = vld [vmem:[%s5 + $0x8] sm:$0xf]
      %v781 = vld [vmem:[%s5 + $0xc] sm:$0xf]
      %v782 = vld [vmem:[%s5 + $0x10] sm:$0xf]
      %v783 = vld [vmem:[%s5 + $0x14] sm:$0xf]
      %v784 = vld [vmem:[%s5 + $0x18] sm:$0xf]
      %v785 = vld [vmem:[%s5 + $0x1c] sm:$0xf]
      %v786 = vld [vmem:[%s6] sm:$0x1]
      %v787 = vpack.c.bf16 %v747, %v746
      %v788 = vpack.c.bf16 %v749, %v748
      %v789 = vpack.c.bf16 %v751, %v750
      %v790 = vpack.c.bf16 %v753, %v752
      %v791 = vpack.c.bf16 %v755, %v754
      %v792 = vpack.c.bf16 %v757, %v756
      %v793 = vpack.c.bf16 %v759, %v758
      %v794 = vpack.c.bf16 %v761, %v760
      %v795 = vpack.c.bf16 %v763, %v762
      %v796 = vpack.c.bf16 %v765, %v764
      %v797 = vpack.c.bf16 %v767, %v766
      %v798 = vpack.c.bf16 %v769, %v768
      %v799 = vpack.c.bf16 %v771, %v770
      %v800 = vpack.c.bf16 %v773, %v772
      %v801 = vpack.c.bf16 %v775, %v774
      %v802 = vpack.c.bf16 %v777, %v776
      %v804 = vperm.slane %v786, 0
      %v814 = vunpack.c.l.b16 %v778
      %v815 = vunpack.c.l.b16 %v779
      %v816 = vunpack.c.l.b16 %v780
      %v817 = vunpack.c.l.b16 %v781
      %v818 = vunpack.c.l.b16 %v782
      %v819 = vunpack.c.l.b16 %v783
      %v820 = vunpack.c.l.b16 %v784
      %v821 = vunpack.c.l.b16 %v785
      %v822 = vpack.c.b16 %v815, %v814
      %v823 = vpack.c.b16 %v817, %v816
      %v824 = vpack.c.b16 %v819, %v818
      %v825 = vpack.c.b16 %v821, %v820
      %vm830 = vcmask 523264
      %v832 = vsel %vm830, %v787, 0
      %v835 = vsel %vm830, %v788, 0
      %v838 = vsel %vm830, %v789, 0
      %v841 = vsel %vm830, %v790, 0
      %v844 = vsel %vm830, %v791, 0
      %v847 = vsel %vm830, %v792, 0
      %v850 = vsel %vm830, %v793, 0
      %v853 = vsel %vm830, %v794, 0
      %v856 = vsel %vm830, %v795, 0
      %v859 = vsel %vm830, %v796, 0
      %v862 = vsel %vm830, %v797, 0
      %v865 = vsel %vm830, %v798, 0
      %v868 = vsel %vm830, %v799, 0
      %v871 = vsel %vm830, %v800, 0
      %v874 = vsel %vm830, %v801, 0
      %v877 = vsel %vm830, %v802, 0
      %879 = vmatpush.bf16.msra.mxu0 0
      %880 = vmatpush.bf16.msra.mxu0 0
      %881 = vmatpush.bf16.msra.mxu0 0
      %882 = vmatpush.bf16.msra.mxu0 0
      %883 = vmatpush.bf16.msra.mxu0 %v825
      %884 = vmatpush.bf16.msra.mxu0 %v824
      %885 = vmatpush.bf16.msra.mxu0 %v823
      %886 = vmatpush.bf16.msra.mxu0 %v822
      %887 = vmatmul.bf16.gmra.mxu0 %v832
      %v888 = vpop.f32.mrf.mxu0
      %v889 = vadd.f32 %v804, %v888
      %v890 = vpop.f32.mrf.mxu0
      %v891 = vadd.f32 %v804, %v890
      %892 = vmatmul.bf16.gmra.mxu0 %v835
      %v893 = vpop.f32.mrf.mxu0
      %v894 = vadd.f32 %v804, %v893
      %v895 = vpop.f32.mrf.mxu0
      %v896 = vadd.f32 %v804, %v895
      %897 = vmatmul.bf16.gmra.mxu0 %v838
      %v898 = vpop.f32.mrf.mxu0
      %v899 = vadd.f32 %v804, %v898
      %v900 = vpop.f32.mrf.mxu0
      %v901 = vadd.f32 %v804, %v900
      %902 = vmatmul.bf16.gmra.mxu0 %v841
      %v903 = vpop.f32.mrf.mxu0
      %v904 = vadd.f32 %v804, %v903
      %v905 = vpop.f32.mrf.mxu0
      %v906 = vadd.f32 %v804, %v905
      %907 = vmatmul.bf16.gmra.mxu0 %v844
      %v908 = vpop.f32.mrf.mxu0
      %v909 = vadd.f32 %v804, %v908
      %v910 = vpop.f32.mrf.mxu0
      %v911 = vadd.f32 %v804, %v910
      %912 = vmatmul.bf16.gmra.mxu0 %v847
      %v913 = vpop.f32.mrf.mxu0
      %v914 = vadd.f32 %v804, %v913
      %v915 = vpop.f32.mrf.mxu0
      %v916 = vadd.f32 %v804, %v915
      %917 = vmatmul.bf16.gmra.mxu0 %v850
      %v918 = vpop.f32.mrf.mxu0
      %v919 = vadd.f32 %v804, %v918
      %v920 = vpop.f32.mrf.mxu0
      %v921 = vadd.f32 %v804, %v920
      %922 = vmatmul.bf16.gmra.mxu0 %v853
      %v923 = vpop.f32.mrf.mxu0
      %v924 = vadd.f32 %v804, %v923
      %v925 = vpop.f32.mrf.mxu0
      %v926 = vadd.f32 %v804, %v925
      %927 = vmatmul.bf16.gmra.mxu0 %v856
      %v928 = vpop.f32.mrf.mxu0
      %v929 = vadd.f32 %v804, %v928
      %v930 = vpop.f32.mrf.mxu0
      %v931 = vadd.f32 %v804, %v930
      %932 = vmatmul.bf16.gmra.mxu0 %v859
      %v933 = vpop.f32.mrf.mxu0
      %v934 = vadd.f32 %v804, %v933
      %v935 = vpop.f32.mrf.mxu0
      %v936 = vadd.f32 %v804, %v935
      %937 = vmatmul.bf16.gmra.mxu0 %v862
      %v938 = vpop.f32.mrf.mxu0
      %v939 = vadd.f32 %v804, %v938
      %v940 = vpop.f32.mrf.mxu0
      %v941 = vadd.f32 %v804, %v940
      %942 = vmatmul.bf16.gmra.mxu0 %v865
      %v943 = vpop.f32.mrf.mxu0
      %v944 = vadd.f32 %v804, %v943
      %v945 = vpop.f32.mrf.mxu0
      %v946 = vadd.f32 %v804, %v945
      %947 = vmatmul.bf16.gmra.mxu0 %v868
      %v948 = vpop.f32.mrf.mxu0
      %v949 = vadd.f32 %v804, %v948
      %v950 = vpop.f32.mrf.mxu0
      %v951 = vadd.f32 %v804, %v950
      %952 = vmatmul.bf16.gmra.mxu0 %v871
      %v953 = vpop.f32.mrf.mxu0
      %v954 = vadd.f32 %v804, %v953
      %v955 = vpop.f32.mrf.mxu0
      %v956 = vadd.f32 %v804, %v955
      %957 = vmatmul.bf16.gmra.mxu0 %v874
      %v958 = vpop.f32.mrf.mxu0
      %v959 = vadd.f32 %v804, %v958
      %v960 = vpop.f32.mrf.mxu0
      %v961 = vadd.f32 %v804, %v960
      %962 = vmatmul.bf16.gmra.mxu0 %v877
      %v963 = vpop.f32.mrf.mxu0
      %v964 = vadd.f32 %v804, %v963
      %v965 = vpop.f32.mrf.mxu0
      %v966 = vadd.f32 %v804, %v965
      %967 = vdwg.mxu0
      %v968 = vmax.f32 %v889, 0.0
      %v969 = vmax.f32 %v891, 0.0
      %v970 = vmax.f32 %v894, 0.0
      %v971 = vmax.f32 %v896, 0.0
      %v972 = vmax.f32 %v899, 0.0
      %v973 = vmax.f32 %v901, 0.0
      %v974 = vmax.f32 %v904, 0.0
      %v975 = vmax.f32 %v906, 0.0
      %v976 = vmax.f32 %v909, 0.0
      %v977 = vmax.f32 %v911, 0.0
      %v978 = vmax.f32 %v914, 0.0
      %v979 = vmax.f32 %v916, 0.0
      %v980 = vmax.f32 %v919, 0.0
      %v981 = vmax.f32 %v921, 0.0
      %v982 = vmax.f32 %v924, 0.0
      %v983 = vmax.f32 %v926, 0.0
      %v984 = vmax.f32 %v929, 0.0
      %v985 = vmax.f32 %v931, 0.0
      %v986 = vmax.f32 %v934, 0.0
      %v987 = vmax.f32 %v936, 0.0
      %v988 = vmax.f32 %v939, 0.0
      %v989 = vmax.f32 %v941, 0.0
      %v990 = vmax.f32 %v944, 0.0
      %v991 = vmax.f32 %v946, 0.0
      %v992 = vmax.f32 %v949, 0.0
      %v993 = vmax.f32 %v951, 0.0
      %v994 = vmax.f32 %v954, 0.0
      %v995 = vmax.f32 %v956, 0.0
      %v996 = vmax.f32 %v959, 0.0
      %v997 = vmax.f32 %v961, 0.0
      %v998 = vmax.f32 %v964, 0.0
      %v999 = vmax.f32 %v966, 0.0
      %v1000 = vld [vmem:[%s7] sm:$0xff]
      %v1001 = vld [vmem:[%s7 + $0x8] sm:$0xff]
      %v1002 = vld [vmem:[%s7 + $0x10] sm:$0xff]
      %v1003 = vld [vmem:[%s7 + $0x18] sm:$0xf]
      %v1004 = vld [vmem:[%s7 + $0x1c] sm:$0xff]
      %v1005 = vld [vmem:[%s7 + $0x24] sm:$0xff]
      %v1006 = vld [vmem:[%s7 + $0x2c] sm:$0xff]
      %v1007 = vld [vmem:[%s7 + $0x34] sm:$0xf]
      %v1008 = vld [vmem:[%s7 + $0x38] sm:$0xff]
      %v1009 = vld [vmem:[%s7 + $0x40] sm:$0xff]
      %v1010 = vld [vmem:[%s7 + $0x48] sm:$0xff]
      %v1011 = vld [vmem:[%s7 + $0x50] sm:$0xf]
      %v1012 = vld [vmem:[%s7 + $0x54] sm:$0xff]
      %v1013 = vld [vmem:[%s7 + $0x5c] sm:$0xff]
      %v1014 = vld [vmem:[%s7 + $0x64] sm:$0xff]
      %v1015 = vld [vmem:[%s7 + $0x6c] sm:$0xf]
      %v1016 = vld [vmem:[%s7 + $0x70] sm:$0xff]
      %v1017 = vld [vmem:[%s7 + $0x78] sm:$0xff]
      %v1018 = vld [vmem:[%s7 + $0x80] sm:$0xff]
      %v1019 = vld [vmem:[%s7 + $0x88] sm:$0xf]
      %v1020 = vld [vmem:[%s7 + $0x8c] sm:$0xff]
      %v1021 = vld [vmem:[%s7 + $0x94] sm:$0xff]
      %v1022 = vld [vmem:[%s7 + $0x9c] sm:$0xff]
      %v1023 = vld [vmem:[%s7 + $0xa4] sm:$0xf]
      %v1024 = vld [vmem:[%s7 + $0xa8] sm:$0xff]
      %v1025 = vld [vmem:[%s7 + $0xb0] sm:$0xff]
      %v1026 = vld [vmem:[%s7 + $0xb8] sm:$0xff]
      %v1027 = vld [vmem:[%s7 + $0xc0] sm:$0xf]
      %v1028 = vld [vmem:[%s7 + $0xc4] sm:$0xff]
      %v1029 = vld [vmem:[%s7 + $0xcc] sm:$0xff]
      %v1030 = vld [vmem:[%s7 + $0xd4] sm:$0xff]
      %v1031 = vld [vmem:[%s7 + $0xdc] sm:$0xf]
      %v1032 = vld [vmem:[%s7 + $0xe0] sm:$0xff]
      %v1033 = vld [vmem:[%s7 + $0xe8] sm:$0xff]
      %v1034 = vld [vmem:[%s7 + $0xf0] sm:$0xff]
      %v1035 = vld [vmem:[%s7 + $0xf8] sm:$0xf]
      %v1036 = vld [vmem:[%s7 + $0xfc] sm:$0xff]
      %v1037 = vld [vmem:[%s7 + $0x104] sm:$0xff]
      %v1038 = vld [vmem:[%s7 + $0x10c] sm:$0xff]
      %v1039 = vld [vmem:[%s7 + $0x114] sm:$0xf]
      %v1040 = vld [vmem:[%s7 + $0x118] sm:$0xff]
      %v1041 = vld [vmem:[%s7 + $0x120] sm:$0xff]
      %v1042 = vld [vmem:[%s7 + $0x128] sm:$0xff]
      %v1043 = vld [vmem:[%s7 + $0x130] sm:$0xf]
      %v1044 = vld [vmem:[%s7 + $0x134] sm:$0xff]
      %v1045 = vld [vmem:[%s7 + $0x13c] sm:$0xff]
      %v1046 = vld [vmem:[%s7 + $0x144] sm:$0xff]
      %v1047 = vld [vmem:[%s7 + $0x14c] sm:$0xf]
      %v1048 = vld [vmem:[%s7 + $0x150] sm:$0xff]
      %v1049 = vld [vmem:[%s7 + $0x158] sm:$0xff]
      %v1050 = vld [vmem:[%s7 + $0x160] sm:$0xff]
      %v1051 = vld [vmem:[%s7 + $0x168] sm:$0xf]
      %v1052 = vld [vmem:[%s7 + $0x16c] sm:$0xff]
      %v1053 = vld [vmem:[%s7 + $0x174] sm:$0xff]
      %v1054 = vld [vmem:[%s7 + $0x17c] sm:$0xff]
      %v1055 = vld [vmem:[%s7 + $0x184] sm:$0xf]
      %v1056 = vld [vmem:[%s7 + $0x188] sm:$0xff]
      %v1057 = vld [vmem:[%s7 + $0x190] sm:$0xff]
      %v1058 = vld [vmem:[%s7 + $0x198] sm:$0xff]
      %v1059 = vld [vmem:[%s7 + $0x1a0] sm:$0xf]
      %v1060 = vld [vmem:[%s7 + $0x1a4] sm:$0xff]
      %v1061 = vld [vmem:[%s7 + $0x1ac] sm:$0xff]
      %v1062 = vld [vmem:[%s7 + $0x1b4] sm:$0xff]
      %v1063 = vld [vmem:[%s7 + $0x1bc] sm:$0xf]
      %v1064 = vld [vmem:[%s8] sm:$0xff]
      %v1065 = vpack.c.bf16 %v969, %v968
      %v1066 = vpack.c.bf16 %v971, %v970
      %v1067 = vpack.c.bf16 %v973, %v972
      %v1068 = vpack.c.bf16 %v975, %v974
      %v1069 = vpack.c.bf16 %v977, %v976
      %v1070 = vpack.c.bf16 %v979, %v978
      %v1071 = vpack.c.bf16 %v981, %v980
      %v1072 = vpack.c.bf16 %v983, %v982
      %v1073 = vpack.c.bf16 %v985, %v984
      %v1074 = vpack.c.bf16 %v987, %v986
      %v1075 = vpack.c.bf16 %v989, %v988
      %v1076 = vpack.c.bf16 %v991, %v990
      %v1077 = vpack.c.bf16 %v993, %v992
      %v1078 = vpack.c.bf16 %v995, %v994
      %v1079 = vpack.c.bf16 %v997, %v996
      %v1080 = vpack.c.bf16 %v999, %v998
      %v1082 = vperm.slane %v1064, 0
      %v1083 = vperm.slane %v1064, 1
      %v1084 = vperm.slane %v1064, 2
      %v1085 = vperm.slane %v1064, 3
      %v1086 = vperm.slane %v1064, 4
      %v1087 = vperm.slane %v1064, 5
      %v1088 = vperm.slane %v1064, 6
      %v1160 = vunpack.c.l.b16 %v1000
      %v1161 = vunpack.c.h.b16 %v1000
      %v1162 = vunpack.c.l.b16 %v1001
      %v1163 = vunpack.c.h.b16 %v1001
      %v1164 = vunpack.c.l.b16 %v1002
      %v1165 = vunpack.c.h.b16 %v1002
      %v1166 = vunpack.c.l.b16 %v1003
      %v1167 = vunpack.c.l.b16 %v1004
      %v1168 = vunpack.c.h.b16 %v1004
      %v1169 = vunpack.c.l.b16 %v1005
      %v1170 = vunpack.c.h.b16 %v1005
      %v1171 = vunpack.c.l.b16 %v1006
      %v1172 = vunpack.c.h.b16 %v1006
      %v1173 = vunpack.c.l.b16 %v1007
      %v1174 = vunpack.c.l.b16 %v1008
      %v1175 = vunpack.c.h.b16 %v1008
      %v1176 = vunpack.c.l.b16 %v1009
      %v1177 = vunpack.c.h.b16 %v1009
      %v1178 = vunpack.c.l.b16 %v1010
      %v1179 = vunpack.c.h.b16 %v1010
      %v1180 = vunpack.c.l.b16 %v1011
      %v1181 = vunpack.c.l.b16 %v1012
      %v1182 = vunpack.c.h.b16 %v1012
      %v1183 = vunpack.c.l.b16 %v1013
      %v1184 = vunpack.c.h.b16 %v1013
      %v1185 = vunpack.c.l.b16 %v1014
      %v1186 = vunpack.c.h.b16 %v1014
      %v1187 = vunpack.c.l.b16 %v1015
      %v1188 = vunpack.c.l.b16 %v1016
      %v1189 = vunpack.c.h.b16 %v1016
      %v1190 = vunpack.c.l.b16 %v1017
      %v1191 = vunpack.c.h.b16 %v1017
      %v1192 = vunpack.c.l.b16 %v1018
      %v1193 = vunpack.c.h.b16 %v1018
      %v1194 = vunpack.c.l.b16 %v1019
      %v1195 = vunpack.c.l.b16 %v1020
      %v1196 = vunpack.c.h.b16 %v1020
      %v1197 = vunpack.c.l.b16 %v1021
      %v1198 = vunpack.c.h.b16 %v1021
      %v1199 = vunpack.c.l.b16 %v1022
      %v1200 = vunpack.c.h.b16 %v1022
      %v1201 = vunpack.c.l.b16 %v1023
      %v1202 = vunpack.c.l.b16 %v1024
      %v1203 = vunpack.c.h.b16 %v1024
      %v1204 = vunpack.c.l.b16 %v1025
      %v1205 = vunpack.c.h.b16 %v1025
      %v1206 = vunpack.c.l.b16 %v1026
      %v1207 = vunpack.c.h.b16 %v1026
      %v1208 = vunpack.c.l.b16 %v1027
      %v1209 = vunpack.c.l.b16 %v1028
      %v1210 = vunpack.c.h.b16 %v1028
      %v1211 = vunpack.c.l.b16 %v1029
      %v1212 = vunpack.c.h.b16 %v1029
      %v1213 = vunpack.c.l.b16 %v1030
      %v1214 = vunpack.c.h.b16 %v1030
      %v1215 = vunpack.c.l.b16 %v1031
      %v1216 = vunpack.c.l.b16 %v1032
      %v1217 = vunpack.c.h.b16 %v1032
      %v1218 = vunpack.c.l.b16 %v1033
      %v1219 = vunpack.c.h.b16 %v1033
      %v1220 = vunpack.c.l.b16 %v1034
      %v1221 = vunpack.c.h.b16 %v1034
      %v1222 = vunpack.c.l.b16 %v1035
      %v1223 = vunpack.c.l.b16 %v1036
      %v1224 = vunpack.c.h.b16 %v1036
      %v1225 = vunpack.c.l.b16 %v1037
      %v1226 = vunpack.c.h.b16 %v1037
      %v1227 = vunpack.c.l.b16 %v1038
      %v1228 = vunpack.c.h.b16 %v1038
      %v1229 = vunpack.c.l.b16 %v1039
      %v1230 = vunpack.c.l.b16 %v1040
      %v1231 = vunpack.c.h.b16 %v1040
      %v1232 = vunpack.c.l.b16 %v1041
      %v1233 = vunpack.c.h.b16 %v1041
      %v1234 = vunpack.c.l.b16 %v1042
      %v1235 = vunpack.c.h.b16 %v1042
      %v1236 = vunpack.c.l.b16 %v1043
      %v1237 = vunpack.c.l.b16 %v1044
      %v1238 = vunpack.c.h.b16 %v1044
      %v1239 = vunpack.c.l.b16 %v1045
      %v1240 = vunpack.c.h.b16 %v1045
      %v1241 = vunpack.c.l.b16 %v1046
      %v1242 = vunpack.c.h.b16 %v1046
      %v1243 = vunpack.c.l.b16 %v1047
      %v1244 = vunpack.c.l.b16 %v1048
      %v1245 = vunpack.c.h.b16 %v1048
      %v1246 = vunpack.c.l.b16 %v1049
      %v1247 = vunpack.c.h.b16 %v1049
      %v1248 = vunpack.c.l.b16 %v1050
      %v1249 = vunpack.c.h.b16 %v1050
      %v1250 = vunpack.c.l.b16 %v1051
      %v1251 = vunpack.c.l.b16 %v1052
      %v1252 = vunpack.c.h.b16 %v1052
      %v1253 = vunpack.c.l.b16 %v1053
      %v1254 = vunpack.c.h.b16 %v1053
      %v1255 = vunpack.c.l.b16 %v1054
      %v1256 = vunpack.c.h.b16 %v1054
      %v1257 = vunpack.c.l.b16 %v1055
      %v1258 = vunpack.c.l.b16 %v1056
      %v1259 = vunpack.c.h.b16 %v1056
      %v1260 = vunpack.c.l.b16 %v1057
      %v1261 = vunpack.c.h.b16 %v1057
      %v1262 = vunpack.c.l.b16 %v1058
      %v1263 = vunpack.c.h.b16 %v1058
      %v1264 = vunpack.c.l.b16 %v1059
      %v1265 = vunpack.c.l.b16 %v1060
      %v1266 = vunpack.c.h.b16 %v1060
      %v1267 = vunpack.c.l.b16 %v1061
      %v1268 = vunpack.c.h.b16 %v1061
      %v1269 = vunpack.c.l.b16 %v1062
      %v1270 = vunpack.c.h.b16 %v1062
      %v1271 = vunpack.c.l.b16 %v1063
      %v1272 = vpack.c.b16 %v1167, %v1160
      %v1273 = vpack.c.b16 %v1168, %v1161
      %v1274 = vpack.c.b16 %v1169, %v1162
      %v1275 = vpack.c.b16 %v1170, %v1163
      %v1276 = vpack.c.b16 %v1171, %v1164
      %v1277 = vpack.c.b16 %v1172, %v1165
      %v1278 = vpack.c.b16 %v1173, %v1166
      %v1279 = vpack.c.b16 %v1181, %v1174
      %v1280 = vpack.c.b16 %v1182, %v1175
      %v1281 = vpack.c.b16 %v1183, %v1176
      %v1282 = vpack.c.b16 %v1184, %v1177
      %v1283 = vpack.c.b16 %v1185, %v1178
      %v1284 = vpack.c.b16 %v1186, %v1179
      %v1285 = vpack.c.b16 %v1187, %v1180
      %v1286 = vpack.c.b16 %v1195, %v1188
      %v1287 = vpack.c.b16 %v1196, %v1189
      %v1288 = vpack.c.b16 %v1197, %v1190
      %v1289 = vpack.c.b16 %v1198, %v1191
      %v1290 = vpack.c.b16 %v1199, %v1192
      %v1291 = vpack.c.b16 %v1200, %v1193
      %v1292 = vpack.c.b16 %v1201, %v1194
      %v1293 = vpack.c.b16 %v1209, %v1202
      %v1294 = vpack.c.b16 %v1210, %v1203
      %v1295 = vpack.c.b16 %v1211, %v1204
      %v1296 = vpack.c.b16 %v1212, %v1205
      %v1297 = vpack.c.b16 %v1213, %v1206
      %v1298 = vpack.c.b16 %v1214, %v1207
      %v1299 = vpack.c.b16 %v1215, %v1208
      %v1300 = vpack.c.b16 %v1223, %v1216
      %v1301 = vpack.c.b16 %v1224, %v1217
      %v1302 = vpack.c.b16 %v1225, %v1218
      %v1303 = vpack.c.b16 %v1226, %v1219
      %v1304 = vpack.c.b16 %v1227, %v1220
      %v1305 = vpack.c.b16 %v1228, %v1221
      %v1306 = vpack.c.b16 %v1229, %v1222
      %v1307 = vpack.c.b16 %v1237, %v1230
      %v1308 = vpack.c.b16 %v1238, %v1231
      %v1309 = vpack.c.b16 %v1239, %v1232
      %v1310 = vpack.c.b16 %v1240, %v1233
      %v1311 = vpack.c.b16 %v1241, %v1234
      %v1312 = vpack.c.b16 %v1242, %v1235
      %v1313 = vpack.c.b16 %v1243, %v1236
      %v1314 = vpack.c.b16 %v1251, %v1244
      %v1315 = vpack.c.b16 %v1252, %v1245
      %v1316 = vpack.c.b16 %v1253, %v1246
      %v1317 = vpack.c.b16 %v1254, %v1247
      %v1318 = vpack.c.b16 %v1255, %v1248
      %v1319 = vpack.c.b16 %v1256, %v1249
      %v1320 = vpack.c.b16 %v1257, %v1250
      %v1321 = vpack.c.b16 %v1265, %v1258
      %v1322 = vpack.c.b16 %v1266, %v1259
      %v1323 = vpack.c.b16 %v1267, %v1260
      %v1324 = vpack.c.b16 %v1268, %v1261
      %v1325 = vpack.c.b16 %v1269, %v1262
      %v1326 = vpack.c.b16 %v1270, %v1263
      %v1327 = vpack.c.b16 %v1271, %v1264
      %1384 = vmatpush.bf16.msra.mxu0 %v1321
      %1385 = vmatpush.bf16.msra.mxu0 %v1314
      %1386 = vmatpush.bf16.msra.mxu0 %v1307
      %1387 = vmatpush.bf16.msra.mxu0 %v1300
      %1388 = vmatpush.bf16.msra.mxu0 %v1293
      %1389 = vmatpush.bf16.msra.mxu0 %v1286
      %1390 = vmatpush.bf16.msra.mxu0 %v1279
      %1391 = vmatpush.bf16.msra.mxu0 %v1272
      %1392 = vmatmul.bf16.gmra.mxu0 %v1065
      %v1393 = vpop.f32.mrf.mxu0
      %v1394 = vadd.f32 %v1082, %v1393
      %v1395 = vpop.f32.mrf.mxu0
      %v1396 = vadd.f32 %v1082, %v1395
      %1397 = vmatmul.bf16.gmra.mxu0 %v1066
      %v1398 = vpop.f32.mrf.mxu0
      %v1399 = vadd.f32 %v1082, %v1398
      %v1400 = vpop.f32.mrf.mxu0
      %v1401 = vadd.f32 %v1082, %v1400
      %1402 = vmatmul.bf16.gmra.mxu0 %v1067
      %v1403 = vpop.f32.mrf.mxu0
      %v1404 = vadd.f32 %v1082, %v1403
      %v1405 = vpop.f32.mrf.mxu0
      %v1406 = vadd.f32 %v1082, %v1405
      %1407 = vmatmul.bf16.gmra.mxu0 %v1068
      %v1408 = vpop.f32.mrf.mxu0
      %v1409 = vadd.f32 %v1082, %v1408
      %v1410 = vpop.f32.mrf.mxu0
      %v1411 = vadd.f32 %v1082, %v1410
      %1412 = vmatmul.bf16.gmra.mxu0 %v1069
      %v1413 = vpop.f32.mrf.mxu0
      %v1414 = vadd.f32 %v1082, %v1413
      %v1415 = vpop.f32.mrf.mxu0
      %v1416 = vadd.f32 %v1082, %v1415
      %1417 = vmatmul.bf16.gmra.mxu0 %v1070
      %v1418 = vpop.f32.mrf.mxu0
      %v1419 = vadd.f32 %v1082, %v1418
      %v1420 = vpop.f32.mrf.mxu0
      %v1421 = vadd.f32 %v1082, %v1420
      %1422 = vmatmul.bf16.gmra.mxu0 %v1071
      %v1423 = vpop.f32.mrf.mxu0
      %v1424 = vadd.f32 %v1082, %v1423
      %v1425 = vpop.f32.mrf.mxu0
      %v1426 = vadd.f32 %v1082, %v1425
      %1427 = vmatmul.bf16.gmra.mxu0 %v1072
      %v1428 = vpop.f32.mrf.mxu0
      %v1429 = vadd.f32 %v1082, %v1428
      %v1430 = vpop.f32.mrf.mxu0
      %v1431 = vadd.f32 %v1082, %v1430
      %1432 = vmatmul.bf16.gmra.mxu0 %v1073
      %v1433 = vpop.f32.mrf.mxu0
      %v1434 = vadd.f32 %v1082, %v1433
      %v1435 = vpop.f32.mrf.mxu0
      %v1436 = vadd.f32 %v1082, %v1435
      %1437 = vmatmul.bf16.gmra.mxu0 %v1074
      %v1438 = vpop.f32.mrf.mxu0
      %v1439 = vadd.f32 %v1082, %v1438
      %v1440 = vpop.f32.mrf.mxu0
      %v1441 = vadd.f32 %v1082, %v1440
      %1442 = vmatmul.bf16.gmra.mxu0 %v1075
      %v1443 = vpop.f32.mrf.mxu0
      %v1444 = vadd.f32 %v1082, %v1443
      %v1445 = vpop.f32.mrf.mxu0
      %v1446 = vadd.f32 %v1082, %v1445
      %1447 = vmatmul.bf16.gmra.mxu0 %v1076
      %v1448 = vpop.f32.mrf.mxu0
      %v1449 = vadd.f32 %v1082, %v1448
      %v1450 = vpop.f32.mrf.mxu0
      %v1451 = vadd.f32 %v1082, %v1450
      %1452 = vmatmul.bf16.gmra.mxu0 %v1077
      %v1453 = vpop.f32.mrf.mxu0
      %v1454 = vadd.f32 %v1082, %v1453
      %v1455 = vpop.f32.mrf.mxu0
      %v1456 = vadd.f32 %v1082, %v1455
      %1457 = vmatmul.bf16.gmra.mxu0 %v1078
      %v1458 = vpop.f32.mrf.mxu0
      %v1459 = vadd.f32 %v1082, %v1458
      %v1460 = vpop.f32.mrf.mxu0
      %v1461 = vadd.f32 %v1082, %v1460
      %1462 = vmatmul.bf16.gmra.mxu0 %v1079
      %v1463 = vpop.f32.mrf.mxu0
      %v1464 = vadd.f32 %v1082, %v1463
      %v1465 = vpop.f32.mrf.mxu0
      %v1466 = vadd.f32 %v1082, %v1465
      %1467 = vmatmul.bf16.gmra.mxu0 %v1080
      %v1468 = vpop.f32.mrf.mxu0
      %v1469 = vadd.f32 %v1082, %v1468
      %v1470 = vpop.f32.mrf.mxu0
      %v1471 = vadd.f32 %v1082, %v1470
      %1472 = vdwg.mxu0
      %1473 = vmatpush.bf16.msra.mxu0 %v1322
      %1474 = vmatpush.bf16.msra.mxu0 %v1315
      %1475 = vmatpush.bf16.msra.mxu0 %v1308
      %1476 = vmatpush.bf16.msra.mxu0 %v1301
      %1477 = vmatpush.bf16.msra.mxu0 %v1294
      %1478 = vmatpush.bf16.msra.mxu0 %v1287
      %1479 = vmatpush.bf16.msra.mxu0 %v1280
      %1480 = vmatpush.bf16.msra.mxu0 %v1273
      %1481 = vmatmul.bf16.gmra.mxu0 %v1065
      %v1482 = vpop.f32.mrf.mxu0
      %v1483 = vadd.f32 %v1083, %v1482
      %v1484 = vpop.f32.mrf.mxu0
      %v1485 = vadd.f32 %v1083, %v1484
      %1486 = vmatmul.bf16.gmra.mxu0 %v1066
      %v1487 = vpop.f32.mrf.mxu0
      %v1488 = vadd.f32 %v1083, %v1487
      %v1489 = vpop.f32.mrf.mxu0
      %v1490 = vadd.f32 %v1083, %v1489
      %1491 = vmatmul.bf16.gmra.mxu0 %v1067
      %v1492 = vpop.f32.mrf.mxu0
      %v1493 = vadd.f32 %v1083, %v1492
      %v1494 = vpop.f32.mrf.mxu0
      %v1495 = vadd.f32 %v1083, %v1494
      %1496 = vmatmul.bf16.gmra.mxu0 %v1068
      %v1497 = vpop.f32.mrf.mxu0
      %v1498 = vadd.f32 %v1083, %v1497
      %v1499 = vpop.f32.mrf.mxu0
      %v1500 = vadd.f32 %v1083, %v1499
      %1501 = vmatmul.bf16.gmra.mxu0 %v1069
      %v1502 = vpop.f32.mrf.mxu0
      %v1503 = vadd.f32 %v1083, %v1502
      %v1504 = vpop.f32.mrf.mxu0
      %v1505 = vadd.f32 %v1083, %v1504
      %1506 = vmatmul.bf16.gmra.mxu0 %v1070
      %v1507 = vpop.f32.mrf.mxu0
      %v1508 = vadd.f32 %v1083, %v1507
      %v1509 = vpop.f32.mrf.mxu0
      %v1510 = vadd.f32 %v1083, %v1509
      %1511 = vmatmul.bf16.gmra.mxu0 %v1071
      %v1512 = vpop.f32.mrf.mxu0
      %v1513 = vadd.f32 %v1083, %v1512
      %v1514 = vpop.f32.mrf.mxu0
      %v1515 = vadd.f32 %v1083, %v1514
      %1516 = vmatmul.bf16.gmra.mxu0 %v1072
      %v1517 = vpop.f32.mrf.mxu0
      %v1518 = vadd.f32 %v1083, %v1517
      %v1519 = vpop.f32.mrf.mxu0
      %v1520 = vadd.f32 %v1083, %v1519
      %1521 = vmatmul.bf16.gmra.mxu0 %v1073
      %v1522 = vpop.f32.mrf.mxu0
      %v1523 = vadd.f32 %v1083, %v1522
      %v1524 = vpop.f32.mrf.mxu0
      %v1525 = vadd.f32 %v1083, %v1524
      %1526 = vmatmul.bf16.gmra.mxu0 %v1074
      %v1527 = vpop.f32.mrf.mxu0
      %v1528 = vadd.f32 %v1083, %v1527
      %v1529 = vpop.f32.mrf.mxu0
      %v1530 = vadd.f32 %v1083, %v1529
      %1531 = vmatmul.bf16.gmra.mxu0 %v1075
      %v1532 = vpop.f32.mrf.mxu0
      %v1533 = vadd.f32 %v1083, %v1532
      %v1534 = vpop.f32.mrf.mxu0
      %v1535 = vadd.f32 %v1083, %v1534
      %1536 = vmatmul.bf16.gmra.mxu0 %v1076
      %v1537 = vpop.f32.mrf.mxu0
      %v1538 = vadd.f32 %v1083, %v1537
      %v1539 = vpop.f32.mrf.mxu0
      %v1540 = vadd.f32 %v1083, %v1539
      %1541 = vmatmul.bf16.gmra.mxu0 %v1077
      %v1542 = vpop.f32.mrf.mxu0
      %v1543 = vadd.f32 %v1083, %v1542
      %v1544 = vpop.f32.mrf.mxu0
      %v1545 = vadd.f32 %v1083, %v1544
      %1546 = vmatmul.bf16.gmra.mxu0 %v1078
      %v1547 = vpop.f32.mrf.mxu0
      %v1548 = vadd.f32 %v1083, %v1547
      %v1549 = vpop.f32.mrf.mxu0
      %v1550 = vadd.f32 %v1083, %v1549
      %1551 = vmatmul.bf16.gmra.mxu0 %v1079
      %v1552 = vpop.f32.mrf.mxu0
      %v1553 = vadd.f32 %v1083, %v1552
      %v1554 = vpop.f32.mrf.mxu0
      %v1555 = vadd.f32 %v1083, %v1554
      %1556 = vmatmul.bf16.gmra.mxu0 %v1080
      %v1557 = vpop.f32.mrf.mxu0
      %v1558 = vadd.f32 %v1083, %v1557
      %v1559 = vpop.f32.mrf.mxu0
      %v1560 = vadd.f32 %v1083, %v1559
      %1561 = vdwg.mxu0
      %1562 = vmatpush.bf16.msra.mxu0 %v1323
      %1563 = vmatpush.bf16.msra.mxu0 %v1316
      %1564 = vmatpush.bf16.msra.mxu0 %v1309
      %1565 = vmatpush.bf16.msra.mxu0 %v1302
      %1566 = vmatpush.bf16.msra.mxu0 %v1295
      %1567 = vmatpush.bf16.msra.mxu0 %v1288
      %1568 = vmatpush.bf16.msra.mxu0 %v1281
      %1569 = vmatpush.bf16.msra.mxu0 %v1274
      %1570 = vmatmul.bf16.gmra.mxu0 %v1065
      %v1571 = vpop.f32.mrf.mxu0
      %v1572 = vadd.f32 %v1084, %v1571
      %v1573 = vpop.f32.mrf.mxu0
      %v1574 = vadd.f32 %v1084, %v1573
      %1575 = vmatmul.bf16.gmra.mxu0 %v1066
      %v1576 = vpop.f32.mrf.mxu0
      %v1577 = vadd.f32 %v1084, %v1576
      %v1578 = vpop.f32.mrf.mxu0
      %v1579 = vadd.f32 %v1084, %v1578
      %1580 = vmatmul.bf16.gmra.mxu0 %v1067
      %v1581 = vpop.f32.mrf.mxu0
      %v1582 = vadd.f32 %v1084, %v1581
      %v1583 = vpop.f32.mrf.mxu0
      %v1584 = vadd.f32 %v1084, %v1583
      %1585 = vmatmul.bf16.gmra.mxu0 %v1068
      %v1586 = vpop.f32.mrf.mxu0
      %v1587 = vadd.f32 %v1084, %v1586
      %v1588 = vpop.f32.mrf.mxu0
      %v1589 = vadd.f32 %v1084, %v1588
      %1590 = vmatmul.bf16.gmra.mxu0 %v1069
      %v1591 = vpop.f32.mrf.mxu0
      %v1592 = vadd.f32 %v1084, %v1591
      %v1593 = vpop.f32.mrf.mxu0
      %v1594 = vadd.f32 %v1084, %v1593
      %1595 = vmatmul.bf16.gmra.mxu0 %v1070
      %v1596 = vpop.f32.mrf.mxu0
      %v1597 = vadd.f32 %v1084, %v1596
      %v1598 = vpop.f32.mrf.mxu0
      %v1599 = vadd.f32 %v1084, %v1598
      %1600 = vmatmul.bf16.gmra.mxu0 %v1071
      %v1601 = vpop.f32.mrf.mxu0
      %v1602 = vadd.f32 %v1084, %v1601
      %v1603 = vpop.f32.mrf.mxu0
      %v1604 = vadd.f32 %v1084, %v1603
      %1605 = vmatmul.bf16.gmra.mxu0 %v1072
      %v1606 = vpop.f32.mrf.mxu0
      %v1607 = vadd.f32 %v1084, %v1606
      %v1608 = vpop.f32.mrf.mxu0
      %v1609 = vadd.f32 %v1084, %v1608
      %1610 = vmatmul.bf16.gmra.mxu0 %v1073
      %v1611 = vpop.f32.mrf.mxu0
      %v1612 = vadd.f32 %v1084, %v1611
      %v1613 = vpop.f32.mrf.mxu0
      %v1614 = vadd.f32 %v1084, %v1613
      %1615 = vmatmul.bf16.gmra.mxu0 %v1074
      %v1616 = vpop.f32.mrf.mxu0
      %v1617 = vadd.f32 %v1084, %v1616
      %v1618 = vpop.f32.mrf.mxu0
      %v1619 = vadd.f32 %v1084, %v1618
      %1620 = vmatmul.bf16.gmra.mxu0 %v1075
      %v1621 = vpop.f32.mrf.mxu0
      %v1622 = vadd.f32 %v1084, %v1621
      %v1623 = vpop.f32.mrf.mxu0
      %v1624 = vadd.f32 %v1084, %v1623
      %1625 = vmatmul.bf16.gmra.mxu0 %v1076
      %v1626 = vpop.f32.mrf.mxu0
      %v1627 = vadd.f32 %v1084, %v1626
      %v1628 = vpop.f32.mrf.mxu0
      %v1629 = vadd.f32 %v1084, %v1628
      %1630 = vmatmul.bf16.gmra.mxu0 %v1077
      %v1631 = vpop.f32.mrf.mxu0
      %v1632 = vadd.f32 %v1084, %v1631
      %v1633 = vpop.f32.mrf.mxu0
      %v1634 = vadd.f32 %v1084, %v1633
      %1635 = vmatmul.bf16.gmra.mxu0 %v1078
      %v1636 = vpop.f32.mrf.mxu0
      %v1637 = vadd.f32 %v1084, %v1636
      %v1638 = vpop.f32.mrf.mxu0
      %v1639 = vadd.f32 %v1084, %v1638
      %1640 = vmatmul.bf16.gmra.mxu0 %v1079
      %v1641 = vpop.f32.mrf.mxu0
      %v1642 = vadd.f32 %v1084, %v1641
      %v1643 = vpop.f32.mrf.mxu0
      %v1644 = vadd.f32 %v1084, %v1643
      %1645 = vmatmul.bf16.gmra.mxu0 %v1080
      %v1646 = vpop.f32.mrf.mxu0
      %v1647 = vadd.f32 %v1084, %v1646
      %v1648 = vpop.f32.mrf.mxu0
      %v1649 = vadd.f32 %v1084, %v1648
      %1650 = vdwg.mxu0
      %1651 = vmatpush.bf16.msra.mxu0 %v1324
      %1652 = vmatpush.bf16.msra.mxu0 %v1317
      %1653 = vmatpush.bf16.msra.mxu0 %v1310
      %1654 = vmatpush.bf16.msra.mxu0 %v1303
      %1655 = vmatpush.bf16.msra.mxu0 %v1296
      %1656 = vmatpush.bf16.msra.mxu0 %v1289
      %1657 = vmatpush.bf16.msra.mxu0 %v1282
      %1658 = vmatpush.bf16.msra.mxu0 %v1275
      %1659 = vmatmul.bf16.gmra.mxu0 %v1065
      %v1660 = vpop.f32.mrf.mxu0
      %v1661 = vadd.f32 %v1085, %v1660
      %v1662 = vpop.f32.mrf.mxu0
      %v1663 = vadd.f32 %v1085, %v1662
      %1664 = vmatmul.bf16.gmra.mxu0 %v1066
      %v1665 = vpop.f32.mrf.mxu0
      %v1666 = vadd.f32 %v1085, %v1665
      %v1667 = vpop.f32.mrf.mxu0
      %v1668 = vadd.f32 %v1085, %v1667
      %1669 = vmatmul.bf16.gmra.mxu0 %v1067
      %v1670 = vpop.f32.mrf.mxu0
      %v1671 = vadd.f32 %v1085, %v1670
      %v1672 = vpop.f32.mrf.mxu0
      %v1673 = vadd.f32 %v1085, %v1672
      %1674 = vmatmul.bf16.gmra.mxu0 %v1068
      %v1675 = vpop.f32.mrf.mxu0
      %v1676 = vadd.f32 %v1085, %v1675
      %v1677 = vpop.f32.mrf.mxu0
      %v1678 = vadd.f32 %v1085, %v1677
      %1679 = vmatmul.bf16.gmra.mxu0 %v1069
      %v1680 = vpop.f32.mrf.mxu0
      %v1681 = vadd.f32 %v1085, %v1680
      %v1682 = vpop.f32.mrf.mxu0
      %v1683 = vadd.f32 %v1085, %v1682
      %1684 = vmatmul.bf16.gmra.mxu0 %v1070
      %v1685 = vpop.f32.mrf.mxu0
      %v1686 = vadd.f32 %v1085, %v1685
      %v1687 = vpop.f32.mrf.mxu0
      %v1688 = vadd.f32 %v1085, %v1687
      %1689 = vmatmul.bf16.gmra.mxu0 %v1071
      %v1690 = vpop.f32.mrf.mxu0
      %v1691 = vadd.f32 %v1085, %v1690
      %v1692 = vpop.f32.mrf.mxu0
      %v1693 = vadd.f32 %v1085, %v1692
      %1694 = vmatmul.bf16.gmra.mxu0 %v1072
      %v1695 = vpop.f32.mrf.mxu0
      %v1696 = vadd.f32 %v1085, %v1695
      %v1697 = vpop.f32.mrf.mxu0
      %v1698 = vadd.f32 %v1085, %v1697
      %1699 = vmatmul.bf16.gmra.mxu0 %v1073
      %v1700 = vpop.f32.mrf.mxu0
      %v1701 = vadd.f32 %v1085, %v1700
      %v1702 = vpop.f32.mrf.mxu0
      %v1703 = vadd.f32 %v1085, %v1702
      %1704 = vmatmul.bf16.gmra.mxu0 %v1074
      %v1705 = vpop.f32.mrf.mxu0
      %v1706 = vadd.f32 %v1085, %v1705
      %v1707 = vpop.f32.mrf.mxu0
      %v1708 = vadd.f32 %v1085, %v1707
      %1709 = vmatmul.bf16.gmra.mxu0 %v1075
      %v1710 = vpop.f32.mrf.mxu0
      %v1711 = vadd.f32 %v1085, %v1710
      %v1712 = vpop.f32.mrf.mxu0
      %v1713 = vadd.f32 %v1085, %v1712
      %1714 = vmatmul.bf16.gmra.mxu0 %v1076
      %v1715 = vpop.f32.mrf.mxu0
      %v1716 = vadd.f32 %v1085, %v1715
      %v1717 = vpop.f32.mrf.mxu0
      %v1718 = vadd.f32 %v1085, %v1717
      %1719 = vmatmul.bf16.gmra.mxu0 %v1077
      %v1720 = vpop.f32.mrf.mxu0
      %v1721 = vadd.f32 %v1085, %v1720
      %v1722 = vpop.f32.mrf.mxu0
      %v1723 = vadd.f32 %v1085, %v1722
      %1724 = vmatmul.bf16.gmra.mxu0 %v1078
      %v1725 = vpop.f32.mrf.mxu0
      %v1726 = vadd.f32 %v1085, %v1725
      %v1727 = vpop.f32.mrf.mxu0
      %v1728 = vadd.f32 %v1085, %v1727
      %1729 = vmatmul.bf16.gmra.mxu0 %v1079
      %v1730 = vpop.f32.mrf.mxu0
      %v1731 = vadd.f32 %v1085, %v1730
      %v1732 = vpop.f32.mrf.mxu0
      %v1733 = vadd.f32 %v1085, %v1732
      %1734 = vmatmul.bf16.gmra.mxu0 %v1080
      %v1735 = vpop.f32.mrf.mxu0
      %v1736 = vadd.f32 %v1085, %v1735
      %v1737 = vpop.f32.mrf.mxu0
      %v1738 = vadd.f32 %v1085, %v1737
      %1739 = vdwg.mxu0
      %1740 = vmatpush.bf16.msra.mxu0 %v1325
      %1741 = vmatpush.bf16.msra.mxu0 %v1318
      %1742 = vmatpush.bf16.msra.mxu0 %v1311
      %1743 = vmatpush.bf16.msra.mxu0 %v1304
      %1744 = vmatpush.bf16.msra.mxu0 %v1297
      %1745 = vmatpush.bf16.msra.mxu0 %v1290
      %1746 = vmatpush.bf16.msra.mxu0 %v1283
      %1747 = vmatpush.bf16.msra.mxu0 %v1276
      %1748 = vmatmul.bf16.gmra.mxu0 %v1065
      %v1749 = vpop.f32.mrf.mxu0
      %v1750 = vadd.f32 %v1086, %v1749
      %v1751 = vpop.f32.mrf.mxu0
      %v1752 = vadd.f32 %v1086, %v1751
      %1753 = vmatmul.bf16.gmra.mxu0 %v1066
      %v1754 = vpop.f32.mrf.mxu0
      %v1755 = vadd.f32 %v1086, %v1754
      %v1756 = vpop.f32.mrf.mxu0
      %v1757 = vadd.f32 %v1086, %v1756
      %1758 = vmatmul.bf16.gmra.mxu0 %v1067
      %v1759 = vpop.f32.mrf.mxu0
      %v1760 = vadd.f32 %v1086, %v1759
      %v1761 = vpop.f32.mrf.mxu0
      %v1762 = vadd.f32 %v1086, %v1761
      %1763 = vmatmul.bf16.gmra.mxu0 %v1068
      %v1764 = vpop.f32.mrf.mxu0
      %v1765 = vadd.f32 %v1086, %v1764
      %v1766 = vpop.f32.mrf.mxu0
      %v1767 = vadd.f32 %v1086, %v1766
      %1768 = vmatmul.bf16.gmra.mxu0 %v1069
      %v1769 = vpop.f32.mrf.mxu0
      %v1770 = vadd.f32 %v1086, %v1769
      %v1771 = vpop.f32.mrf.mxu0
      %v1772 = vadd.f32 %v1086, %v1771
      %1773 = vmatmul.bf16.gmra.mxu0 %v1070
      %v1774 = vpop.f32.mrf.mxu0
      %v1775 = vadd.f32 %v1086, %v1774
      %v1776 = vpop.f32.mrf.mxu0
      %v1777 = vadd.f32 %v1086, %v1776
      %1778 = vmatmul.bf16.gmra.mxu0 %v1071
      %v1779 = vpop.f32.mrf.mxu0
      %v1780 = vadd.f32 %v1086, %v1779
      %v1781 = vpop.f32.mrf.mxu0
      %v1782 = vadd.f32 %v1086, %v1781
      %1783 = vmatmul.bf16.gmra.mxu0 %v1072
      %v1784 = vpop.f32.mrf.mxu0
      %v1785 = vadd.f32 %v1086, %v1784
      %v1786 = vpop.f32.mrf.mxu0
      %v1787 = vadd.f32 %v1086, %v1786
      %1788 = vmatmul.bf16.gmra.mxu0 %v1073
      %v1789 = vpop.f32.mrf.mxu0
      %v1790 = vadd.f32 %v1086, %v1789
      %v1791 = vpop.f32.mrf.mxu0
      %v1792 = vadd.f32 %v1086, %v1791
      %1793 = vmatmul.bf16.gmra.mxu0 %v1074
      %v1794 = vpop.f32.mrf.mxu0
      %v1795 = vadd.f32 %v1086, %v1794
      %v1796 = vpop.f32.mrf.mxu0
      %v1797 = vadd.f32 %v1086, %v1796
      %1798 = vmatmul.bf16.gmra.mxu0 %v1075
      %v1799 = vpop.f32.mrf.mxu0
      %v1800 = vadd.f32 %v1086, %v1799
      %v1801 = vpop.f32.mrf.mxu0
      %v1802 = vadd.f32 %v1086, %v1801
      %1803 = vmatmul.bf16.gmra.mxu0 %v1076
      %v1804 = vpop.f32.mrf.mxu0
      %v1805 = vadd.f32 %v1086, %v1804
      %v1806 = vpop.f32.mrf.mxu0
      %v1807 = vadd.f32 %v1086, %v1806
      %1808 = vmatmul.bf16.gmra.mxu0 %v1077
      %v1809 = vpop.f32.mrf.mxu0
      %v1810 = vadd.f32 %v1086, %v1809
      %v1811 = vpop.f32.mrf.mxu0
      %v1812 = vadd.f32 %v1086, %v1811
      %1813 = vmatmul.bf16.gmra.mxu0 %v1078
      %v1814 = vpop.f32.mrf.mxu0
      %v1815 = vadd.f32 %v1086, %v1814
      %v1816 = vpop.f32.mrf.mxu0
      %v1817 = vadd.f32 %v1086, %v1816
      %1818 = vmatmul.bf16.gmra.mxu0 %v1079
      %v1819 = vpop.f32.mrf.mxu0
      %v1820 = vadd.f32 %v1086, %v1819
      %v1821 = vpop.f32.mrf.mxu0
      %v1822 = vadd.f32 %v1086, %v1821
      %1823 = vmatmul.bf16.gmra.mxu0 %v1080
      %v1824 = vpop.f32.mrf.mxu0
      %v1825 = vadd.f32 %v1086, %v1824
      %v1826 = vpop.f32.mrf.mxu0
      %v1827 = vadd.f32 %v1086, %v1826
      %1828 = vdwg.mxu0
      %1829 = vmatpush.bf16.msra.mxu0 %v1326
      %1830 = vmatpush.bf16.msra.mxu0 %v1319
      %1831 = vmatpush.bf16.msra.mxu0 %v1312
      %1832 = vmatpush.bf16.msra.mxu0 %v1305
      %1833 = vmatpush.bf16.msra.mxu0 %v1298
      %1834 = vmatpush.bf16.msra.mxu0 %v1291
      %1835 = vmatpush.bf16.msra.mxu0 %v1284
      %1836 = vmatpush.bf16.msra.mxu0 %v1277
      %1837 = vmatmul.bf16.gmra.mxu0 %v1065
      %v1838 = vpop.f32.mrf.mxu0
      %v1839 = vadd.f32 %v1087, %v1838
      %v1840 = vpop.f32.mrf.mxu0
      %v1841 = vadd.f32 %v1087, %v1840
      %1842 = vmatmul.bf16.gmra.mxu0 %v1066
      %v1843 = vpop.f32.mrf.mxu0
      %v1844 = vadd.f32 %v1087, %v1843
      %v1845 = vpop.f32.mrf.mxu0
      %v1846 = vadd.f32 %v1087, %v1845
      %1847 = vmatmul.bf16.gmra.mxu0 %v1067
      %v1848 = vpop.f32.mrf.mxu0
      %v1849 = vadd.f32 %v1087, %v1848
      %v1850 = vpop.f32.mrf.mxu0
      %v1851 = vadd.f32 %v1087, %v1850
      %1852 = vmatmul.bf16.gmra.mxu0 %v1068
      %v1853 = vpop.f32.mrf.mxu0
      %v1854 = vadd.f32 %v1087, %v1853
      %v1855 = vpop.f32.mrf.mxu0
      %v1856 = vadd.f32 %v1087, %v1855
      %1857 = vmatmul.bf16.gmra.mxu0 %v1069
      %v1858 = vpop.f32.mrf.mxu0
      %v1859 = vadd.f32 %v1087, %v1858
      %v1860 = vpop.f32.mrf.mxu0
      %v1861 = vadd.f32 %v1087, %v1860
      %1862 = vmatmul.bf16.gmra.mxu0 %v1070
      %v1863 = vpop.f32.mrf.mxu0
      %v1864 = vadd.f32 %v1087, %v1863
      %v1865 = vpop.f32.mrf.mxu0
      %v1866 = vadd.f32 %v1087, %v1865
      %1867 = vmatmul.bf16.gmra.mxu0 %v1071
      %v1868 = vpop.f32.mrf.mxu0
      %v1869 = vadd.f32 %v1087, %v1868
      %v1870 = vpop.f32.mrf.mxu0
      %v1871 = vadd.f32 %v1087, %v1870
      %1872 = vmatmul.bf16.gmra.mxu0 %v1072
      %v1873 = vpop.f32.mrf.mxu0
      %v1874 = vadd.f32 %v1087, %v1873
      %v1875 = vpop.f32.mrf.mxu0
      %v1876 = vadd.f32 %v1087, %v1875
      %1877 = vmatmul.bf16.gmra.mxu0 %v1073
      %v1878 = vpop.f32.mrf.mxu0
      %v1879 = vadd.f32 %v1087, %v1878
      %v1880 = vpop.f32.mrf.mxu0
      %v1881 = vadd.f32 %v1087, %v1880
      %1882 = vmatmul.bf16.gmra.mxu0 %v1074
      %v1883 = vpop.f32.mrf.mxu0
      %v1884 = vadd.f32 %v1087, %v1883
      %v1885 = vpop.f32.mrf.mxu0
      %v1886 = vadd.f32 %v1087, %v1885
      %1887 = vmatmul.bf16.gmra.mxu0 %v1075
      %v1888 = vpop.f32.mrf.mxu0
      %v1889 = vadd.f32 %v1087, %v1888
      %v1890 = vpop.f32.mrf.mxu0
      %v1891 = vadd.f32 %v1087, %v1890
      %1892 = vmatmul.bf16.gmra.mxu0 %v1076
      %v1893 = vpop.f32.mrf.mxu0
      %v1894 = vadd.f32 %v1087, %v1893
      %v1895 = vpop.f32.mrf.mxu0
      %v1896 = vadd.f32 %v1087, %v1895
      %1897 = vmatmul.bf16.gmra.mxu0 %v1077
      %v1898 = vpop.f32.mrf.mxu0
      %v1899 = vadd.f32 %v1087, %v1898
      %v1900 = vpop.f32.mrf.mxu0
      %v1901 = vadd.f32 %v1087, %v1900
      %1902 = vmatmul.bf16.gmra.mxu0 %v1078
      %v1903 = vpop.f32.mrf.mxu0
      %v1904 = vadd.f32 %v1087, %v1903
      %v1905 = vpop.f32.mrf.mxu0
      %v1906 = vadd.f32 %v1087, %v1905
      %1907 = vmatmul.bf16.gmra.mxu0 %v1079
      %v1908 = vpop.f32.mrf.mxu0
      %v1909 = vadd.f32 %v1087, %v1908
      %v1910 = vpop.f32.mrf.mxu0
      %v1911 = vadd.f32 %v1087, %v1910
      %1912 = vmatmul.bf16.gmra.mxu0 %v1080
      %v1913 = vpop.f32.mrf.mxu0
      %v1914 = vadd.f32 %v1087, %v1913
      %v1915 = vpop.f32.mrf.mxu0
      %v1916 = vadd.f32 %v1087, %v1915
      %1917 = vdwg.mxu0
      %1918 = vmatpush.bf16.msra.mxu0 %v1327
      %1919 = vmatpush.bf16.msra.mxu0 %v1320
      %1920 = vmatpush.bf16.msra.mxu0 %v1313
      %1921 = vmatpush.bf16.msra.mxu0 %v1306
      %1922 = vmatpush.bf16.msra.mxu0 %v1299
      %1923 = vmatpush.bf16.msra.mxu0 %v1292
      %1924 = vmatpush.bf16.msra.mxu0 %v1285
      %1925 = vmatpush.bf16.msra.mxu0 %v1278
      %1926 = vmatmul.bf16.gmra.mxu0 %v1065
      %v1927 = vpop.f32.mrf.mxu0
      %v1928 = vadd.f32 %v1088, %v1927
      %v1929 = vpop.f32.mrf.mxu0
      %v1930 = vadd.f32 %v1088, %v1929
      %1931 = vmatmul.bf16.gmra.mxu0 %v1066
      %v1932 = vpop.f32.mrf.mxu0
      %v1933 = vadd.f32 %v1088, %v1932
      %v1934 = vpop.f32.mrf.mxu0
      %v1935 = vadd.f32 %v1088, %v1934
      %1936 = vmatmul.bf16.gmra.mxu0 %v1067
      %v1937 = vpop.f32.mrf.mxu0
      %v1938 = vadd.f32 %v1088, %v1937
      %v1939 = vpop.f32.mrf.mxu0
      %v1940 = vadd.f32 %v1088, %v1939
      %1941 = vmatmul.bf16.gmra.mxu0 %v1068
      %v1942 = vpop.f32.mrf.mxu0
      %v1943 = vadd.f32 %v1088, %v1942
      %v1944 = vpop.f32.mrf.mxu0
      %v1945 = vadd.f32 %v1088, %v1944
      %1946 = vmatmul.bf16.gmra.mxu0 %v1069
      %v1947 = vpop.f32.mrf.mxu0
      %v1948 = vadd.f32 %v1088, %v1947
      %v1949 = vpop.f32.mrf.mxu0
      %v1950 = vadd.f32 %v1088, %v1949
      %1951 = vmatmul.bf16.gmra.mxu0 %v1070
      %v1952 = vpop.f32.mrf.mxu0
      %v1953 = vadd.f32 %v1088, %v1952
      %v1954 = vpop.f32.mrf.mxu0
      %v1955 = vadd.f32 %v1088, %v1954
      %1956 = vmatmul.bf16.gmra.mxu0 %v1071
      %v1957 = vpop.f32.mrf.mxu0
      %v1958 = vadd.f32 %v1088, %v1957
      %v1959 = vpop.f32.mrf.mxu0
      %v1960 = vadd.f32 %v1088, %v1959
      %1961 = vmatmul.bf16.gmra.mxu0 %v1072
      %v1962 = vpop.f32.mrf.mxu0
      %v1963 = vadd.f32 %v1088, %v1962
      %v1964 = vpop.f32.mrf.mxu0
      %v1965 = vadd.f32 %v1088, %v1964
      %1966 = vmatmul.bf16.gmra.mxu0 %v1073
      %v1967 = vpop.f32.mrf.mxu0
      %v1968 = vadd.f32 %v1088, %v1967
      %v1969 = vpop.f32.mrf.mxu0
      %v1970 = vadd.f32 %v1088, %v1969
      %1971 = vmatmul.bf16.gmra.mxu0 %v1074
      %v1972 = vpop.f32.mrf.mxu0
      %v1973 = vadd.f32 %v1088, %v1972
      %v1974 = vpop.f32.mrf.mxu0
      %v1975 = vadd.f32 %v1088, %v1974
      %1976 = vmatmul.bf16.gmra.mxu0 %v1075
      %v1977 = vpop.f32.mrf.mxu0
      %v1978 = vadd.f32 %v1088, %v1977
      %v1979 = vpop.f32.mrf.mxu0
      %v1980 = vadd.f32 %v1088, %v1979
      %1981 = vmatmul.bf16.gmra.mxu0 %v1076
      %v1982 = vpop.f32.mrf.mxu0
      %v1983 = vadd.f32 %v1088, %v1982
      %v1984 = vpop.f32.mrf.mxu0
      %v1985 = vadd.f32 %v1088, %v1984
      %1986 = vmatmul.bf16.gmra.mxu0 %v1077
      %v1987 = vpop.f32.mrf.mxu0
      %v1988 = vadd.f32 %v1088, %v1987
      %v1989 = vpop.f32.mrf.mxu0
      %v1990 = vadd.f32 %v1088, %v1989
      %1991 = vmatmul.bf16.gmra.mxu0 %v1078
      %v1992 = vpop.f32.mrf.mxu0
      %v1993 = vadd.f32 %v1088, %v1992
      %v1994 = vpop.f32.mrf.mxu0
      %v1995 = vadd.f32 %v1088, %v1994
      %1996 = vmatmul.bf16.gmra.mxu0 %v1079
      %v1997 = vpop.f32.mrf.mxu0
      %v1998 = vadd.f32 %v1088, %v1997
      %v1999 = vpop.f32.mrf.mxu0
      %v2000 = vadd.f32 %v1088, %v1999
      %2001 = vmatmul.bf16.gmra.mxu0 %v1080
      %v2002 = vpop.f32.mrf.mxu0
      %v2003 = vadd.f32 %v1088, %v2002
      %v2004 = vpop.f32.mrf.mxu0
      %v2005 = vadd.f32 %v1088, %v2004
      %2006 = vdwg.mxu0
      %v2007 = vxor.u32 %v1394, 2147483648
      %v2008 = vxor.u32 %v1483, 2147483648
      %v2009 = vxor.u32 %v1572, 2147483648
      %v2010 = vxor.u32 %v1661, 2147483648
      %v2011 = vxor.u32 %v1750, 2147483648
      %v2012 = vxor.u32 %v1839, 2147483648
      %v2013 = vxor.u32 %v1928, 2147483648
      %v2014 = vxor.u32 %v1396, 2147483648
      %v2015 = vxor.u32 %v1485, 2147483648
      %v2016 = vxor.u32 %v1574, 2147483648
      %v2017 = vxor.u32 %v1663, 2147483648
      %v2018 = vxor.u32 %v1752, 2147483648
      %v2019 = vxor.u32 %v1841, 2147483648
      %v2020 = vxor.u32 %v1930, 2147483648
      %v2021 = vxor.u32 %v1399, 2147483648
      %v2022 = vxor.u32 %v1488, 2147483648
      %v2023 = vxor.u32 %v1577, 2147483648
      %v2024 = vxor.u32 %v1666, 2147483648
      %v2025 = vxor.u32 %v1755, 2147483648
      %v2026 = vxor.u32 %v1844, 2147483648
      %v2027 = vxor.u32 %v1933, 2147483648
      %v2028 = vxor.u32 %v1401, 2147483648
      %v2029 = vxor.u32 %v1490, 2147483648
      %v2030 = vxor.u32 %v1579, 2147483648
      %v2031 = vxor.u32 %v1668, 2147483648
      %v2032 = vxor.u32 %v1757, 2147483648
      %v2033 = vxor.u32 %v1846, 2147483648
      %v2034 = vxor.u32 %v1935, 2147483648
      %v2035 = vxor.u32 %v1404, 2147483648
      %v2036 = vxor.u32 %v1493, 2147483648
      %v2037 = vxor.u32 %v1582, 2147483648
      %v2038 = vxor.u32 %v1671, 2147483648
      %v2039 = vxor.u32 %v1760, 2147483648
      %v2040 = vxor.u32 %v1849, 2147483648
      %v2041 = vxor.u32 %v1938, 2147483648
      %v2042 = vxor.u32 %v1406, 2147483648
      %v2043 = vxor.u32 %v1495, 2147483648
      %v2044 = vxor.u32 %v1584, 2147483648
      %v2045 = vxor.u32 %v1673, 2147483648
      %v2046 = vxor.u32 %v1762, 2147483648
      %v2047 = vxor.u32 %v1851, 2147483648
      %v2048 = vxor.u32 %v1940, 2147483648
      %v2049 = vxor.u32 %v1409, 2147483648
      %v2050 = vxor.u32 %v1498, 2147483648
      %v2051 = vxor.u32 %v1587, 2147483648
      %v2052 = vxor.u32 %v1676, 2147483648
      %v2053 = vxor.u32 %v1765, 2147483648
      %v2054 = vxor.u32 %v1854, 2147483648
      %v2055 = vxor.u32 %v1943, 2147483648
      %v2056 = vxor.u32 %v1411, 2147483648
      %v2057 = vxor.u32 %v1500, 2147483648
      %v2058 = vxor.u32 %v1589, 2147483648
      %v2059 = vxor.u32 %v1678, 2147483648
      %v2060 = vxor.u32 %v1767, 2147483648
      %v2061 = vxor.u32 %v1856, 2147483648
      %v2062 = vxor.u32 %v1945, 2147483648
      %v2063 = vxor.u32 %v1414, 2147483648
      %v2064 = vxor.u32 %v1503, 2147483648
      %v2065 = vxor.u32 %v1592, 2147483648
      %v2066 = vxor.u32 %v1681, 2147483648
      %v2067 = vxor.u32 %v1770, 2147483648
      %v2068 = vxor.u32 %v1859, 2147483648
      %v2069 = vxor.u32 %v1948, 2147483648
      %v2070 = vxor.u32 %v1416, 2147483648
      %v2071 = vxor.u32 %v1505, 2147483648
      %v2072 = vxor.u32 %v1594, 2147483648
      %v2073 = vxor.u32 %v1683, 2147483648
      %v2074 = vxor.u32 %v1772, 2147483648
      %v2075 = vxor.u32 %v1861, 2147483648
      %v2076 = vxor.u32 %v1950, 2147483648
      %v2077 = vxor.u32 %v1419, 2147483648
      %v2078 = vxor.u32 %v1508, 2147483648
      %v2079 = vxor.u32 %v1597, 2147483648
      %v2080 = vxor.u32 %v1686, 2147483648
      %v2081 = vxor.u32 %v1775, 2147483648
      %v2082 = vxor.u32 %v1864, 2147483648
      %v2083 = vxor.u32 %v1953, 2147483648
      %v2084 = vxor.u32 %v1421, 2147483648
      %v2085 = vxor.u32 %v1510, 2147483648
      %v2086 = vxor.u32 %v1599, 2147483648
      %v2087 = vxor.u32 %v1688, 2147483648
      %v2088 = vxor.u32 %v1777, 2147483648
      %v2089 = vxor.u32 %v1866, 2147483648
      %v2090 = vxor.u32 %v1955, 2147483648
      %v2091 = vxor.u32 %v1424, 2147483648
      %v2092 = vxor.u32 %v1513, 2147483648
      %v2093 = vxor.u32 %v1602, 2147483648
      %v2094 = vxor.u32 %v1691, 2147483648
      %v2095 = vxor.u32 %v1780, 2147483648
      %v2096 = vxor.u32 %v1869, 2147483648
      %v2097 = vxor.u32 %v1958, 2147483648
      %v2098 = vxor.u32 %v1426, 2147483648
      %v2099 = vxor.u32 %v1515, 2147483648
      %v2100 = vxor.u32 %v1604, 2147483648
      %v2101 = vxor.u32 %v1693, 2147483648
      %v2102 = vxor.u32 %v1782, 2147483648
      %v2103 = vxor.u32 %v1871, 2147483648
      %v2104 = vxor.u32 %v1960, 2147483648
      %v2105 = vxor.u32 %v1429, 2147483648
      %v2106 = vxor.u32 %v1518, 2147483648
      %v2107 = vxor.u32 %v1607, 2147483648
      %v2108 = vxor.u32 %v1696, 2147483648
      %v2109 = vxor.u32 %v1785, 2147483648
      %v2110 = vxor.u32 %v1874, 2147483648
      %v2111 = vxor.u32 %v1963, 2147483648
      %v2112 = vxor.u32 %v1431, 2147483648
      %v2113 = vxor.u32 %v1520, 2147483648
      %v2114 = vxor.u32 %v1609, 2147483648
      %v2115 = vxor.u32 %v1698, 2147483648
      %v2116 = vxor.u32 %v1787, 2147483648
      %v2117 = vxor.u32 %v1876, 2147483648
      %v2118 = vxor.u32 %v1965, 2147483648
      %v2119 = vxor.u32 %v1434, 2147483648
      %v2120 = vxor.u32 %v1523, 2147483648
      %v2121 = vxor.u32 %v1612, 2147483648
      %v2122 = vxor.u32 %v1701, 2147483648
      %v2123 = vxor.u32 %v1790, 2147483648
      %v2124 = vxor.u32 %v1879, 2147483648
      %v2125 = vxor.u32 %v1968, 2147483648
      %v2126 = vxor.u32 %v1436, 2147483648
      %v2127 = vxor.u32 %v1525, 2147483648
      %v2128 = vxor.u32 %v1614, 2147483648
      %v2129 = vxor.u32 %v1703, 2147483648
      %v2130 = vxor.u32 %v1792, 2147483648
      %v2131 = vxor.u32 %v1881, 2147483648
      %v2132 = vxor.u32 %v1970, 2147483648
      %v2133 = vxor.u32 %v1439, 2147483648
      %v2134 = vxor.u32 %v1528, 2147483648
      %v2135 = vxor.u32 %v1617, 2147483648
      %v2136 = vxor.u32 %v1706, 2147483648
      %v2137 = vxor.u32 %v1795, 2147483648
      %v2138 = vxor.u32 %v1884, 2147483648
      %v2139 = vxor.u32 %v1973, 2147483648
      %v2140 = vxor.u32 %v1441, 2147483648
      %v2141 = vxor.u32 %v1530, 2147483648
      %v2142 = vxor.u32 %v1619, 2147483648
      %v2143 = vxor.u32 %v1708, 2147483648
      %v2144 = vxor.u32 %v1797, 2147483648
      %v2145 = vxor.u32 %v1886, 2147483648
      %v2146 = vxor.u32 %v1975, 2147483648
      %v2147 = vxor.u32 %v1444, 2147483648
      %v2148 = vxor.u32 %v1533, 2147483648
      %v2149 = vxor.u32 %v1622, 2147483648
      %v2150 = vxor.u32 %v1711, 2147483648
      %v2151 = vxor.u32 %v1800, 2147483648
      %v2152 = vxor.u32 %v1889, 2147483648
      %v2153 = vxor.u32 %v1978, 2147483648
      %v2154 = vxor.u32 %v1446, 2147483648
      %v2155 = vxor.u32 %v1535, 2147483648
      %v2156 = vxor.u32 %v1624, 2147483648
      %v2157 = vxor.u32 %v1713, 2147483648
      %v2158 = vxor.u32 %v1802, 2147483648
      %v2159 = vxor.u32 %v1891, 2147483648
      %v2160 = vxor.u32 %v1980, 2147483648
      %v2161 = vxor.u32 %v1449, 2147483648
      %v2162 = vxor.u32 %v1538, 2147483648
      %v2163 = vxor.u32 %v1627, 2147483648
      %v2164 = vxor.u32 %v1716, 2147483648
      %v2165 = vxor.u32 %v1805, 2147483648
      %v2166 = vxor.u32 %v1894, 2147483648
      %v2167 = vxor.u32 %v1983, 2147483648
      %v2168 = vxor.u32 %v1451, 2147483648
      %v2169 = vxor.u32 %v1540, 2147483648
      %v2170 = vxor.u32 %v1629, 2147483648
      %v2171 = vxor.u32 %v1718, 2147483648
      %v2172 = vxor.u32 %v1807, 2147483648
      %v2173 = vxor.u32 %v1896, 2147483648
      %v2174 = vxor.u32 %v1985, 2147483648
      %v2175 = vxor.u32 %v1454, 2147483648
      %v2176 = vxor.u32 %v1543, 2147483648
      %v2177 = vxor.u32 %v1632, 2147483648
      %v2178 = vxor.u32 %v1721, 2147483648
      %v2179 = vxor.u32 %v1810, 2147483648
      %v2180 = vxor.u32 %v1899, 2147483648
      %v2181 = vxor.u32 %v1988, 2147483648
      %v2182 = vxor.u32 %v1456, 2147483648
      %v2183 = vxor.u32 %v1545, 2147483648
      %v2184 = vxor.u32 %v1634, 2147483648
      %v2185 = vxor.u32 %v1723, 2147483648
      %v2186 = vxor.u32 %v1812, 2147483648
      %v2187 = vxor.u32 %v1901, 2147483648
      %v2188 = vxor.u32 %v1990, 2147483648
      %v2189 = vxor.u32 %v1459, 2147483648
      %v2190 = vxor.u32 %v1548, 2147483648
      %v2191 = vxor.u32 %v1637, 2147483648
      %v2192 = vxor.u32 %v1726, 2147483648
      %v2193 = vxor.u32 %v1815, 2147483648
      %v2194 = vxor.u32 %v1904, 2147483648
      %v2195 = vxor.u32 %v1993, 2147483648
      %v2196 = vxor.u32 %v1461, 2147483648
      %v2197 = vxor.u32 %v1550, 2147483648
      %v2198 = vxor.u32 %v1639, 2147483648
      %v2199 = vxor.u32 %v1728, 2147483648
      %v2200 = vxor.u32 %v1817, 2147483648
      %v2201 = vxor.u32 %v1906, 2147483648
      %v2202 = vxor.u32 %v1995, 2147483648
      %v2203 = vxor.u32 %v1464, 2147483648
      %v2204 = vxor.u32 %v1553, 2147483648
      %v2205 = vxor.u32 %v1642, 2147483648
      %v2206 = vxor.u32 %v1731, 2147483648
      %v2207 = vxor.u32 %v1820, 2147483648
      %v2208 = vxor.u32 %v1909, 2147483648
      %v2209 = vxor.u32 %v1998, 2147483648
      %v2210 = vxor.u32 %v1466, 2147483648
      %v2211 = vxor.u32 %v1555, 2147483648
      %v2212 = vxor.u32 %v1644, 2147483648
      %v2213 = vxor.u32 %v1733, 2147483648
      %v2214 = vxor.u32 %v1822, 2147483648
      %v2215 = vxor.u32 %v1911, 2147483648
      %v2216 = vxor.u32 %v2000, 2147483648
      %v2217 = vxor.u32 %v1469, 2147483648
      %v2218 = vxor.u32 %v1558, 2147483648
      %v2219 = vxor.u32 %v1647, 2147483648
      %v2220 = vxor.u32 %v1736, 2147483648
      %v2221 = vxor.u32 %v1825, 2147483648
      %v2222 = vxor.u32 %v1914, 2147483648
      %v2223 = vxor.u32 %v2003, 2147483648
      %v2224 = vxor.u32 %v1471, 2147483648
      %v2225 = vxor.u32 %v1560, 2147483648
      %v2226 = vxor.u32 %v1649, 2147483648
      %v2227 = vxor.u32 %v1738, 2147483648
      %v2228 = vxor.u32 %v1827, 2147483648
      %v2229 = vxor.u32 %v1916, 2147483648
      %v2230 = vxor.u32 %v2005, 2147483648
      %v2231 = vmul.f32 %v2007, 1.442695
      %v2232 = vpow.pop %v2231
      %v2233 = vmul.f32 %v2008, 1.442695
      %v2234 = vpow.pop %v2233
      %v2235 = vmul.f32 %v2009, 1.442695
      %v2236 = vpow.pop %v2235
      %v2237 = vmul.f32 %v2010, 1.442695
      %v2238 = vpow.pop %v2237
      %v2239 = vmul.f32 %v2011, 1.442695
      %v2240 = vpow.pop %v2239
      %v2241 = vmul.f32 %v2012, 1.442695
      %v2242 = vpow.pop %v2241
      %v2243 = vmul.f32 %v2013, 1.442695
      %v2244 = vpow.pop %v2243
      %v2245 = vmul.f32 %v2014, 1.442695
      %v2246 = vpow.pop %v2245
      %v2247 = vmul.f32 %v2015, 1.442695
      %v2248 = vpow.pop %v2247
      %v2249 = vmul.f32 %v2016, 1.442695
      %v2250 = vpow.pop %v2249
      %v2251 = vmul.f32 %v2017, 1.442695
      %v2252 = vpow.pop %v2251
      %v2253 = vmul.f32 %v2018, 1.442695
      %v2254 = vpow.pop %v2253
      %v2255 = vmul.f32 %v2019, 1.442695
      %v2256 = vpow.pop %v2255
      %v2257 = vmul.f32 %v2020, 1.442695
      %v2258 = vpow.pop %v2257
      %v2259 = vmul.f32 %v2021, 1.442695
      %v2260 = vpow.pop %v2259
      %v2261 = vmul.f32 %v2022, 1.442695
      %v2262 = vpow.pop %v2261
      %v2263 = vmul.f32 %v2023, 1.442695
      %v2264 = vpow.pop %v2263
      %v2265 = vmul.f32 %v2024, 1.442695
      %v2266 = vpow.pop %v2265
      %v2267 = vmul.f32 %v2025, 1.442695
      %v2268 = vpow.pop %v2267
      %v2269 = vmul.f32 %v2026, 1.442695
      %v2270 = vpow.pop %v2269
      %v2271 = vmul.f32 %v2027, 1.442695
      %v2272 = vpow.pop %v2271
      %v2273 = vmul.f32 %v2028, 1.442695
      %v2274 = vpow.pop %v2273
      %v2275 = vmul.f32 %v2029, 1.442695
      %v2276 = vpow.pop %v2275
      %v2277 = vmul.f32 %v2030, 1.442695
      %v2278 = vpow.pop %v2277
      %v2279 = vmul.f32 %v2031, 1.442695
      %v2280 = vpow.pop %v2279
      %v2281 = vmul.f32 %v2032, 1.442695
      %v2282 = vpow.pop %v2281
      %v2283 = vmul.f32 %v2033, 1.442695
      %v2284 = vpow.pop %v2283
      %v2285 = vmul.f32 %v2034, 1.442695
      %v2286 = vpow.pop %v2285
      %v2287 = vmul.f32 %v2035, 1.442695
      %v2288 = vpow.pop %v2287
      %v2289 = vmul.f32 %v2036, 1.442695
      %v2290 = vpow.pop %v2289
      %v2291 = vmul.f32 %v2037, 1.442695
      %v2292 = vpow.pop %v2291
      %v2293 = vmul.f32 %v2038, 1.442695
      %v2294 = vpow.pop %v2293
      %v2295 = vmul.f32 %v2039, 1.442695
      %v2296 = vpow.pop %v2295
      %v2297 = vmul.f32 %v2040, 1.442695
      %v2298 = vpow.pop %v2297
      %v2299 = vmul.f32 %v2041, 1.442695
      %v2300 = vpow.pop %v2299
      %v2301 = vmul.f32 %v2042, 1.442695
      %v2302 = vpow.pop %v2301
      %v2303 = vmul.f32 %v2043, 1.442695
      %v2304 = vpow.pop %v2303
      %v2305 = vmul.f32 %v2044, 1.442695
      %v2306 = vpow.pop %v2305
      %v2307 = vmul.f32 %v2045, 1.442695
      %v2308 = vpow.pop %v2307
      %v2309 = vmul.f32 %v2046, 1.442695
      %v2310 = vpow.pop %v2309
      %v2311 = vmul.f32 %v2047, 1.442695
      %v2312 = vpow.pop %v2311
      %v2313 = vmul.f32 %v2048, 1.442695
      %v2314 = vpow.pop %v2313
      %v2315 = vmul.f32 %v2049, 1.442695
      %v2316 = vpow.pop %v2315
      %v2317 = vmul.f32 %v2050, 1.442695
      %v2318 = vpow.pop %v2317
      %v2319 = vmul.f32 %v2051, 1.442695
      %v2320 = vpow.pop %v2319
      %v2321 = vmul.f32 %v2052, 1.442695
      %v2322 = vpow.pop %v2321
      %v2323 = vmul.f32 %v2053, 1.442695
      %v2324 = vpow.pop %v2323
      %v2325 = vmul.f32 %v2054, 1.442695
      %v2326 = vpow.pop %v2325
      %v2327 = vmul.f32 %v2055, 1.442695
      %v2328 = vpow.pop %v2327
      %v2329 = vmul.f32 %v2056, 1.442695
      %v2330 = vpow.pop %v2329
      %v2331 = vmul.f32 %v2057, 1.442695
      %v2332 = vpow.pop %v2331
      %v2333 = vmul.f32 %v2058, 1.442695
      %v2334 = vpow.pop %v2333
      %v2335 = vmul.f32 %v2059, 1.442695
      %v2336 = vpow.pop %v2335
      %v2337 = vmul.f32 %v2060, 1.442695
      %v2338 = vpow.pop %v2337
      %v2339 = vmul.f32 %v2061, 1.442695
      %v2340 = vpow.pop %v2339
      %v2341 = vmul.f32 %v2062, 1.442695
      %v2342 = vpow.pop %v2341
      %v2343 = vmul.f32 %v2063, 1.442695
      %v2344 = vpow.pop %v2343
      %v2345 = vmul.f32 %v2064, 1.442695
      %v2346 = vpow.pop %v2345
      %v2347 = vmul.f32 %v2065, 1.442695
      %v2348 = vpow.pop %v2347
      %v2349 = vmul.f32 %v2066, 1.442695
      %v2350 = vpow.pop %v2349
      %v2351 = vmul.f32 %v2067, 1.442695
      %v2352 = vpow.pop %v2351
      %v2353 = vmul.f32 %v2068, 1.442695
      %v2354 = vpow.pop %v2353
      %v2355 = vmul.f32 %v2069, 1.442695
      %v2356 = vpow.pop %v2355
      %v2357 = vmul.f32 %v2070, 1.442695
      %v2358 = vpow.pop %v2357
      %v2359 = vmul.f32 %v2071, 1.442695
      %v2360 = vpow.pop %v2359
      %v2361 = vmul.f32 %v2072, 1.442695
      %v2362 = vpow.pop %v2361
      %v2363 = vmul.f32 %v2073, 1.442695
      %v2364 = vpow.pop %v2363
      %v2365 = vmul.f32 %v2074, 1.442695
      %v2366 = vpow.pop %v2365
      %v2367 = vmul.f32 %v2075, 1.442695
      %v2368 = vpow.pop %v2367
      %v2369 = vmul.f32 %v2076, 1.442695
      %v2370 = vpow.pop %v2369
      %v2371 = vmul.f32 %v2077, 1.442695
      %v2372 = vpow.pop %v2371
      %v2373 = vmul.f32 %v2078, 1.442695
      %v2374 = vpow.pop %v2373
      %v2375 = vmul.f32 %v2079, 1.442695
      %v2376 = vpow.pop %v2375
      %v2377 = vmul.f32 %v2080, 1.442695
      %v2378 = vpow.pop %v2377
      %v2379 = vmul.f32 %v2081, 1.442695
      %v2380 = vpow.pop %v2379
      %v2381 = vmul.f32 %v2082, 1.442695
      %v2382 = vpow.pop %v2381
      %v2383 = vmul.f32 %v2083, 1.442695
      %v2384 = vpow.pop %v2383
      %v2385 = vmul.f32 %v2084, 1.442695
      %v2386 = vpow.pop %v2385
      %v2387 = vmul.f32 %v2085, 1.442695
      %v2388 = vpow.pop %v2387
      %v2389 = vmul.f32 %v2086, 1.442695
      %v2390 = vpow.pop %v2389
      %v2391 = vmul.f32 %v2087, 1.442695
      %v2392 = vpow.pop %v2391
      %v2393 = vmul.f32 %v2088, 1.442695
      %v2394 = vpow.pop %v2393
      %v2395 = vmul.f32 %v2089, 1.442695
      %v2396 = vpow.pop %v2395
      %v2397 = vmul.f32 %v2090, 1.442695
      %v2398 = vpow.pop %v2397
      %v2399 = vmul.f32 %v2091, 1.442695
      %v2400 = vpow.pop %v2399
      %v2401 = vmul.f32 %v2092, 1.442695
      %v2402 = vpow.pop %v2401
      %v2403 = vmul.f32 %v2093, 1.442695
      %v2404 = vpow.pop %v2403
      %v2405 = vmul.f32 %v2094, 1.442695
      %v2406 = vpow.pop %v2405
      %v2407 = vmul.f32 %v2095, 1.442695
      %v2408 = vpow.pop %v2407
      %v2409 = vmul.f32 %v2096, 1.442695
      %v2410 = vpow.pop %v2409
      %v2411 = vmul.f32 %v2097, 1.442695
      %v2412 = vpow.pop %v2411
      %v2413 = vmul.f32 %v2098, 1.442695
      %v2414 = vpow.pop %v2413
      %v2415 = vmul.f32 %v2099, 1.442695
      %v2416 = vpow.pop %v2415
      %v2417 = vmul.f32 %v2100, 1.442695
      %v2418 = vpow.pop %v2417
      %v2419 = vmul.f32 %v2101, 1.442695
      %v2420 = vpow.pop %v2419
      %v2421 = vmul.f32 %v2102, 1.442695
      %v2422 = vpow.pop %v2421
      %v2423 = vmul.f32 %v2103, 1.442695
      %v2424 = vpow.pop %v2423
      %v2425 = vmul.f32 %v2104, 1.442695
      %v2426 = vpow.pop %v2425
      %v2427 = vmul.f32 %v2105, 1.442695
      %v2428 = vpow.pop %v2427
      %v2429 = vmul.f32 %v2106, 1.442695
      %v2430 = vpow.pop %v2429
      %v2431 = vmul.f32 %v2107, 1.442695
      %v2432 = vpow.pop %v2431
      %v2433 = vmul.f32 %v2108, 1.442695
      %v2434 = vpow.pop %v2433
      %v2435 = vmul.f32 %v2109, 1.442695
      %v2436 = vpow.pop %v2435
      %v2437 = vmul.f32 %v2110, 1.442695
      %v2438 = vpow.pop %v2437
      %v2439 = vmul.f32 %v2111, 1.442695
      %v2440 = vpow.pop %v2439
      %v2441 = vmul.f32 %v2112, 1.442695
      %v2442 = vpow.pop %v2441
      %v2443 = vmul.f32 %v2113, 1.442695
      %v2444 = vpow.pop %v2443
      %v2445 = vmul.f32 %v2114, 1.442695
      %v2446 = vpow.pop %v2445
      %v2447 = vmul.f32 %v2115, 1.442695
      %v2448 = vpow.pop %v2447
      %v2449 = vmul.f32 %v2116, 1.442695
      %v2450 = vpow.pop %v2449
      %v2451 = vmul.f32 %v2117, 1.442695
      %v2452 = vpow.pop %v2451
      %v2453 = vmul.f32 %v2118, 1.442695
      %v2454 = vpow.pop %v2453
      %v2455 = vmul.f32 %v2119, 1.442695
      %v2456 = vpow.pop %v2455
      %v2457 = vmul.f32 %v2120, 1.442695
      %v2458 = vpow.pop %v2457
      %v2459 = vmul.f32 %v2121, 1.442695
      %v2460 = vpow.pop %v2459
      %v2461 = vmul.f32 %v2122, 1.442695
      %v2462 = vpow.pop %v2461
      %v2463 = vmul.f32 %v2123, 1.442695
      %v2464 = vpow.pop %v2463
      %v2465 = vmul.f32 %v2124, 1.442695
      %v2466 = vpow.pop %v2465
      %v2467 = vmul.f32 %v2125, 1.442695
      %v2468 = vpow.pop %v2467
      %v2469 = vmul.f32 %v2126, 1.442695
      %v2470 = vpow.pop %v2469
      %v2471 = vmul.f32 %v2127, 1.442695
      %v2472 = vpow.pop %v2471
      %v2473 = vmul.f32 %v2128, 1.442695
      %v2474 = vpow.pop %v2473
      %v2475 = vmul.f32 %v2129, 1.442695
      %v2476 = vpow.pop %v2475
      %v2477 = vmul.f32 %v2130, 1.442695
      %v2478 = vpow.pop %v2477
      %v2479 = vmul.f32 %v2131, 1.442695
      %v2480 = vpow.pop %v2479
      %v2481 = vmul.f32 %v2132, 1.442695
      %v2482 = vpow.pop %v2481
      %v2483 = vmul.f32 %v2133, 1.442695
      %v2484 = vpow.pop %v2483
      %v2485 = vmul.f32 %v2134, 1.442695
      %v2486 = vpow.pop %v2485
      %v2487 = vmul.f32 %v2135, 1.442695
      %v2488 = vpow.pop %v2487
      %v2489 = vmul.f32 %v2136, 1.442695
      %v2490 = vpow.pop %v2489
      %v2491 = vmul.f32 %v2137, 1.442695
      %v2492 = vpow.pop %v2491
      %v2493 = vmul.f32 %v2138, 1.442695
      %v2494 = vpow.pop %v2493
      %v2495 = vmul.f32 %v2139, 1.442695
      %v2496 = vpow.pop %v2495
      %v2497 = vmul.f32 %v2140, 1.442695
      %v2498 = vpow.pop %v2497
      %v2499 = vmul.f32 %v2141, 1.442695
      %v2500 = vpow.pop %v2499
      %v2501 = vmul.f32 %v2142, 1.442695
      %v2502 = vpow.pop %v2501
      %v2503 = vmul.f32 %v2143, 1.442695
      %v2504 = vpow.pop %v2503
      %v2505 = vmul.f32 %v2144, 1.442695
      %v2506 = vpow.pop %v2505
      %v2507 = vmul.f32 %v2145, 1.442695
      %v2508 = vpow.pop %v2507
      %v2509 = vmul.f32 %v2146, 1.442695
      %v2510 = vpow.pop %v2509
      %v2511 = vmul.f32 %v2147, 1.442695
      %v2512 = vpow.pop %v2511
      %v2513 = vmul.f32 %v2148, 1.442695
      %v2514 = vpow.pop %v2513
      %v2515 = vmul.f32 %v2149, 1.442695
      %v2516 = vpow.pop %v2515
      %v2517 = vmul.f32 %v2150, 1.442695
      %v2518 = vpow.pop %v2517
      %v2519 = vmul.f32 %v2151, 1.442695
      %v2520 = vpow.pop %v2519
      %v2521 = vmul.f32 %v2152, 1.442695
      %v2522 = vpow.pop %v2521
      %v2523 = vmul.f32 %v2153, 1.442695
      %v2524 = vpow.pop %v2523
      %v2525 = vmul.f32 %v2154, 1.442695
      %v2526 = vpow.pop %v2525
      %v2527 = vmul.f32 %v2155, 1.442695
      %v2528 = vpow.pop %v2527
      %v2529 = vmul.f32 %v2156, 1.442695
      %v2530 = vpow.pop %v2529
      %v2531 = vmul.f32 %v2157, 1.442695
      %v2532 = vpow.pop %v2531
      %v2533 = vmul.f32 %v2158, 1.442695
      %v2534 = vpow.pop %v2533
      %v2535 = vmul.f32 %v2159, 1.442695
      %v2536 = vpow.pop %v2535
      %v2537 = vmul.f32 %v2160, 1.442695
      %v2538 = vpow.pop %v2537
      %v2539 = vmul.f32 %v2161, 1.442695
      %v2540 = vpow.pop %v2539
      %v2541 = vmul.f32 %v2162, 1.442695
      %v2542 = vpow.pop %v2541
      %v2543 = vmul.f32 %v2163, 1.442695
      %v2544 = vpow.pop %v2543
      %v2545 = vmul.f32 %v2164, 1.442695
      %v2546 = vpow.pop %v2545
      %v2547 = vmul.f32 %v2165, 1.442695
      %v2548 = vpow.pop %v2547
      %v2549 = vmul.f32 %v2166, 1.442695
      %v2550 = vpow.pop %v2549
      %v2551 = vmul.f32 %v2167, 1.442695
      %v2552 = vpow.pop %v2551
      %v2553 = vmul.f32 %v2168, 1.442695
      %v2554 = vpow.pop %v2553
      %v2555 = vmul.f32 %v2169, 1.442695
      %v2556 = vpow.pop %v2555
      %v2557 = vmul.f32 %v2170, 1.442695
      %v2558 = vpow.pop %v2557
      %v2559 = vmul.f32 %v2171, 1.442695
      %v2560 = vpow.pop %v2559
      %v2561 = vmul.f32 %v2172, 1.442695
      %v2562 = vpow.pop %v2561
      %v2563 = vmul.f32 %v2173, 1.442695
      %v2564 = vpow.pop %v2563
      %v2565 = vmul.f32 %v2174, 1.442695
      %v2566 = vpow.pop %v2565
      %v2567 = vmul.f32 %v2175, 1.442695
      %v2568 = vpow.pop %v2567
      %v2569 = vmul.f32 %v2176, 1.442695
      %v2570 = vpow.pop %v2569
      %v2571 = vmul.f32 %v2177, 1.442695
      %v2572 = vpow.pop %v2571
      %v2573 = vmul.f32 %v2178, 1.442695
      %v2574 = vpow.pop %v2573
      %v2575 = vmul.f32 %v2179, 1.442695
      %v2576 = vpow.pop %v2575
      %v2577 = vmul.f32 %v2180, 1.442695
      %v2578 = vpow.pop %v2577
      %v2579 = vmul.f32 %v2181, 1.442695
      %v2580 = vpow.pop %v2579
      %v2581 = vmul.f32 %v2182, 1.442695
      %v2582 = vpow.pop %v2581
      %v2583 = vmul.f32 %v2183, 1.442695
      %v2584 = vpow.pop %v2583
      %v2585 = vmul.f32 %v2184, 1.442695
      %v2586 = vpow.pop %v2585
      %v2587 = vmul.f32 %v2185, 1.442695
      %v2588 = vpow.pop %v2587
      %v2589 = vmul.f32 %v2186, 1.442695
      %v2590 = vpow.pop %v2589
      %v2591 = vmul.f32 %v2187, 1.442695
      %v2592 = vpow.pop %v2591
      %v2593 = vmul.f32 %v2188, 1.442695
      %v2594 = vpow.pop %v2593
      %v2595 = vmul.f32 %v2189, 1.442695
      %v2596 = vpow.pop %v2595
      %v2597 = vmul.f32 %v2190, 1.442695
      %v2598 = vpow.pop %v2597
      %v2599 = vmul.f32 %v2191, 1.442695
      %v2600 = vpow.pop %v2599
      %v2601 = vmul.f32 %v2192, 1.442695
      %v2602 = vpow.pop %v2601
      %v2603 = vmul.f32 %v2193, 1.442695
      %v2604 = vpow.pop %v2603
      %v2605 = vmul.f32 %v2194, 1.442695
      %v2606 = vpow.pop %v2605
      %v2607 = vmul.f32 %v2195, 1.442695
      %v2608 = vpow.pop %v2607
      %v2609 = vmul.f32 %v2196, 1.442695
      %v2610 = vpow.pop %v2609
      %v2611 = vmul.f32 %v2197, 1.442695
      %v2612 = vpow.pop %v2611
      %v2613 = vmul.f32 %v2198, 1.442695
      %v2614 = vpow.pop %v2613
      %v2615 = vmul.f32 %v2199, 1.442695
      %v2616 = vpow.pop %v2615
      %v2617 = vmul.f32 %v2200, 1.442695
      %v2618 = vpow.pop %v2617
      %v2619 = vmul.f32 %v2201, 1.442695
      %v2620 = vpow.pop %v2619
      %v2621 = vmul.f32 %v2202, 1.442695
      %v2622 = vpow.pop %v2621
      %v2623 = vmul.f32 %v2203, 1.442695
      %v2624 = vpow.pop %v2623
      %v2625 = vmul.f32 %v2204, 1.442695
      %v2626 = vpow.pop %v2625
      %v2627 = vmul.f32 %v2205, 1.442695
      %v2628 = vpow.pop %v2627
      %v2629 = vmul.f32 %v2206, 1.442695
      %v2630 = vpow.pop %v2629
      %v2631 = vmul.f32 %v2207, 1.442695
      %v2632 = vpow.pop %v2631
      %v2633 = vmul.f32 %v2208, 1.442695
      %v2634 = vpow.pop %v2633
      %v2635 = vmul.f32 %v2209, 1.442695
      %v2636 = vpow.pop %v2635
      %v2637 = vmul.f32 %v2210, 1.442695
      %v2638 = vpow.pop %v2637
      %v2639 = vmul.f32 %v2211, 1.442695
      %v2640 = vpow.pop %v2639
      %v2641 = vmul.f32 %v2212, 1.442695
      %v2642 = vpow.pop %v2641
      %v2643 = vmul.f32 %v2213, 1.442695
      %v2644 = vpow.pop %v2643
      %v2645 = vmul.f32 %v2214, 1.442695
      %v2646 = vpow.pop %v2645
      %v2647 = vmul.f32 %v2215, 1.442695
      %v2648 = vpow.pop %v2647
      %v2649 = vmul.f32 %v2216, 1.442695
      %v2650 = vpow.pop %v2649
      %v2651 = vmul.f32 %v2217, 1.442695
      %v2652 = vpow.pop %v2651
      %v2653 = vmul.f32 %v2218, 1.442695
      %v2654 = vpow.pop %v2653
      %v2655 = vmul.f32 %v2219, 1.442695
      %v2656 = vpow.pop %v2655
      %v2657 = vmul.f32 %v2220, 1.442695
      %v2658 = vpow.pop %v2657
      %v2659 = vmul.f32 %v2221, 1.442695
      %v2660 = vpow.pop %v2659
      %v2661 = vmul.f32 %v2222, 1.442695
      %v2662 = vpow.pop %v2661
      %v2663 = vmul.f32 %v2223, 1.442695
      %v2664 = vpow.pop %v2663
      %v2665 = vmul.f32 %v2224, 1.442695
      %v2666 = vpow.pop %v2665
      %v2667 = vmul.f32 %v2225, 1.442695
      %v2668 = vpow.pop %v2667
      %v2669 = vmul.f32 %v2226, 1.442695
      %v2670 = vpow.pop %v2669
      %v2671 = vmul.f32 %v2227, 1.442695
      %v2672 = vpow.pop %v2671
      %v2673 = vmul.f32 %v2228, 1.442695
      %v2674 = vpow.pop %v2673
      %v2675 = vmul.f32 %v2229, 1.442695
      %v2676 = vpow.pop %v2675
      %v2677 = vmul.f32 %v2230, 1.442695
      %v2678 = vpow.pop %v2677
      %v2679 = vadd.f32 %v2232, 1.0
      %v2680 = vadd.f32 %v2234, 1.0
      %v2681 = vadd.f32 %v2236, 1.0
      %v2682 = vadd.f32 %v2238, 1.0
      %v2683 = vadd.f32 %v2240, 1.0
      %v2684 = vadd.f32 %v2242, 1.0
      %v2685 = vadd.f32 %v2244, 1.0
      %v2686 = vadd.f32 %v2246, 1.0
      %v2687 = vadd.f32 %v2248, 1.0
      %v2688 = vadd.f32 %v2250, 1.0
      %v2689 = vadd.f32 %v2252, 1.0
      %v2690 = vadd.f32 %v2254, 1.0
      %v2691 = vadd.f32 %v2256, 1.0
      %v2692 = vadd.f32 %v2258, 1.0
      %v2693 = vadd.f32 %v2260, 1.0
      %v2694 = vadd.f32 %v2262, 1.0
      %v2695 = vadd.f32 %v2264, 1.0
      %v2696 = vadd.f32 %v2266, 1.0
      %v2697 = vadd.f32 %v2268, 1.0
      %v2698 = vadd.f32 %v2270, 1.0
      %v2699 = vadd.f32 %v2272, 1.0
      %v2700 = vadd.f32 %v2274, 1.0
      %v2701 = vadd.f32 %v2276, 1.0
      %v2702 = vadd.f32 %v2278, 1.0
      %v2703 = vadd.f32 %v2280, 1.0
      %v2704 = vadd.f32 %v2282, 1.0
      %v2705 = vadd.f32 %v2284, 1.0
      %v2706 = vadd.f32 %v2286, 1.0
      %v2707 = vadd.f32 %v2288, 1.0
      %v2708 = vadd.f32 %v2290, 1.0
      %v2709 = vadd.f32 %v2292, 1.0
      %v2710 = vadd.f32 %v2294, 1.0
      %v2711 = vadd.f32 %v2296, 1.0
      %v2712 = vadd.f32 %v2298, 1.0
      %v2713 = vadd.f32 %v2300, 1.0
      %v2714 = vadd.f32 %v2302, 1.0
      %v2715 = vadd.f32 %v2304, 1.0
      %v2716 = vadd.f32 %v2306, 1.0
      %v2717 = vadd.f32 %v2308, 1.0
      %v2718 = vadd.f32 %v2310, 1.0
      %v2719 = vadd.f32 %v2312, 1.0
      %v2720 = vadd.f32 %v2314, 1.0
      %v2721 = vadd.f32 %v2316, 1.0
      %v2722 = vadd.f32 %v2318, 1.0
      %v2723 = vadd.f32 %v2320, 1.0
      %v2724 = vadd.f32 %v2322, 1.0
      %v2725 = vadd.f32 %v2324, 1.0
      %v2726 = vadd.f32 %v2326, 1.0
      %v2727 = vadd.f32 %v2328, 1.0
      %v2728 = vadd.f32 %v2330, 1.0
      %v2729 = vadd.f32 %v2332, 1.0
      %v2730 = vadd.f32 %v2334, 1.0
      %v2731 = vadd.f32 %v2336, 1.0
      %v2732 = vadd.f32 %v2338, 1.0
      %v2733 = vadd.f32 %v2340, 1.0
      %v2734 = vadd.f32 %v2342, 1.0
      %v2735 = vadd.f32 %v2344, 1.0
      %v2736 = vadd.f32 %v2346, 1.0
      %v2737 = vadd.f32 %v2348, 1.0
      %v2738 = vadd.f32 %v2350, 1.0
      %v2739 = vadd.f32 %v2352, 1.0
      %v2740 = vadd.f32 %v2354, 1.0
      %v2741 = vadd.f32 %v2356, 1.0
      %v2742 = vadd.f32 %v2358, 1.0
      %v2743 = vadd.f32 %v2360, 1.0
      %v2744 = vadd.f32 %v2362, 1.0
      %v2745 = vadd.f32 %v2364, 1.0
      %v2746 = vadd.f32 %v2366, 1.0
      %v2747 = vadd.f32 %v2368, 1.0
      %v2748 = vadd.f32 %v2370, 1.0
      %v2749 = vadd.f32 %v2372, 1.0
      %v2750 = vadd.f32 %v2374, 1.0
      %v2751 = vadd.f32 %v2376, 1.0
      %v2752 = vadd.f32 %v2378, 1.0
      %v2753 = vadd.f32 %v2380, 1.0
      %v2754 = vadd.f32 %v2382, 1.0
      %v2755 = vadd.f32 %v2384, 1.0
      %v2756 = vadd.f32 %v2386, 1.0
      %v2757 = vadd.f32 %v2388, 1.0
      %v2758 = vadd.f32 %v2390, 1.0
      %v2759 = vadd.f32 %v2392, 1.0
      %v2760 = vadd.f32 %v2394, 1.0
      %v2761 = vadd.f32 %v2396, 1.0
      %v2762 = vadd.f32 %v2398, 1.0
      %v2763 = vadd.f32 %v2400, 1.0
      %v2764 = vadd.f32 %v2402, 1.0
      %v2765 = vadd.f32 %v2404, 1.0
      %v2766 = vadd.f32 %v2406, 1.0
      %v2767 = vadd.f32 %v2408, 1.0
      %v2768 = vadd.f32 %v2410, 1.0
      %v2769 = vadd.f32 %v2412, 1.0
      %v2770 = vadd.f32 %v2414, 1.0
      %v2771 = vadd.f32 %v2416, 1.0
      %v2772 = vadd.f32 %v2418, 1.0
      %v2773 = vadd.f32 %v2420, 1.0
      %v2774 = vadd.f32 %v2422, 1.0
      %v2775 = vadd.f32 %v2424, 1.0
      %v2776 = vadd.f32 %v2426, 1.0
      %v2777 = vadd.f32 %v2428, 1.0
      %v2778 = vadd.f32 %v2430, 1.0
      %v2779 = vadd.f32 %v2432, 1.0
      %v2780 = vadd.f32 %v2434, 1.0
      %v2781 = vadd.f32 %v2436, 1.0
      %v2782 = vadd.f32 %v2438, 1.0
      %v2783 = vadd.f32 %v2440, 1.0
      %v2784 = vadd.f32 %v2442, 1.0
      %v2785 = vadd.f32 %v2444, 1.0
      %v2786 = vadd.f32 %v2446, 1.0
      %v2787 = vadd.f32 %v2448, 1.0
      %v2788 = vadd.f32 %v2450, 1.0
      %v2789 = vadd.f32 %v2452, 1.0
      %v2790 = vadd.f32 %v2454, 1.0
      %v2791 = vadd.f32 %v2456, 1.0
      %v2792 = vadd.f32 %v2458, 1.0
      %v2793 = vadd.f32 %v2460, 1.0
      %v2794 = vadd.f32 %v2462, 1.0
      %v2795 = vadd.f32 %v2464, 1.0
      %v2796 = vadd.f32 %v2466, 1.0
      %v2797 = vadd.f32 %v2468, 1.0
      %v2798 = vadd.f32 %v2470, 1.0
      %v2799 = vadd.f32 %v2472, 1.0
      %v2800 = vadd.f32 %v2474, 1.0
      %v2801 = vadd.f32 %v2476, 1.0
      %v2802 = vadd.f32 %v2478, 1.0
      %v2803 = vadd.f32 %v2480, 1.0
      %v2804 = vadd.f32 %v2482, 1.0
      %v2805 = vadd.f32 %v2484, 1.0
      %v2806 = vadd.f32 %v2486, 1.0
      %v2807 = vadd.f32 %v2488, 1.0
      %v2808 = vadd.f32 %v2490, 1.0
      %v2809 = vadd.f32 %v2492, 1.0
      %v2810 = vadd.f32 %v2494, 1.0
      %v2811 = vadd.f32 %v2496, 1.0
      %v2812 = vadd.f32 %v2498, 1.0
      %v2813 = vadd.f32 %v2500, 1.0
      %v2814 = vadd.f32 %v2502, 1.0
      %v2815 = vadd.f32 %v2504, 1.0
      %v2816 = vadd.f32 %v2506, 1.0
      %v2817 = vadd.f32 %v2508, 1.0
      %v2818 = vadd.f32 %v2510, 1.0
      %v2819 = vadd.f32 %v2512, 1.0
      %v2820 = vadd.f32 %v2514, 1.0
      %v2821 = vadd.f32 %v2516, 1.0
      %v2822 = vadd.f32 %v2518, 1.0
      %v2823 = vadd.f32 %v2520, 1.0
      %v2824 = vadd.f32 %v2522, 1.0
      %v2825 = vadd.f32 %v2524, 1.0
      %v2826 = vadd.f32 %v2526, 1.0
      %v2827 = vadd.f32 %v2528, 1.0
      %v2828 = vadd.f32 %v2530, 1.0
      %v2829 = vadd.f32 %v2532, 1.0
      %v2830 = vadd.f32 %v2534, 1.0
      %v2831 = vadd.f32 %v2536, 1.0
      %v2832 = vadd.f32 %v2538, 1.0
      %v2833 = vadd.f32 %v2540, 1.0
      %v2834 = vadd.f32 %v2542, 1.0
      %v2835 = vadd.f32 %v2544, 1.0
      %v2836 = vadd.f32 %v2546, 1.0
      %v2837 = vadd.f32 %v2548, 1.0
      %v2838 = vadd.f32 %v2550, 1.0
      %v2839 = vadd.f32 %v2552, 1.0
      %v2840 = vadd.f32 %v2554, 1.0
      %v2841 = vadd.f32 %v2556, 1.0
      %v2842 = vadd.f32 %v2558, 1.0
      %v2843 = vadd.f32 %v2560, 1.0
      %v2844 = vadd.f32 %v2562, 1.0
      %v2845 = vadd.f32 %v2564, 1.0
      %v2846 = vadd.f32 %v2566, 1.0
      %v2847 = vadd.f32 %v2568, 1.0
      %v2848 = vadd.f32 %v2570, 1.0
      %v2849 = vadd.f32 %v2572, 1.0
      %v2850 = vadd.f32 %v2574, 1.0
      %v2851 = vadd.f32 %v2576, 1.0
      %v2852 = vadd.f32 %v2578, 1.0
      %v2853 = vadd.f32 %v2580, 1.0
      %v2854 = vadd.f32 %v2582, 1.0
      %v2855 = vadd.f32 %v2584, 1.0
      %v2856 = vadd.f32 %v2586, 1.0
      %v2857 = vadd.f32 %v2588, 1.0
      %v2858 = vadd.f32 %v2590, 1.0
      %v2859 = vadd.f32 %v2592, 1.0
      %v2860 = vadd.f32 %v2594, 1.0
      %v2861 = vadd.f32 %v2596, 1.0
      %v2862 = vadd.f32 %v2598, 1.0
      %v2863 = vadd.f32 %v2600, 1.0
      %v2864 = vadd.f32 %v2602, 1.0
      %v2865 = vadd.f32 %v2604, 1.0
      %v2866 = vadd.f32 %v2606, 1.0
      %v2867 = vadd.f32 %v2608, 1.0
      %v2868 = vadd.f32 %v2610, 1.0
      %v2869 = vadd.f32 %v2612, 1.0
      %v2870 = vadd.f32 %v2614, 1.0
      %v2871 = vadd.f32 %v2616, 1.0
      %v2872 = vadd.f32 %v2618, 1.0
      %v2873 = vadd.f32 %v2620, 1.0
      %v2874 = vadd.f32 %v2622, 1.0
      %v2875 = vadd.f32 %v2624, 1.0
      %v2876 = vadd.f32 %v2626, 1.0
      %v2877 = vadd.f32 %v2628, 1.0
      %v2878 = vadd.f32 %v2630, 1.0
      %v2879 = vadd.f32 %v2632, 1.0
      %v2880 = vadd.f32 %v2634, 1.0
      %v2881 = vadd.f32 %v2636, 1.0
      %v2882 = vadd.f32 %v2638, 1.0
      %v2883 = vadd.f32 %v2640, 1.0
      %v2884 = vadd.f32 %v2642, 1.0
      %v2885 = vadd.f32 %v2644, 1.0
      %v2886 = vadd.f32 %v2646, 1.0
      %v2887 = vadd.f32 %v2648, 1.0
      %v2888 = vadd.f32 %v2650, 1.0
      %v2889 = vadd.f32 %v2652, 1.0
      %v2890 = vadd.f32 %v2654, 1.0
      %v2891 = vadd.f32 %v2656, 1.0
      %v2892 = vadd.f32 %v2658, 1.0
      %v2893 = vadd.f32 %v2660, 1.0
      %v2894 = vadd.f32 %v2662, 1.0
      %v2895 = vadd.f32 %v2664, 1.0
      %v2896 = vadd.f32 %v2666, 1.0
      %v2897 = vadd.f32 %v2668, 1.0
      %v2898 = vadd.f32 %v2670, 1.0
      %v2899 = vadd.f32 %v2672, 1.0
      %v2900 = vadd.f32 %v2674, 1.0
      %v2901 = vadd.f32 %v2676, 1.0
      %v2902 = vadd.f32 %v2678, 1.0
      %v2903 = vrcp.pop %v2679
      %v2904 = vmul.f32 %v2679, %v2903
      %v2905 = vsub.f32 1.0, %v2904
      %v2906 = vmul.f32 %v2903, %v2905
      %v2907 = vadd.f32 %v2903, %v2906
      %vm2908 = vweird.f32 %v2679
      %vm2909 = vweird.f32 %v2903
      %vm2910 = vmor %vm2908, %vm2909
      %v2911 = vsel %vm2910, %v2903, %v2907
      %v2912 = vand.u32 2147483647, %v2679
      %vm2913 = vcmp.eq.f32.partialorder %v2912, 8.507059e+37
      %v2914 = vand.u32 %v2679, 2147483648
      %v2915 = vor.u32 1.1754944e-38, %v2914
      %v2916 = vsel %vm2913, %v2915, %v2911
      %v2917 = vmul.f32 1.0, %v2916
      %v2918 = vrcp.pop %v2680
      %v2919 = vmul.f32 %v2680, %v2918
      %v2920 = vsub.f32 1.0, %v2919
      %v2921 = vmul.f32 %v2918, %v2920
      %v2922 = vadd.f32 %v2918, %v2921
      %vm2923 = vweird.f32 %v2680
      %vm2924 = vweird.f32 %v2918
      %vm2925 = vmor %vm2923, %vm2924
      %v2926 = vsel %vm2925, %v2918, %v2922
      %v2927 = vand.u32 2147483647, %v2680
      %vm2928 = vcmp.eq.f32.partialorder %v2927, 8.507059e+37
      %v2929 = vand.u32 %v2680, 2147483648
      %v2930 = vor.u32 1.1754944e-38, %v2929
      %v2931 = vsel %vm2928, %v2930, %v2926
      %v2932 = vmul.f32 1.0, %v2931
      %v2933 = vrcp.pop %v2681
      %v2934 = vmul.f32 %v2681, %v2933
      %v2935 = vsub.f32 1.0, %v2934
      %v2936 = vmul.f32 %v2933, %v2935
      %v2937 = vadd.f32 %v2933, %v2936
      %vm2938 = vweird.f32 %v2681
      %vm2939 = vweird.f32 %v2933
      %vm2940 = vmor %vm2938, %vm2939
      %v2941 = vsel %vm2940, %v2933, %v2937
      %v2942 = vand.u32 2147483647, %v2681
      %vm2943 = vcmp.eq.f32.partialorder %v2942, 8.507059e+37
      %v2944 = vand.u32 %v2681, 2147483648
      %v2945 = vor.u32 1.1754944e-38, %v2944
      %v2946 = vsel %vm2943, %v2945, %v2941
      %v2947 = vmul.f32 1.0, %v2946
      %v2948 = vrcp.pop %v2682
      %v2949 = vmul.f32 %v2682, %v2948
      %v2950 = vsub.f32 1.0, %v2949
      %v2951 = vmul.f32 %v2948, %v2950
      %v2952 = vadd.f32 %v2948, %v2951
      %vm2953 = vweird.f32 %v2682
      %vm2954 = vweird.f32 %v2948
      %vm2955 = vmor %vm2953, %vm2954
      %v2956 = vsel %vm2955, %v2948, %v2952
      %v2957 = vand.u32 2147483647, %v2682
      %vm2958 = vcmp.eq.f32.partialorder %v2957, 8.507059e+37
      %v2959 = vand.u32 %v2682, 2147483648
      %v2960 = vor.u32 1.1754944e-38, %v2959
      %v2961 = vsel %vm2958, %v2960, %v2956
      %v2962 = vmul.f32 1.0, %v2961
      %v2963 = vrcp.pop %v2683
      %v2964 = vmul.f32 %v2683, %v2963
      %v2965 = vsub.f32 1.0, %v2964
      %v2966 = vmul.f32 %v2963, %v2965
      %v2967 = vadd.f32 %v2963, %v2966
      %vm2968 = vweird.f32 %v2683
      %vm2969 = vweird.f32 %v2963
      %vm2970 = vmor %vm2968, %vm2969
      %v2971 = vsel %vm2970, %v2963, %v2967
      %v2972 = vand.u32 2147483647, %v2683
      %vm2973 = vcmp.eq.f32.partialorder %v2972, 8.507059e+37
      %v2974 = vand.u32 %v2683, 2147483648
      %v2975 = vor.u32 1.1754944e-38, %v2974
      %v2976 = vsel %vm2973, %v2975, %v2971
      %v2977 = vmul.f32 1.0, %v2976
      %v2978 = vrcp.pop %v2684
      %v2979 = vmul.f32 %v2684, %v2978
      %v2980 = vsub.f32 1.0, %v2979
      %v2981 = vmul.f32 %v2978, %v2980
      %v2982 = vadd.f32 %v2978, %v2981
      %vm2983 = vweird.f32 %v2684
      %vm2984 = vweird.f32 %v2978
      %vm2985 = vmor %vm2983, %vm2984
      %v2986 = vsel %vm2985, %v2978, %v2982
      %v2987 = vand.u32 2147483647, %v2684
      %vm2988 = vcmp.eq.f32.partialorder %v2987, 8.507059e+37
      %v2989 = vand.u32 %v2684, 2147483648
      %v2990 = vor.u32 1.1754944e-38, %v2989
      %v2991 = vsel %vm2988, %v2990, %v2986
      %v2992 = vmul.f32 1.0, %v2991
      %v2993 = vrcp.pop %v2685
      %v2994 = vmul.f32 %v2685, %v2993
      %v2995 = vsub.f32 1.0, %v2994
      %v2996 = vmul.f32 %v2993, %v2995
      %v2997 = vadd.f32 %v2993, %v2996
      %vm2998 = vweird.f32 %v2685
      %vm2999 = vweird.f32 %v2993
      %vm3000 = vmor %vm2998, %vm2999
      %v3001 = vsel %vm3000, %v2993, %v2997
      %v3002 = vand.u32 2147483647, %v2685
      %vm3003 = vcmp.eq.f32.partialorder %v3002, 8.507059e+37
      %v3004 = vand.u32 %v2685, 2147483648
      %v3005 = vor.u32 1.1754944e-38, %v3004
      %v3006 = vsel %vm3003, %v3005, %v3001
      %v3007 = vmul.f32 1.0, %v3006
      %v3008 = vrcp.pop %v2686
      %v3009 = vmul.f32 %v2686, %v3008
      %v3010 = vsub.f32 1.0, %v3009
      %v3011 = vmul.f32 %v3008, %v3010
      %v3012 = vadd.f32 %v3008, %v3011
      %vm3013 = vweird.f32 %v2686
      %vm3014 = vweird.f32 %v3008
      %vm3015 = vmor %vm3013, %vm3014
      %v3016 = vsel %vm3015, %v3008, %v3012
      %v3017 = vand.u32 2147483647, %v2686
      %vm3018 = vcmp.eq.f32.partialorder %v3017, 8.507059e+37
      %v3019 = vand.u32 %v2686, 2147483648
      %v3020 = vor.u32 1.1754944e-38, %v3019
      %v3021 = vsel %vm3018, %v3020, %v3016
      %v3022 = vmul.f32 1.0, %v3021
      %v3023 = vrcp.pop %v2687
      %v3024 = vmul.f32 %v2687, %v3023
      %v3025 = vsub.f32 1.0, %v3024
      %v3026 = vmul.f32 %v3023, %v3025
      %v3027 = vadd.f32 %v3023, %v3026
      %vm3028 = vweird.f32 %v2687
      %vm3029 = vweird.f32 %v3023
      %vm3030 = vmor %vm3028, %vm3029
      %v3031 = vsel %vm3030, %v3023, %v3027
      %v3032 = vand.u32 2147483647, %v2687
      %vm3033 = vcmp.eq.f32.partialorder %v3032, 8.507059e+37
      %v3034 = vand.u32 %v2687, 2147483648
      %v3035 = vor.u32 1.1754944e-38, %v3034
      %v3036 = vsel %vm3033, %v3035, %v3031
      %v3037 = vmul.f32 1.0, %v3036
      %v3038 = vrcp.pop %v2688
      %v3039 = vmul.f32 %v2688, %v3038
      %v3040 = vsub.f32 1.0, %v3039
      %v3041 = vmul.f32 %v3038, %v3040
      %v3042 = vadd.f32 %v3038, %v3041
      %vm3043 = vweird.f32 %v2688
      %vm3044 = vweird.f32 %v3038
      %vm3045 = vmor %vm3043, %vm3044
      %v3046 = vsel %vm3045, %v3038, %v3042
      %v3047 = vand.u32 2147483647, %v2688
      %vm3048 = vcmp.eq.f32.partialorder %v3047, 8.507059e+37
      %v3049 = vand.u32 %v2688, 2147483648
      %v3050 = vor.u32 1.1754944e-38, %v3049
      %v3051 = vsel %vm3048, %v3050, %v3046
      %v3052 = vmul.f32 1.0, %v3051
      %v3053 = vrcp.pop %v2689
      %v3054 = vmul.f32 %v2689, %v3053
      %v3055 = vsub.f32 1.0, %v3054
      %v3056 = vmul.f32 %v3053, %v3055
      %v3057 = vadd.f32 %v3053, %v3056
      %vm3058 = vweird.f32 %v2689
      %vm3059 = vweird.f32 %v3053
      %vm3060 = vmor %vm3058, %vm3059
      %v3061 = vsel %vm3060, %v3053, %v3057
      %v3062 = vand.u32 2147483647, %v2689
      %vm3063 = vcmp.eq.f32.partialorder %v3062, 8.507059e+37
      %v3064 = vand.u32 %v2689, 2147483648
      %v3065 = vor.u32 1.1754944e-38, %v3064
      %v3066 = vsel %vm3063, %v3065, %v3061
      %v3067 = vmul.f32 1.0, %v3066
      %v3068 = vrcp.pop %v2690
      %v3069 = vmul.f32 %v2690, %v3068
      %v3070 = vsub.f32 1.0, %v3069
      %v3071 = vmul.f32 %v3068, %v3070
      %v3072 = vadd.f32 %v3068, %v3071
      %vm3073 = vweird.f32 %v2690
      %vm3074 = vweird.f32 %v3068
      %vm3075 = vmor %vm3073, %vm3074
      %v3076 = vsel %vm3075, %v3068, %v3072
      %v3077 = vand.u32 2147483647, %v2690
      %vm3078 = vcmp.eq.f32.partialorder %v3077, 8.507059e+37
      %v3079 = vand.u32 %v2690, 2147483648
      %v3080 = vor.u32 1.1754944e-38, %v3079
      %v3081 = vsel %vm3078, %v3080, %v3076
      %v3082 = vmul.f32 1.0, %v3081
      %v3083 = vrcp.pop %v2691
      %v3084 = vmul.f32 %v2691, %v3083
      %v3085 = vsub.f32 1.0, %v3084
      %v3086 = vmul.f32 %v3083, %v3085
      %v3087 = vadd.f32 %v3083, %v3086
      %vm3088 = vweird.f32 %v2691
      %vm3089 = vweird.f32 %v3083
      %vm3090 = vmor %vm3088, %vm3089
      %v3091 = vsel %vm3090, %v3083, %v3087
      %v3092 = vand.u32 2147483647, %v2691
      %vm3093 = vcmp.eq.f32.partialorder %v3092, 8.507059e+37
      %v3094 = vand.u32 %v2691, 2147483648
      %v3095 = vor.u32 1.1754944e-38, %v3094
      %v3096 = vsel %vm3093, %v3095, %v3091
      %v3097 = vmul.f32 1.0, %v3096
      %v3098 = vrcp.pop %v2692
      %v3099 = vmul.f32 %v2692, %v3098
      %v3100 = vsub.f32 1.0, %v3099
      %v3101 = vmul.f32 %v3098, %v3100
      %v3102 = vadd.f32 %v3098, %v3101
      %vm3103 = vweird.f32 %v2692
      %vm3104 = vweird.f32 %v3098
      %vm3105 = vmor %vm3103, %vm3104
      %v3106 = vsel %vm3105, %v3098, %v3102
      %v3107 = vand.u32 2147483647, %v2692
      %vm3108 = vcmp.eq.f32.partialorder %v3107, 8.507059e+37
      %v3109 = vand.u32 %v2692, 2147483648
      %v3110 = vor.u32 1.1754944e-38, %v3109
      %v3111 = vsel %vm3108, %v3110, %v3106
      %v3112 = vmul.f32 1.0, %v3111
      %v3113 = vrcp.pop %v2693
      %v3114 = vmul.f32 %v2693, %v3113
      %v3115 = vsub.f32 1.0, %v3114
      %v3116 = vmul.f32 %v3113, %v3115
      %v3117 = vadd.f32 %v3113, %v3116
      %vm3118 = vweird.f32 %v2693
      %vm3119 = vweird.f32 %v3113
      %vm3120 = vmor %vm3118, %vm3119
      %v3121 = vsel %vm3120, %v3113, %v3117
      %v3122 = vand.u32 2147483647, %v2693
      %vm3123 = vcmp.eq.f32.partialorder %v3122, 8.507059e+37
      %v3124 = vand.u32 %v2693, 2147483648
      %v3125 = vor.u32 1.1754944e-38, %v3124
      %v3126 = vsel %vm3123, %v3125, %v3121
      %v3127 = vmul.f32 1.0, %v3126
      %v3128 = vrcp.pop %v2694
      %v3129 = vmul.f32 %v2694, %v3128
      %v3130 = vsub.f32 1.0, %v3129
      %v3131 = vmul.f32 %v3128, %v3130
      %v3132 = vadd.f32 %v3128, %v3131
      %vm3133 = vweird.f32 %v2694
      %vm3134 = vweird.f32 %v3128
      %vm3135 = vmor %vm3133, %vm3134
      %v3136 = vsel %vm3135, %v3128, %v3132
      %v3137 = vand.u32 2147483647, %v2694
      %vm3138 = vcmp.eq.f32.partialorder %v3137, 8.507059e+37
      %v3139 = vand.u32 %v2694, 2147483648
      %v3140 = vor.u32 1.1754944e-38, %v3139
      %v3141 = vsel %vm3138, %v3140, %v3136
      %v3142 = vmul.f32 1.0, %v3141
      %v3143 = vrcp.pop %v2695
      %v3144 = vmul.f32 %v2695, %v3143
      %v3145 = vsub.f32 1.0, %v3144
      %v3146 = vmul.f32 %v3143, %v3145
      %v3147 = vadd.f32 %v3143, %v3146
      %vm3148 = vweird.f32 %v2695
      %vm3149 = vweird.f32 %v3143
      %vm3150 = vmor %vm3148, %vm3149
      %v3151 = vsel %vm3150, %v3143, %v3147
      %v3152 = vand.u32 2147483647, %v2695
      %vm3153 = vcmp.eq.f32.partialorder %v3152, 8.507059e+37
      %v3154 = vand.u32 %v2695, 2147483648
      %v3155 = vor.u32 1.1754944e-38, %v3154
      %v3156 = vsel %vm3153, %v3155, %v3151
      %v3157 = vmul.f32 1.0, %v3156
      %v3158 = vrcp.pop %v2696
      %v3159 = vmul.f32 %v2696, %v3158
      %v3160 = vsub.f32 1.0, %v3159
      %v3161 = vmul.f32 %v3158, %v3160
      %v3162 = vadd.f32 %v3158, %v3161
      %vm3163 = vweird.f32 %v2696
      %vm3164 = vweird.f32 %v3158
      %vm3165 = vmor %vm3163, %vm3164
      %v3166 = vsel %vm3165, %v3158, %v3162
      %v3167 = vand.u32 2147483647, %v2696
      %vm3168 = vcmp.eq.f32.partialorder %v3167, 8.507059e+37
      %v3169 = vand.u32 %v2696, 2147483648
      %v3170 = vor.u32 1.1754944e-38, %v3169
      %v3171 = vsel %vm3168, %v3170, %v3166
      %v3172 = vmul.f32 1.0, %v3171
      %v3173 = vrcp.pop %v2697
      %v3174 = vmul.f32 %v2697, %v3173
      %v3175 = vsub.f32 1.0, %v3174
      %v3176 = vmul.f32 %v3173, %v3175
      %v3177 = vadd.f32 %v3173, %v3176
      %vm3178 = vweird.f32 %v2697
      %vm3179 = vweird.f32 %v3173
      %vm3180 = vmor %vm3178, %vm3179
      %v3181 = vsel %vm3180, %v3173, %v3177
      %v3182 = vand.u32 2147483647, %v2697
      %vm3183 = vcmp.eq.f32.partialorder %v3182, 8.507059e+37
      %v3184 = vand.u32 %v2697, 2147483648
      %v3185 = vor.u32 1.1754944e-38, %v3184
      %v3186 = vsel %vm3183, %v3185, %v3181
      %v3187 = vmul.f32 1.0, %v3186
      %v3188 = vrcp.pop %v2698
      %v3189 = vmul.f32 %v2698, %v3188
      %v3190 = vsub.f32 1.0, %v3189
      %v3191 = vmul.f32 %v3188, %v3190
      %v3192 = vadd.f32 %v3188, %v3191
      %vm3193 = vweird.f32 %v2698
      %vm3194 = vweird.f32 %v3188
      %vm3195 = vmor %vm3193, %vm3194
      %v3196 = vsel %vm3195, %v3188, %v3192
      %v3197 = vand.u32 2147483647, %v2698
      %vm3198 = vcmp.eq.f32.partialorder %v3197, 8.507059e+37
      %v3199 = vand.u32 %v2698, 2147483648
      %v3200 = vor.u32 1.1754944e-38, %v3199
      %v3201 = vsel %vm3198, %v3200, %v3196
      %v3202 = vmul.f32 1.0, %v3201
      %v3203 = vrcp.pop %v2699
      %v3204 = vmul.f32 %v2699, %v3203
      %v3205 = vsub.f32 1.0, %v3204
      %v3206 = vmul.f32 %v3203, %v3205
      %v3207 = vadd.f32 %v3203, %v3206
      %vm3208 = vweird.f32 %v2699
      %vm3209 = vweird.f32 %v3203
      %vm3210 = vmor %vm3208, %vm3209
      %v3211 = vsel %vm3210, %v3203, %v3207
      %v3212 = vand.u32 2147483647, %v2699
      %vm3213 = vcmp.eq.f32.partialorder %v3212, 8.507059e+37
      %v3214 = vand.u32 %v2699, 2147483648
      %v3215 = vor.u32 1.1754944e-38, %v3214
      %v3216 = vsel %vm3213, %v3215, %v3211
      %v3217 = vmul.f32 1.0, %v3216
      %v3218 = vrcp.pop %v2700
      %v3219 = vmul.f32 %v2700, %v3218
      %v3220 = vsub.f32 1.0, %v3219
      %v3221 = vmul.f32 %v3218, %v3220
      %v3222 = vadd.f32 %v3218, %v3221
      %vm3223 = vweird.f32 %v2700
      %vm3224 = vweird.f32 %v3218
      %vm3225 = vmor %vm3223, %vm3224
      %v3226 = vsel %vm3225, %v3218, %v3222
      %v3227 = vand.u32 2147483647, %v2700
      %vm3228 = vcmp.eq.f32.partialorder %v3227, 8.507059e+37
      %v3229 = vand.u32 %v2700, 2147483648
      %v3230 = vor.u32 1.1754944e-38, %v3229
      %v3231 = vsel %vm3228, %v3230, %v3226
      %v3232 = vmul.f32 1.0, %v3231
      %v3233 = vrcp.pop %v2701
      %v3234 = vmul.f32 %v2701, %v3233
      %v3235 = vsub.f32 1.0, %v3234
      %v3236 = vmul.f32 %v3233, %v3235
      %v3237 = vadd.f32 %v3233, %v3236
      %vm3238 = vweird.f32 %v2701
      %vm3239 = vweird.f32 %v3233
      %vm3240 = vmor %vm3238, %vm3239
      %v3241 = vsel %vm3240, %v3233, %v3237
      %v3242 = vand.u32 2147483647, %v2701
      %vm3243 = vcmp.eq.f32.partialorder %v3242, 8.507059e+37
      %v3244 = vand.u32 %v2701, 2147483648
      %v3245 = vor.u32 1.1754944e-38, %v3244
      %v3246 = vsel %vm3243, %v3245, %v3241
      %v3247 = vmul.f32 1.0, %v3246
      %v3248 = vrcp.pop %v2702
      %v3249 = vmul.f32 %v2702, %v3248
      %v3250 = vsub.f32 1.0, %v3249
      %v3251 = vmul.f32 %v3248, %v3250
      %v3252 = vadd.f32 %v3248, %v3251
      %vm3253 = vweird.f32 %v2702
      %vm3254 = vweird.f32 %v3248
      %vm3255 = vmor %vm3253, %vm3254
      %v3256 = vsel %vm3255, %v3248, %v3252
      %v3257 = vand.u32 2147483647, %v2702
      %vm3258 = vcmp.eq.f32.partialorder %v3257, 8.507059e+37
      %v3259 = vand.u32 %v2702, 2147483648
      %v3260 = vor.u32 1.1754944e-38, %v3259
      %v3261 = vsel %vm3258, %v3260, %v3256
      %v3262 = vmul.f32 1.0, %v3261
      %v3263 = vrcp.pop %v2703
      %v3264 = vmul.f32 %v2703, %v3263
      %v3265 = vsub.f32 1.0, %v3264
      %v3266 = vmul.f32 %v3263, %v3265
      %v3267 = vadd.f32 %v3263, %v3266
      %vm3268 = vweird.f32 %v2703
      %vm3269 = vweird.f32 %v3263
      %vm3270 = vmor %vm3268, %vm3269
      %v3271 = vsel %vm3270, %v3263, %v3267
      %v3272 = vand.u32 2147483647, %v2703
      %vm3273 = vcmp.eq.f32.partialorder %v3272, 8.507059e+37
      %v3274 = vand.u32 %v2703, 2147483648
      %v3275 = vor.u32 1.1754944e-38, %v3274
      %v3276 = vsel %vm3273, %v3275, %v3271
      %v3277 = vmul.f32 1.0, %v3276
      %v3278 = vrcp.pop %v2704
      %v3279 = vmul.f32 %v2704, %v3278
      %v3280 = vsub.f32 1.0, %v3279
      %v3281 = vmul.f32 %v3278, %v3280
      %v3282 = vadd.f32 %v3278, %v3281
      %vm3283 = vweird.f32 %v2704
      %vm3284 = vweird.f32 %v3278
      %vm3285 = vmor %vm3283, %vm3284
      %v3286 = vsel %vm3285, %v3278, %v3282
      %v3287 = vand.u32 2147483647, %v2704
      %vm3288 = vcmp.eq.f32.partialorder %v3287, 8.507059e+37
      %v3289 = vand.u32 %v2704, 2147483648
      %v3290 = vor.u32 1.1754944e-38, %v3289
      %v3291 = vsel %vm3288, %v3290, %v3286
      %v3292 = vmul.f32 1.0, %v3291
      %v3293 = vrcp.pop %v2705
      %v3294 = vmul.f32 %v2705, %v3293
      %v3295 = vsub.f32 1.0, %v3294
      %v3296 = vmul.f32 %v3293, %v3295
      %v3297 = vadd.f32 %v3293, %v3296
      %vm3298 = vweird.f32 %v2705
      %vm3299 = vweird.f32 %v3293
      %vm3300 = vmor %vm3298, %vm3299
      %v3301 = vsel %vm3300, %v3293, %v3297
      %v3302 = vand.u32 2147483647, %v2705
      %vm3303 = vcmp.eq.f32.partialorder %v3302, 8.507059e+37
      %v3304 = vand.u32 %v2705, 2147483648
      %v3305 = vor.u32 1.1754944e-38, %v3304
      %v3306 = vsel %vm3303, %v3305, %v3301
      %v3307 = vmul.f32 1.0, %v3306
      %v3308 = vrcp.pop %v2706
      %v3309 = vmul.f32 %v2706, %v3308
      %v3310 = vsub.f32 1.0, %v3309
      %v3311 = vmul.f32 %v3308, %v3310
      %v3312 = vadd.f32 %v3308, %v3311
      %vm3313 = vweird.f32 %v2706
      %vm3314 = vweird.f32 %v3308
      %vm3315 = vmor %vm3313, %vm3314
      %v3316 = vsel %vm3315, %v3308, %v3312
      %v3317 = vand.u32 2147483647, %v2706
      %vm3318 = vcmp.eq.f32.partialorder %v3317, 8.507059e+37
      %v3319 = vand.u32 %v2706, 2147483648
      %v3320 = vor.u32 1.1754944e-38, %v3319
      %v3321 = vsel %vm3318, %v3320, %v3316
      %v3322 = vmul.f32 1.0, %v3321
      %v3323 = vrcp.pop %v2707
      %v3324 = vmul.f32 %v2707, %v3323
      %v3325 = vsub.f32 1.0, %v3324
      %v3326 = vmul.f32 %v3323, %v3325
      %v3327 = vadd.f32 %v3323, %v3326
      %vm3328 = vweird.f32 %v2707
      %vm3329 = vweird.f32 %v3323
      %vm3330 = vmor %vm3328, %vm3329
      %v3331 = vsel %vm3330, %v3323, %v3327
      %v3332 = vand.u32 2147483647, %v2707
      %vm3333 = vcmp.eq.f32.partialorder %v3332, 8.507059e+37
      %v3334 = vand.u32 %v2707, 2147483648
      %v3335 = vor.u32 1.1754944e-38, %v3334
      %v3336 = vsel %vm3333, %v3335, %v3331
      %v3337 = vmul.f32 1.0, %v3336
      %v3338 = vrcp.pop %v2708
      %v3339 = vmul.f32 %v2708, %v3338
      %v3340 = vsub.f32 1.0, %v3339
      %v3341 = vmul.f32 %v3338, %v3340
      %v3342 = vadd.f32 %v3338, %v3341
      %vm3343 = vweird.f32 %v2708
      %vm3344 = vweird.f32 %v3338
      %vm3345 = vmor %vm3343, %vm3344
      %v3346 = vsel %vm3345, %v3338, %v3342
      %v3347 = vand.u32 2147483647, %v2708
      %vm3348 = vcmp.eq.f32.partialorder %v3347, 8.507059e+37
      %v3349 = vand.u32 %v2708, 2147483648
      %v3350 = vor.u32 1.1754944e-38, %v3349
      %v3351 = vsel %vm3348, %v3350, %v3346
      %v3352 = vmul.f32 1.0, %v3351
      %v3353 = vrcp.pop %v2709
      %v3354 = vmul.f32 %v2709, %v3353
      %v3355 = vsub.f32 1.0, %v3354
      %v3356 = vmul.f32 %v3353, %v3355
      %v3357 = vadd.f32 %v3353, %v3356
      %vm3358 = vweird.f32 %v2709
      %vm3359 = vweird.f32 %v3353
      %vm3360 = vmor %vm3358, %vm3359
      %v3361 = vsel %vm3360, %v3353, %v3357
      %v3362 = vand.u32 2147483647, %v2709
      %vm3363 = vcmp.eq.f32.partialorder %v3362, 8.507059e+37
      %v3364 = vand.u32 %v2709, 2147483648
      %v3365 = vor.u32 1.1754944e-38, %v3364
      %v3366 = vsel %vm3363, %v3365, %v3361
      %v3367 = vmul.f32 1.0, %v3366
      %v3368 = vrcp.pop %v2710
      %v3369 = vmul.f32 %v2710, %v3368
      %v3370 = vsub.f32 1.0, %v3369
      %v3371 = vmul.f32 %v3368, %v3370
      %v3372 = vadd.f32 %v3368, %v3371
      %vm3373 = vweird.f32 %v2710
      %vm3374 = vweird.f32 %v3368
      %vm3375 = vmor %vm3373, %vm3374
      %v3376 = vsel %vm3375, %v3368, %v3372
      %v3377 = vand.u32 2147483647, %v2710
      %vm3378 = vcmp.eq.f32.partialorder %v3377, 8.507059e+37
      %v3379 = vand.u32 %v2710, 2147483648
      %v3380 = vor.u32 1.1754944e-38, %v3379
      %v3381 = vsel %vm3378, %v3380, %v3376
      %v3382 = vmul.f32 1.0, %v3381
      %v3383 = vrcp.pop %v2711
      %v3384 = vmul.f32 %v2711, %v3383
      %v3385 = vsub.f32 1.0, %v3384
      %v3386 = vmul.f32 %v3383, %v3385
      %v3387 = vadd.f32 %v3383, %v3386
      %vm3388 = vweird.f32 %v2711
      %vm3389 = vweird.f32 %v3383
      %vm3390 = vmor %vm3388, %vm3389
      %v3391 = vsel %vm3390, %v3383, %v3387
      %v3392 = vand.u32 2147483647, %v2711
      %vm3393 = vcmp.eq.f32.partialorder %v3392, 8.507059e+37
      %v3394 = vand.u32 %v2711, 2147483648
      %v3395 = vor.u32 1.1754944e-38, %v3394
      %v3396 = vsel %vm3393, %v3395, %v3391
      %v3397 = vmul.f32 1.0, %v3396
      %v3398 = vrcp.pop %v2712
      %v3399 = vmul.f32 %v2712, %v3398
      %v3400 = vsub.f32 1.0, %v3399
      %v3401 = vmul.f32 %v3398, %v3400
      %v3402 = vadd.f32 %v3398, %v3401
      %vm3403 = vweird.f32 %v2712
      %vm3404 = vweird.f32 %v3398
      %vm3405 = vmor %vm3403, %vm3404
      %v3406 = vsel %vm3405, %v3398, %v3402
      %v3407 = vand.u32 2147483647, %v2712
      %vm3408 = vcmp.eq.f32.partialorder %v3407, 8.507059e+37
      %v3409 = vand.u32 %v2712, 2147483648
      %v3410 = vor.u32 1.1754944e-38, %v3409
      %v3411 = vsel %vm3408, %v3410, %v3406
      %v3412 = vmul.f32 1.0, %v3411
      %v3413 = vrcp.pop %v2713
      %v3414 = vmul.f32 %v2713, %v3413
      %v3415 = vsub.f32 1.0, %v3414
      %v3416 = vmul.f32 %v3413, %v3415
      %v3417 = vadd.f32 %v3413, %v3416
      %vm3418 = vweird.f32 %v2713
      %vm3419 = vweird.f32 %v3413
      %vm3420 = vmor %vm3418, %vm3419
      %v3421 = vsel %vm3420, %v3413, %v3417
      %v3422 = vand.u32 2147483647, %v2713
      %vm3423 = vcmp.eq.f32.partialorder %v3422, 8.507059e+37
      %v3424 = vand.u32 %v2713, 2147483648
      %v3425 = vor.u32 1.1754944e-38, %v3424
      %v3426 = vsel %vm3423, %v3425, %v3421
      %v3427 = vmul.f32 1.0, %v3426
      %v3428 = vrcp.pop %v2714
      %v3429 = vmul.f32 %v2714, %v3428
      %v3430 = vsub.f32 1.0, %v3429
      %v3431 = vmul.f32 %v3428, %v3430
      %v3432 = vadd.f32 %v3428, %v3431
      %vm3433 = vweird.f32 %v2714
      %vm3434 = vweird.f32 %v3428
      %vm3435 = vmor %vm3433, %vm3434
      %v3436 = vsel %vm3435, %v3428, %v3432
      %v3437 = vand.u32 2147483647, %v2714
      %vm3438 = vcmp.eq.f32.partialorder %v3437, 8.507059e+37
      %v3439 = vand.u32 %v2714, 2147483648
      %v3440 = vor.u32 1.1754944e-38, %v3439
      %v3441 = vsel %vm3438, %v3440, %v3436
      %v3442 = vmul.f32 1.0, %v3441
      %v3443 = vrcp.pop %v2715
      %v3444 = vmul.f32 %v2715, %v3443
      %v3445 = vsub.f32 1.0, %v3444
      %v3446 = vmul.f32 %v3443, %v3445
      %v3447 = vadd.f32 %v3443, %v3446
      %vm3448 = vweird.f32 %v2715
      %vm3449 = vweird.f32 %v3443
      %vm3450 = vmor %vm3448, %vm3449
      %v3451 = vsel %vm3450, %v3443, %v3447
      %v3452 = vand.u32 2147483647, %v2715
      %vm3453 = vcmp.eq.f32.partialorder %v3452, 8.507059e+37
      %v3454 = vand.u32 %v2715, 2147483648
      %v3455 = vor.u32 1.1754944e-38, %v3454
      %v3456 = vsel %vm3453, %v3455, %v3451
      %v3457 = vmul.f32 1.0, %v3456
      %v3458 = vrcp.pop %v2716
      %v3459 = vmul.f32 %v2716, %v3458
      %v3460 = vsub.f32 1.0, %v3459
      %v3461 = vmul.f32 %v3458, %v3460
      %v3462 = vadd.f32 %v3458, %v3461
      %vm3463 = vweird.f32 %v2716
      %vm3464 = vweird.f32 %v3458
      %vm3465 = vmor %vm3463, %vm3464
      %v3466 = vsel %vm3465, %v3458, %v3462
      %v3467 = vand.u32 2147483647, %v2716
      %vm3468 = vcmp.eq.f32.partialorder %v3467, 8.507059e+37
      %v3469 = vand.u32 %v2716, 2147483648
      %v3470 = vor.u32 1.1754944e-38, %v3469
      %v3471 = vsel %vm3468, %v3470, %v3466
      %v3472 = vmul.f32 1.0, %v3471
      %v3473 = vrcp.pop %v2717
      %v3474 = vmul.f32 %v2717, %v3473
      %v3475 = vsub.f32 1.0, %v3474
      %v3476 = vmul.f32 %v3473, %v3475
      %v3477 = vadd.f32 %v3473, %v3476
      %vm3478 = vweird.f32 %v2717
      %vm3479 = vweird.f32 %v3473
      %vm3480 = vmor %vm3478, %vm3479
      %v3481 = vsel %vm3480, %v3473, %v3477
      %v3482 = vand.u32 2147483647, %v2717
      %vm3483 = vcmp.eq.f32.partialorder %v3482, 8.507059e+37
      %v3484 = vand.u32 %v2717, 2147483648
      %v3485 = vor.u32 1.1754944e-38, %v3484
      %v3486 = vsel %vm3483, %v3485, %v3481
      %v3487 = vmul.f32 1.0, %v3486
      %v3488 = vrcp.pop %v2718
      %v3489 = vmul.f32 %v2718, %v3488
      %v3490 = vsub.f32 1.0, %v3489
      %v3491 = vmul.f32 %v3488, %v3490
      %v3492 = vadd.f32 %v3488, %v3491
      %vm3493 = vweird.f32 %v2718
      %vm3494 = vweird.f32 %v3488
      %vm3495 = vmor %vm3493, %vm3494
      %v3496 = vsel %vm3495, %v3488, %v3492
      %v3497 = vand.u32 2147483647, %v2718
      %vm3498 = vcmp.eq.f32.partialorder %v3497, 8.507059e+37
      %v3499 = vand.u32 %v2718, 2147483648
      %v3500 = vor.u32 1.1754944e-38, %v3499
      %v3501 = vsel %vm3498, %v3500, %v3496
      %v3502 = vmul.f32 1.0, %v3501
      %v3503 = vrcp.pop %v2719
      %v3504 = vmul.f32 %v2719, %v3503
      %v3505 = vsub.f32 1.0, %v3504
      %v3506 = vmul.f32 %v3503, %v3505
      %v3507 = vadd.f32 %v3503, %v3506
      %vm3508 = vweird.f32 %v2719
      %vm3509 = vweird.f32 %v3503
      %vm3510 = vmor %vm3508, %vm3509
      %v3511 = vsel %vm3510, %v3503, %v3507
      %v3512 = vand.u32 2147483647, %v2719
      %vm3513 = vcmp.eq.f32.partialorder %v3512, 8.507059e+37
      %v3514 = vand.u32 %v2719, 2147483648
      %v3515 = vor.u32 1.1754944e-38, %v3514
      %v3516 = vsel %vm3513, %v3515, %v3511
      %v3517 = vmul.f32 1.0, %v3516
      %v3518 = vrcp.pop %v2720
      %v3519 = vmul.f32 %v2720, %v3518
      %v3520 = vsub.f32 1.0, %v3519
      %v3521 = vmul.f32 %v3518, %v3520
      %v3522 = vadd.f32 %v3518, %v3521
      %vm3523 = vweird.f32 %v2720
      %vm3524 = vweird.f32 %v3518
      %vm3525 = vmor %vm3523, %vm3524
      %v3526 = vsel %vm3525, %v3518, %v3522
      %v3527 = vand.u32 2147483647, %v2720
      %vm3528 = vcmp.eq.f32.partialorder %v3527, 8.507059e+37
      %v3529 = vand.u32 %v2720, 2147483648
      %v3530 = vor.u32 1.1754944e-38, %v3529
      %v3531 = vsel %vm3528, %v3530, %v3526
      %v3532 = vmul.f32 1.0, %v3531
      %v3533 = vrcp.pop %v2721
      %v3534 = vmul.f32 %v2721, %v3533
      %v3535 = vsub.f32 1.0, %v3534
      %v3536 = vmul.f32 %v3533, %v3535
      %v3537 = vadd.f32 %v3533, %v3536
      %vm3538 = vweird.f32 %v2721
      %vm3539 = vweird.f32 %v3533
      %vm3540 = vmor %vm3538, %vm3539
      %v3541 = vsel %vm3540, %v3533, %v3537
      %v3542 = vand.u32 2147483647, %v2721
      %vm3543 = vcmp.eq.f32.partialorder %v3542, 8.507059e+37
      %v3544 = vand.u32 %v2721, 2147483648
      %v3545 = vor.u32 1.1754944e-38, %v3544
      %v3546 = vsel %vm3543, %v3545, %v3541
      %v3547 = vmul.f32 1.0, %v3546
      %v3548 = vrcp.pop %v2722
      %v3549 = vmul.f32 %v2722, %v3548
      %v3550 = vsub.f32 1.0, %v3549
      %v3551 = vmul.f32 %v3548, %v3550
      %v3552 = vadd.f32 %v3548, %v3551
      %vm3553 = vweird.f32 %v2722
      %vm3554 = vweird.f32 %v3548
      %vm3555 = vmor %vm3553, %vm3554
      %v3556 = vsel %vm3555, %v3548, %v3552
      %v3557 = vand.u32 2147483647, %v2722
      %vm3558 = vcmp.eq.f32.partialorder %v3557, 8.507059e+37
      %v3559 = vand.u32 %v2722, 2147483648
      %v3560 = vor.u32 1.1754944e-38, %v3559
      %v3561 = vsel %vm3558, %v3560, %v3556
      %v3562 = vmul.f32 1.0, %v3561
      %v3563 = vrcp.pop %v2723
      %v3564 = vmul.f32 %v2723, %v3563
      %v3565 = vsub.f32 1.0, %v3564
      %v3566 = vmul.f32 %v3563, %v3565
      %v3567 = vadd.f32 %v3563, %v3566
      %vm3568 = vweird.f32 %v2723
      %vm3569 = vweird.f32 %v3563
      %vm3570 = vmor %vm3568, %vm3569
      %v3571 = vsel %vm3570, %v3563, %v3567
      %v3572 = vand.u32 2147483647, %v2723
      %vm3573 = vcmp.eq.f32.partialorder %v3572, 8.507059e+37
      %v3574 = vand.u32 %v2723, 2147483648
      %v3575 = vor.u32 1.1754944e-38, %v3574
      %v3576 = vsel %vm3573, %v3575, %v3571
      %v3577 = vmul.f32 1.0, %v3576
      %v3578 = vrcp.pop %v2724
      %v3579 = vmul.f32 %v2724, %v3578
      %v3580 = vsub.f32 1.0, %v3579
      %v3581 = vmul.f32 %v3578, %v3580
      %v3582 = vadd.f32 %v3578, %v3581
      %vm3583 = vweird.f32 %v2724
      %vm3584 = vweird.f32 %v3578
      %vm3585 = vmor %vm3583, %vm3584
      %v3586 = vsel %vm3585, %v3578, %v3582
      %v3587 = vand.u32 2147483647, %v2724
      %vm3588 = vcmp.eq.f32.partialorder %v3587, 8.507059e+37
      %v3589 = vand.u32 %v2724, 2147483648
      %v3590 = vor.u32 1.1754944e-38, %v3589
      %v3591 = vsel %vm3588, %v3590, %v3586
      %v3592 = vmul.f32 1.0, %v3591
      %v3593 = vrcp.pop %v2725
      %v3594 = vmul.f32 %v2725, %v3593
      %v3595 = vsub.f32 1.0, %v3594
      %v3596 = vmul.f32 %v3593, %v3595
      %v3597 = vadd.f32 %v3593, %v3596
      %vm3598 = vweird.f32 %v2725
      %vm3599 = vweird.f32 %v3593
      %vm3600 = vmor %vm3598, %vm3599
      %v3601 = vsel %vm3600, %v3593, %v3597
      %v3602 = vand.u32 2147483647, %v2725
      %vm3603 = vcmp.eq.f32.partialorder %v3602, 8.507059e+37
      %v3604 = vand.u32 %v2725, 2147483648
      %v3605 = vor.u32 1.1754944e-38, %v3604
      %v3606 = vsel %vm3603, %v3605, %v3601
      %v3607 = vmul.f32 1.0, %v3606
      %v3608 = vrcp.pop %v2726
      %v3609 = vmul.f32 %v2726, %v3608
      %v3610 = vsub.f32 1.0, %v3609
      %v3611 = vmul.f32 %v3608, %v3610
      %v3612 = vadd.f32 %v3608, %v3611
      %vm3613 = vweird.f32 %v2726
      %vm3614 = vweird.f32 %v3608
      %vm3615 = vmor %vm3613, %vm3614
      %v3616 = vsel %vm3615, %v3608, %v3612
      %v3617 = vand.u32 2147483647, %v2726
      %vm3618 = vcmp.eq.f32.partialorder %v3617, 8.507059e+37
      %v3619 = vand.u32 %v2726, 2147483648
      %v3620 = vor.u32 1.1754944e-38, %v3619
      %v3621 = vsel %vm3618, %v3620, %v3616
      %v3622 = vmul.f32 1.0, %v3621
      %v3623 = vrcp.pop %v2727
      %v3624 = vmul.f32 %v2727, %v3623
      %v3625 = vsub.f32 1.0, %v3624
      %v3626 = vmul.f32 %v3623, %v3625
      %v3627 = vadd.f32 %v3623, %v3626
      %vm3628 = vweird.f32 %v2727
      %vm3629 = vweird.f32 %v3623
      %vm3630 = vmor %vm3628, %vm3629
      %v3631 = vsel %vm3630, %v3623, %v3627
      %v3632 = vand.u32 2147483647, %v2727
      %vm3633 = vcmp.eq.f32.partialorder %v3632, 8.507059e+37
      %v3634 = vand.u32 %v2727, 2147483648
      %v3635 = vor.u32 1.1754944e-38, %v3634
      %v3636 = vsel %vm3633, %v3635, %v3631
      %v3637 = vmul.f32 1.0, %v3636
      %v3638 = vrcp.pop %v2728
      %v3639 = vmul.f32 %v2728, %v3638
      %v3640 = vsub.f32 1.0, %v3639
      %v3641 = vmul.f32 %v3638, %v3640
      %v3642 = vadd.f32 %v3638, %v3641
      %vm3643 = vweird.f32 %v2728
      %vm3644 = vweird.f32 %v3638
      %vm3645 = vmor %vm3643, %vm3644
      %v3646 = vsel %vm3645, %v3638, %v3642
      %v3647 = vand.u32 2147483647, %v2728
      %vm3648 = vcmp.eq.f32.partialorder %v3647, 8.507059e+37
      %v3649 = vand.u32 %v2728, 2147483648
      %v3650 = vor.u32 1.1754944e-38, %v3649
      %v3651 = vsel %vm3648, %v3650, %v3646
      %v3652 = vmul.f32 1.0, %v3651
      %v3653 = vrcp.pop %v2729
      %v3654 = vmul.f32 %v2729, %v3653
      %v3655 = vsub.f32 1.0, %v3654
      %v3656 = vmul.f32 %v3653, %v3655
      %v3657 = vadd.f32 %v3653, %v3656
      %vm3658 = vweird.f32 %v2729
      %vm3659 = vweird.f32 %v3653
      %vm3660 = vmor %vm3658, %vm3659
      %v3661 = vsel %vm3660, %v3653, %v3657
      %v3662 = vand.u32 2147483647, %v2729
      %vm3663 = vcmp.eq.f32.partialorder %v3662, 8.507059e+37
      %v3664 = vand.u32 %v2729, 2147483648
      %v3665 = vor.u32 1.1754944e-38, %v3664
      %v3666 = vsel %vm3663, %v3665, %v3661
      %v3667 = vmul.f32 1.0, %v3666
      %v3668 = vrcp.pop %v2730
      %v3669 = vmul.f32 %v2730, %v3668
      %v3670 = vsub.f32 1.0, %v3669
      %v3671 = vmul.f32 %v3668, %v3670
      %v3672 = vadd.f32 %v3668, %v3671
      %vm3673 = vweird.f32 %v2730
      %vm3674 = vweird.f32 %v3668
      %vm3675 = vmor %vm3673, %vm3674
      %v3676 = vsel %vm3675, %v3668, %v3672
      %v3677 = vand.u32 2147483647, %v2730
      %vm3678 = vcmp.eq.f32.partialorder %v3677, 8.507059e+37
      %v3679 = vand.u32 %v2730, 2147483648
      %v3680 = vor.u32 1.1754944e-38, %v3679
      %v3681 = vsel %vm3678, %v3680, %v3676
      %v3682 = vmul.f32 1.0, %v3681
      %v3683 = vrcp.pop %v2731
      %v3684 = vmul.f32 %v2731, %v3683
      %v3685 = vsub.f32 1.0, %v3684
      %v3686 = vmul.f32 %v3683, %v3685
      %v3687 = vadd.f32 %v3683, %v3686
      %vm3688 = vweird.f32 %v2731
      %vm3689 = vweird.f32 %v3683
      %vm3690 = vmor %vm3688, %vm3689
      %v3691 = vsel %vm3690, %v3683, %v3687
      %v3692 = vand.u32 2147483647, %v2731
      %vm3693 = vcmp.eq.f32.partialorder %v3692, 8.507059e+37
      %v3694 = vand.u32 %v2731, 2147483648
      %v3695 = vor.u32 1.1754944e-38, %v3694
      %v3696 = vsel %vm3693, %v3695, %v3691
      %v3697 = vmul.f32 1.0, %v3696
      %v3698 = vrcp.pop %v2732
      %v3699 = vmul.f32 %v2732, %v3698
      %v3700 = vsub.f32 1.0, %v3699
      %v3701 = vmul.f32 %v3698, %v3700
      %v3702 = vadd.f32 %v3698, %v3701
      %vm3703 = vweird.f32 %v2732
      %vm3704 = vweird.f32 %v3698
      %vm3705 = vmor %vm3703, %vm3704
      %v3706 = vsel %vm3705, %v3698, %v3702
      %v3707 = vand.u32 2147483647, %v2732
      %vm3708 = vcmp.eq.f32.partialorder %v3707, 8.507059e+37
      %v3709 = vand.u32 %v2732, 2147483648
      %v3710 = vor.u32 1.1754944e-38, %v3709
      %v3711 = vsel %vm3708, %v3710, %v3706
      %v3712 = vmul.f32 1.0, %v3711
      %v3713 = vrcp.pop %v2733
      %v3714 = vmul.f32 %v2733, %v3713
      %v3715 = vsub.f32 1.0, %v3714
      %v3716 = vmul.f32 %v3713, %v3715
      %v3717 = vadd.f32 %v3713, %v3716
      %vm3718 = vweird.f32 %v2733
      %vm3719 = vweird.f32 %v3713
      %vm3720 = vmor %vm3718, %vm3719
      %v3721 = vsel %vm3720, %v3713, %v3717
      %v3722 = vand.u32 2147483647, %v2733
      %vm3723 = vcmp.eq.f32.partialorder %v3722, 8.507059e+37
      %v3724 = vand.u32 %v2733, 2147483648
      %v3725 = vor.u32 1.1754944e-38, %v3724
      %v3726 = vsel %vm3723, %v3725, %v3721
      %v3727 = vmul.f32 1.0, %v3726
      %v3728 = vrcp.pop %v2734
      %v3729 = vmul.f32 %v2734, %v3728
      %v3730 = vsub.f32 1.0, %v3729
      %v3731 = vmul.f32 %v3728, %v3730
      %v3732 = vadd.f32 %v3728, %v3731
      %vm3733 = vweird.f32 %v2734
      %vm3734 = vweird.f32 %v3728
      %vm3735 = vmor %vm3733, %vm3734
      %v3736 = vsel %vm3735, %v3728, %v3732
      %v3737 = vand.u32 2147483647, %v2734
      %vm3738 = vcmp.eq.f32.partialorder %v3737, 8.507059e+37
      %v3739 = vand.u32 %v2734, 2147483648
      %v3740 = vor.u32 1.1754944e-38, %v3739
      %v3741 = vsel %vm3738, %v3740, %v3736
      %v3742 = vmul.f32 1.0, %v3741
      %v3743 = vrcp.pop %v2735
      %v3744 = vmul.f32 %v2735, %v3743
      %v3745 = vsub.f32 1.0, %v3744
      %v3746 = vmul.f32 %v3743, %v3745
      %v3747 = vadd.f32 %v3743, %v3746
      %vm3748 = vweird.f32 %v2735
      %vm3749 = vweird.f32 %v3743
      %vm3750 = vmor %vm3748, %vm3749
      %v3751 = vsel %vm3750, %v3743, %v3747
      %v3752 = vand.u32 2147483647, %v2735
      %vm3753 = vcmp.eq.f32.partialorder %v3752, 8.507059e+37
      %v3754 = vand.u32 %v2735, 2147483648
      %v3755 = vor.u32 1.1754944e-38, %v3754
      %v3756 = vsel %vm3753, %v3755, %v3751
      %v3757 = vmul.f32 1.0, %v3756
      %v3758 = vrcp.pop %v2736
      %v3759 = vmul.f32 %v2736, %v3758
      %v3760 = vsub.f32 1.0, %v3759
      %v3761 = vmul.f32 %v3758, %v3760
      %v3762 = vadd.f32 %v3758, %v3761
      %vm3763 = vweird.f32 %v2736
      %vm3764 = vweird.f32 %v3758
      %vm3765 = vmor %vm3763, %vm3764
      %v3766 = vsel %vm3765, %v3758, %v3762
      %v3767 = vand.u32 2147483647, %v2736
      %vm3768 = vcmp.eq.f32.partialorder %v3767, 8.507059e+37
      %v3769 = vand.u32 %v2736, 2147483648
      %v3770 = vor.u32 1.1754944e-38, %v3769
      %v3771 = vsel %vm3768, %v3770, %v3766
      %v3772 = vmul.f32 1.0, %v3771
      %v3773 = vrcp.pop %v2737
      %v3774 = vmul.f32 %v2737, %v3773
      %v3775 = vsub.f32 1.0, %v3774
      %v3776 = vmul.f32 %v3773, %v3775
      %v3777 = vadd.f32 %v3773, %v3776
      %vm3778 = vweird.f32 %v2737
      %vm3779 = vweird.f32 %v3773
      %vm3780 = vmor %vm3778, %vm3779
      %v3781 = vsel %vm3780, %v3773, %v3777
      %v3782 = vand.u32 2147483647, %v2737
      %vm3783 = vcmp.eq.f32.partialorder %v3782, 8.507059e+37
      %v3784 = vand.u32 %v2737, 2147483648
      %v3785 = vor.u32 1.1754944e-38, %v3784
      %v3786 = vsel %vm3783, %v3785, %v3781
      %v3787 = vmul.f32 1.0, %v3786
      %v3788 = vrcp.pop %v2738
      %v3789 = vmul.f32 %v2738, %v3788
      %v3790 = vsub.f32 1.0, %v3789
      %v3791 = vmul.f32 %v3788, %v3790
      %v3792 = vadd.f32 %v3788, %v3791
      %vm3793 = vweird.f32 %v2738
      %vm3794 = vweird.f32 %v3788
      %vm3795 = vmor %vm3793, %vm3794
      %v3796 = vsel %vm3795, %v3788, %v3792
      %v3797 = vand.u32 2147483647, %v2738
      %vm3798 = vcmp.eq.f32.partialorder %v3797, 8.507059e+37
      %v3799 = vand.u32 %v2738, 2147483648
      %v3800 = vor.u32 1.1754944e-38, %v3799
      %v3801 = vsel %vm3798, %v3800, %v3796
      %v3802 = vmul.f32 1.0, %v3801
      %v3803 = vrcp.pop %v2739
      %v3804 = vmul.f32 %v2739, %v3803
      %v3805 = vsub.f32 1.0, %v3804
      %v3806 = vmul.f32 %v3803, %v3805
      %v3807 = vadd.f32 %v3803, %v3806
      %vm3808 = vweird.f32 %v2739
      %vm3809 = vweird.f32 %v3803
      %vm3810 = vmor %vm3808, %vm3809
      %v3811 = vsel %vm3810, %v3803, %v3807
      %v3812 = vand.u32 2147483647, %v2739
      %vm3813 = vcmp.eq.f32.partialorder %v3812, 8.507059e+37
      %v3814 = vand.u32 %v2739, 2147483648
      %v3815 = vor.u32 1.1754944e-38, %v3814
      %v3816 = vsel %vm3813, %v3815, %v3811
      %v3817 = vmul.f32 1.0, %v3816
      %v3818 = vrcp.pop %v2740
      %v3819 = vmul.f32 %v2740, %v3818
      %v3820 = vsub.f32 1.0, %v3819
      %v3821 = vmul.f32 %v3818, %v3820
      %v3822 = vadd.f32 %v3818, %v3821
      %vm3823 = vweird.f32 %v2740
      %vm3824 = vweird.f32 %v3818
      %vm3825 = vmor %vm3823, %vm3824
      %v3826 = vsel %vm3825, %v3818, %v3822
      %v3827 = vand.u32 2147483647, %v2740
      %vm3828 = vcmp.eq.f32.partialorder %v3827, 8.507059e+37
      %v3829 = vand.u32 %v2740, 2147483648
      %v3830 = vor.u32 1.1754944e-38, %v3829
      %v3831 = vsel %vm3828, %v3830, %v3826
      %v3832 = vmul.f32 1.0, %v3831
      %v3833 = vrcp.pop %v2741
      %v3834 = vmul.f32 %v2741, %v3833
      %v3835 = vsub.f32 1.0, %v3834
      %v3836 = vmul.f32 %v3833, %v3835
      %v3837 = vadd.f32 %v3833, %v3836
      %vm3838 = vweird.f32 %v2741
      %vm3839 = vweird.f32 %v3833
      %vm3840 = vmor %vm3838, %vm3839
      %v3841 = vsel %vm3840, %v3833, %v3837
      %v3842 = vand.u32 2147483647, %v2741
      %vm3843 = vcmp.eq.f32.partialorder %v3842, 8.507059e+37
      %v3844 = vand.u32 %v2741, 2147483648
      %v3845 = vor.u32 1.1754944e-38, %v3844
      %v3846 = vsel %vm3843, %v3845, %v3841
      %v3847 = vmul.f32 1.0, %v3846
      %v3848 = vrcp.pop %v2742
      %v3849 = vmul.f32 %v2742, %v3848
      %v3850 = vsub.f32 1.0, %v3849
      %v3851 = vmul.f32 %v3848, %v3850
      %v3852 = vadd.f32 %v3848, %v3851
      %vm3853 = vweird.f32 %v2742
      %vm3854 = vweird.f32 %v3848
      %vm3855 = vmor %vm3853, %vm3854
      %v3856 = vsel %vm3855, %v3848, %v3852
      %v3857 = vand.u32 2147483647, %v2742
      %vm3858 = vcmp.eq.f32.partialorder %v3857, 8.507059e+37
      %v3859 = vand.u32 %v2742, 2147483648
      %v3860 = vor.u32 1.1754944e-38, %v3859
      %v3861 = vsel %vm3858, %v3860, %v3856
      %v3862 = vmul.f32 1.0, %v3861
      %v3863 = vrcp.pop %v2743
      %v3864 = vmul.f32 %v2743, %v3863
      %v3865 = vsub.f32 1.0, %v3864
      %v3866 = vmul.f32 %v3863, %v3865
      %v3867 = vadd.f32 %v3863, %v3866
      %vm3868 = vweird.f32 %v2743
      %vm3869 = vweird.f32 %v3863
      %vm3870 = vmor %vm3868, %vm3869
      %v3871 = vsel %vm3870, %v3863, %v3867
      %v3872 = vand.u32 2147483647, %v2743
      %vm3873 = vcmp.eq.f32.partialorder %v3872, 8.507059e+37
      %v3874 = vand.u32 %v2743, 2147483648
      %v3875 = vor.u32 1.1754944e-38, %v3874
      %v3876 = vsel %vm3873, %v3875, %v3871
      %v3877 = vmul.f32 1.0, %v3876
      %v3878 = vrcp.pop %v2744
      %v3879 = vmul.f32 %v2744, %v3878
      %v3880 = vsub.f32 1.0, %v3879
      %v3881 = vmul.f32 %v3878, %v3880
      %v3882 = vadd.f32 %v3878, %v3881
      %vm3883 = vweird.f32 %v2744
      %vm3884 = vweird.f32 %v3878
      %vm3885 = vmor %vm3883, %vm3884
      %v3886 = vsel %vm3885, %v3878, %v3882
      %v3887 = vand.u32 2147483647, %v2744
      %vm3888 = vcmp.eq.f32.partialorder %v3887, 8.507059e+37
      %v3889 = vand.u32 %v2744, 2147483648
      %v3890 = vor.u32 1.1754944e-38, %v3889
      %v3891 = vsel %vm3888, %v3890, %v3886
      %v3892 = vmul.f32 1.0, %v3891
      %v3893 = vrcp.pop %v2745
      %v3894 = vmul.f32 %v2745, %v3893
      %v3895 = vsub.f32 1.0, %v3894
      %v3896 = vmul.f32 %v3893, %v3895
      %v3897 = vadd.f32 %v3893, %v3896
      %vm3898 = vweird.f32 %v2745
      %vm3899 = vweird.f32 %v3893
      %vm3900 = vmor %vm3898, %vm3899
      %v3901 = vsel %vm3900, %v3893, %v3897
      %v3902 = vand.u32 2147483647, %v2745
      %vm3903 = vcmp.eq.f32.partialorder %v3902, 8.507059e+37
      %v3904 = vand.u32 %v2745, 2147483648
      %v3905 = vor.u32 1.1754944e-38, %v3904
      %v3906 = vsel %vm3903, %v3905, %v3901
      %v3907 = vmul.f32 1.0, %v3906
      %v3908 = vrcp.pop %v2746
      %v3909 = vmul.f32 %v2746, %v3908
      %v3910 = vsub.f32 1.0, %v3909
      %v3911 = vmul.f32 %v3908, %v3910
      %v3912 = vadd.f32 %v3908, %v3911
      %vm3913 = vweird.f32 %v2746
      %vm3914 = vweird.f32 %v3908
      %vm3915 = vmor %vm3913, %vm3914
      %v3916 = vsel %vm3915, %v3908, %v3912
      %v3917 = vand.u32 2147483647, %v2746
      %vm3918 = vcmp.eq.f32.partialorder %v3917, 8.507059e+37
      %v3919 = vand.u32 %v2746, 2147483648
      %v3920 = vor.u32 1.1754944e-38, %v3919
      %v3921 = vsel %vm3918, %v3920, %v3916
      %v3922 = vmul.f32 1.0, %v3921
      %v3923 = vrcp.pop %v2747
      %v3924 = vmul.f32 %v2747, %v3923
      %v3925 = vsub.f32 1.0, %v3924
      %v3926 = vmul.f32 %v3923, %v3925
      %v3927 = vadd.f32 %v3923, %v3926
      %vm3928 = vweird.f32 %v2747
      %vm3929 = vweird.f32 %v3923
      %vm3930 = vmor %vm3928, %vm3929
      %v3931 = vsel %vm3930, %v3923, %v3927
      %v3932 = vand.u32 2147483647, %v2747
      %vm3933 = vcmp.eq.f32.partialorder %v3932, 8.507059e+37
      %v3934 = vand.u32 %v2747, 2147483648
      %v3935 = vor.u32 1.1754944e-38, %v3934
      %v3936 = vsel %vm3933, %v3935, %v3931
      %v3937 = vmul.f32 1.0, %v3936
      %v3938 = vrcp.pop %v2748
      %v3939 = vmul.f32 %v2748, %v3938
      %v3940 = vsub.f32 1.0, %v3939
      %v3941 = vmul.f32 %v3938, %v3940
      %v3942 = vadd.f32 %v3938, %v3941
      %vm3943 = vweird.f32 %v2748
      %vm3944 = vweird.f32 %v3938
      %vm3945 = vmor %vm3943, %vm3944
      %v3946 = vsel %vm3945, %v3938, %v3942
      %v3947 = vand.u32 2147483647, %v2748
      %vm3948 = vcmp.eq.f32.partialorder %v3947, 8.507059e+37
      %v3949 = vand.u32 %v2748, 2147483648
      %v3950 = vor.u32 1.1754944e-38, %v3949
      %v3951 = vsel %vm3948, %v3950, %v3946
      %v3952 = vmul.f32 1.0, %v3951
      %v3953 = vrcp.pop %v2749
      %v3954 = vmul.f32 %v2749, %v3953
      %v3955 = vsub.f32 1.0, %v3954
      %v3956 = vmul.f32 %v3953, %v3955
      %v3957 = vadd.f32 %v3953, %v3956
      %vm3958 = vweird.f32 %v2749
      %vm3959 = vweird.f32 %v3953
      %vm3960 = vmor %vm3958, %vm3959
      %v3961 = vsel %vm3960, %v3953, %v3957
      %v3962 = vand.u32 2147483647, %v2749
      %vm3963 = vcmp.eq.f32.partialorder %v3962, 8.507059e+37
      %v3964 = vand.u32 %v2749, 2147483648
      %v3965 = vor.u32 1.1754944e-38, %v3964
      %v3966 = vsel %vm3963, %v3965, %v3961
      %v3967 = vmul.f32 1.0, %v3966
      %v3968 = vrcp.pop %v2750
      %v3969 = vmul.f32 %v2750, %v3968
      %v3970 = vsub.f32 1.0, %v3969
      %v3971 = vmul.f32 %v3968, %v3970
      %v3972 = vadd.f32 %v3968, %v3971
      %vm3973 = vweird.f32 %v2750
      %vm3974 = vweird.f32 %v3968
      %vm3975 = vmor %vm3973, %vm3974
      %v3976 = vsel %vm3975, %v3968, %v3972
      %v3977 = vand.u32 2147483647, %v2750
      %vm3978 = vcmp.eq.f32.partialorder %v3977, 8.507059e+37
      %v3979 = vand.u32 %v2750, 2147483648
      %v3980 = vor.u32 1.1754944e-38, %v3979
      %v3981 = vsel %vm3978, %v3980, %v3976
      %v3982 = vmul.f32 1.0, %v3981
      %v3983 = vrcp.pop %v2751
      %v3984 = vmul.f32 %v2751, %v3983
      %v3985 = vsub.f32 1.0, %v3984
      %v3986 = vmul.f32 %v3983, %v3985
      %v3987 = vadd.f32 %v3983, %v3986
      %vm3988 = vweird.f32 %v2751
      %vm3989 = vweird.f32 %v3983
      %vm3990 = vmor %vm3988, %vm3989
      %v3991 = vsel %vm3990, %v3983, %v3987
      %v3992 = vand.u32 2147483647, %v2751
      %vm3993 = vcmp.eq.f32.partialorder %v3992, 8.507059e+37
      %v3994 = vand.u32 %v2751, 2147483648
      %v3995 = vor.u32 1.1754944e-38, %v3994
      %v3996 = vsel %vm3993, %v3995, %v3991
      %v3997 = vmul.f32 1.0, %v3996
      %v3998 = vrcp.pop %v2752
      %v3999 = vmul.f32 %v2752, %v3998
      %v4000 = vsub.f32 1.0, %v3999
      %v4001 = vmul.f32 %v3998, %v4000
      %v4002 = vadd.f32 %v3998, %v4001
      %vm4003 = vweird.f32 %v2752
      %vm4004 = vweird.f32 %v3998
      %vm4005 = vmor %vm4003, %vm4004
      %v4006 = vsel %vm4005, %v3998, %v4002
      %v4007 = vand.u32 2147483647, %v2752
      %vm4008 = vcmp.eq.f32.partialorder %v4007, 8.507059e+37
      %v4009 = vand.u32 %v2752, 2147483648
      %v4010 = vor.u32 1.1754944e-38, %v4009
      %v4011 = vsel %vm4008, %v4010, %v4006
      %v4012 = vmul.f32 1.0, %v4011
      %v4013 = vrcp.pop %v2753
      %v4014 = vmul.f32 %v2753, %v4013
      %v4015 = vsub.f32 1.0, %v4014
      %v4016 = vmul.f32 %v4013, %v4015
      %v4017 = vadd.f32 %v4013, %v4016
      %vm4018 = vweird.f32 %v2753
      %vm4019 = vweird.f32 %v4013
      %vm4020 = vmor %vm4018, %vm4019
      %v4021 = vsel %vm4020, %v4013, %v4017
      %v4022 = vand.u32 2147483647, %v2753
      %vm4023 = vcmp.eq.f32.partialorder %v4022, 8.507059e+37
      %v4024 = vand.u32 %v2753, 2147483648
      %v4025 = vor.u32 1.1754944e-38, %v4024
      %v4026 = vsel %vm4023, %v4025, %v4021
      %v4027 = vmul.f32 1.0, %v4026
      %v4028 = vrcp.pop %v2754
      %v4029 = vmul.f32 %v2754, %v4028
      %v4030 = vsub.f32 1.0, %v4029
      %v4031 = vmul.f32 %v4028, %v4030
      %v4032 = vadd.f32 %v4028, %v4031
      %vm4033 = vweird.f32 %v2754
      %vm4034 = vweird.f32 %v4028
      %vm4035 = vmor %vm4033, %vm4034
      %v4036 = vsel %vm4035, %v4028, %v4032
      %v4037 = vand.u32 2147483647, %v2754
      %vm4038 = vcmp.eq.f32.partialorder %v4037, 8.507059e+37
      %v4039 = vand.u32 %v2754, 2147483648
      %v4040 = vor.u32 1.1754944e-38, %v4039
      %v4041 = vsel %vm4038, %v4040, %v4036
      %v4042 = vmul.f32 1.0, %v4041
      %v4043 = vrcp.pop %v2755
      %v4044 = vmul.f32 %v2755, %v4043
      %v4045 = vsub.f32 1.0, %v4044
      %v4046 = vmul.f32 %v4043, %v4045
      %v4047 = vadd.f32 %v4043, %v4046
      %vm4048 = vweird.f32 %v2755
      %vm4049 = vweird.f32 %v4043
      %vm4050 = vmor %vm4048, %vm4049
      %v4051 = vsel %vm4050, %v4043, %v4047
      %v4052 = vand.u32 2147483647, %v2755
      %vm4053 = vcmp.eq.f32.partialorder %v4052, 8.507059e+37
      %v4054 = vand.u32 %v2755, 2147483648
      %v4055 = vor.u32 1.1754944e-38, %v4054
      %v4056 = vsel %vm4053, %v4055, %v4051
      %v4057 = vmul.f32 1.0, %v4056
      %v4058 = vrcp.pop %v2756
      %v4059 = vmul.f32 %v2756, %v4058
      %v4060 = vsub.f32 1.0, %v4059
      %v4061 = vmul.f32 %v4058, %v4060
      %v4062 = vadd.f32 %v4058, %v4061
      %vm4063 = vweird.f32 %v2756
      %vm4064 = vweird.f32 %v4058
      %vm4065 = vmor %vm4063, %vm4064
      %v4066 = vsel %vm4065, %v4058, %v4062
      %v4067 = vand.u32 2147483647, %v2756
      %vm4068 = vcmp.eq.f32.partialorder %v4067, 8.507059e+37
      %v4069 = vand.u32 %v2756, 2147483648
      %v4070 = vor.u32 1.1754944e-38, %v4069
      %v4071 = vsel %vm4068, %v4070, %v4066
      %v4072 = vmul.f32 1.0, %v4071
      %v4073 = vrcp.pop %v2757
      %v4074 = vmul.f32 %v2757, %v4073
      %v4075 = vsub.f32 1.0, %v4074
      %v4076 = vmul.f32 %v4073, %v4075
      %v4077 = vadd.f32 %v4073, %v4076
      %vm4078 = vweird.f32 %v2757
      %vm4079 = vweird.f32 %v4073
      %vm4080 = vmor %vm4078, %vm4079
      %v4081 = vsel %vm4080, %v4073, %v4077
      %v4082 = vand.u32 2147483647, %v2757
      %vm4083 = vcmp.eq.f32.partialorder %v4082, 8.507059e+37
      %v4084 = vand.u32 %v2757, 2147483648
      %v4085 = vor.u32 1.1754944e-38, %v4084
      %v4086 = vsel %vm4083, %v4085, %v4081
      %v4087 = vmul.f32 1.0, %v4086
      %v4088 = vrcp.pop %v2758
      %v4089 = vmul.f32 %v2758, %v4088
      %v4090 = vsub.f32 1.0, %v4089
      %v4091 = vmul.f32 %v4088, %v4090
      %v4092 = vadd.f32 %v4088, %v4091
      %vm4093 = vweird.f32 %v2758
      %vm4094 = vweird.f32 %v4088
      %vm4095 = vmor %vm4093, %vm4094
      %v4096 = vsel %vm4095, %v4088, %v4092
      %v4097 = vand.u32 2147483647, %v2758
      %vm4098 = vcmp.eq.f32.partialorder %v4097, 8.507059e+37
      %v4099 = vand.u32 %v2758, 2147483648
      %v4100 = vor.u32 1.1754944e-38, %v4099
      %v4101 = vsel %vm4098, %v4100, %v4096
      %v4102 = vmul.f32 1.0, %v4101
      %v4103 = vrcp.pop %v2759
      %v4104 = vmul.f32 %v2759, %v4103
      %v4105 = vsub.f32 1.0, %v4104
      %v4106 = vmul.f32 %v4103, %v4105
      %v4107 = vadd.f32 %v4103, %v4106
      %vm4108 = vweird.f32 %v2759
      %vm4109 = vweird.f32 %v4103
      %vm4110 = vmor %vm4108, %vm4109
      %v4111 = vsel %vm4110, %v4103, %v4107
      %v4112 = vand.u32 2147483647, %v2759
      %vm4113 = vcmp.eq.f32.partialorder %v4112, 8.507059e+37
      %v4114 = vand.u32 %v2759, 2147483648
      %v4115 = vor.u32 1.1754944e-38, %v4114
      %v4116 = vsel %vm4113, %v4115, %v4111
      %v4117 = vmul.f32 1.0, %v4116
      %v4118 = vrcp.pop %v2760
      %v4119 = vmul.f32 %v2760, %v4118
      %v4120 = vsub.f32 1.0, %v4119
      %v4121 = vmul.f32 %v4118, %v4120
      %v4122 = vadd.f32 %v4118, %v4121
      %vm4123 = vweird.f32 %v2760
      %vm4124 = vweird.f32 %v4118
      %vm4125 = vmor %vm4123, %vm4124
      %v4126 = vsel %vm4125, %v4118, %v4122
      %v4127 = vand.u32 2147483647, %v2760
      %vm4128 = vcmp.eq.f32.partialorder %v4127, 8.507059e+37
      %v4129 = vand.u32 %v2760, 2147483648
      %v4130 = vor.u32 1.1754944e-38, %v4129
      %v4131 = vsel %vm4128, %v4130, %v4126
      %v4132 = vmul.f32 1.0, %v4131
      %v4133 = vrcp.pop %v2761
      %v4134 = vmul.f32 %v2761, %v4133
      %v4135 = vsub.f32 1.0, %v4134
      %v4136 = vmul.f32 %v4133, %v4135
      %v4137 = vadd.f32 %v4133, %v4136
      %vm4138 = vweird.f32 %v2761
      %vm4139 = vweird.f32 %v4133
      %vm4140 = vmor %vm4138, %vm4139
      %v4141 = vsel %vm4140, %v4133, %v4137
      %v4142 = vand.u32 2147483647, %v2761
      %vm4143 = vcmp.eq.f32.partialorder %v4142, 8.507059e+37
      %v4144 = vand.u32 %v2761, 2147483648
      %v4145 = vor.u32 1.1754944e-38, %v4144
      %v4146 = vsel %vm4143, %v4145, %v4141
      %v4147 = vmul.f32 1.0, %v4146
      %v4148 = vrcp.pop %v2762
      %v4149 = vmul.f32 %v2762, %v4148
      %v4150 = vsub.f32 1.0, %v4149
      %v4151 = vmul.f32 %v4148, %v4150
      %v4152 = vadd.f32 %v4148, %v4151
      %vm4153 = vweird.f32 %v2762
      %vm4154 = vweird.f32 %v4148
      %vm4155 = vmor %vm4153, %vm4154
      %v4156 = vsel %vm4155, %v4148, %v4152
      %v4157 = vand.u32 2147483647, %v2762
      %vm4158 = vcmp.eq.f32.partialorder %v4157, 8.507059e+37
      %v4159 = vand.u32 %v2762, 2147483648
      %v4160 = vor.u32 1.1754944e-38, %v4159
      %v4161 = vsel %vm4158, %v4160, %v4156
      %v4162 = vmul.f32 1.0, %v4161
      %v4163 = vrcp.pop %v2763
      %v4164 = vmul.f32 %v2763, %v4163
      %v4165 = vsub.f32 1.0, %v4164
      %v4166 = vmul.f32 %v4163, %v4165
      %v4167 = vadd.f32 %v4163, %v4166
      %vm4168 = vweird.f32 %v2763
      %vm4169 = vweird.f32 %v4163
      %vm4170 = vmor %vm4168, %vm4169
      %v4171 = vsel %vm4170, %v4163, %v4167
      %v4172 = vand.u32 2147483647, %v2763
      %vm4173 = vcmp.eq.f32.partialorder %v4172, 8.507059e+37
      %v4174 = vand.u32 %v2763, 2147483648
      %v4175 = vor.u32 1.1754944e-38, %v4174
      %v4176 = vsel %vm4173, %v4175, %v4171
      %v4177 = vmul.f32 1.0, %v4176
      %v4178 = vrcp.pop %v2764
      %v4179 = vmul.f32 %v2764, %v4178
      %v4180 = vsub.f32 1.0, %v4179
      %v4181 = vmul.f32 %v4178, %v4180
      %v4182 = vadd.f32 %v4178, %v4181
      %vm4183 = vweird.f32 %v2764
      %vm4184 = vweird.f32 %v4178
      %vm4185 = vmor %vm4183, %vm4184
      %v4186 = vsel %vm4185, %v4178, %v4182
      %v4187 = vand.u32 2147483647, %v2764
      %vm4188 = vcmp.eq.f32.partialorder %v4187, 8.507059e+37
      %v4189 = vand.u32 %v2764, 2147483648
      %v4190 = vor.u32 1.1754944e-38, %v4189
      %v4191 = vsel %vm4188, %v4190, %v4186
      %v4192 = vmul.f32 1.0, %v4191
      %v4193 = vrcp.pop %v2765
      %v4194 = vmul.f32 %v2765, %v4193
      %v4195 = vsub.f32 1.0, %v4194
      %v4196 = vmul.f32 %v4193, %v4195
      %v4197 = vadd.f32 %v4193, %v4196
      %vm4198 = vweird.f32 %v2765
      %vm4199 = vweird.f32 %v4193
      %vm4200 = vmor %vm4198, %vm4199
      %v4201 = vsel %vm4200, %v4193, %v4197
      %v4202 = vand.u32 2147483647, %v2765
      %vm4203 = vcmp.eq.f32.partialorder %v4202, 8.507059e+37
      %v4204 = vand.u32 %v2765, 2147483648
      %v4205 = vor.u32 1.1754944e-38, %v4204
      %v4206 = vsel %vm4203, %v4205, %v4201
      %v4207 = vmul.f32 1.0, %v4206
      %v4208 = vrcp.pop %v2766
      %v4209 = vmul.f32 %v2766, %v4208
      %v4210 = vsub.f32 1.0, %v4209
      %v4211 = vmul.f32 %v4208, %v4210
      %v4212 = vadd.f32 %v4208, %v4211
      %vm4213 = vweird.f32 %v2766
      %vm4214 = vweird.f32 %v4208
      %vm4215 = vmor %vm4213, %vm4214
      %v4216 = vsel %vm4215, %v4208, %v4212
      %v4217 = vand.u32 2147483647, %v2766
      %vm4218 = vcmp.eq.f32.partialorder %v4217, 8.507059e+37
      %v4219 = vand.u32 %v2766, 2147483648
      %v4220 = vor.u32 1.1754944e-38, %v4219
      %v4221 = vsel %vm4218, %v4220, %v4216
      %v4222 = vmul.f32 1.0, %v4221
      %v4223 = vrcp.pop %v2767
      %v4224 = vmul.f32 %v2767, %v4223
      %v4225 = vsub.f32 1.0, %v4224
      %v4226 = vmul.f32 %v4223, %v4225
      %v4227 = vadd.f32 %v4223, %v4226
      %vm4228 = vweird.f32 %v2767
      %vm4229 = vweird.f32 %v4223
      %vm4230 = vmor %vm4228, %vm4229
      %v4231 = vsel %vm4230, %v4223, %v4227
      %v4232 = vand.u32 2147483647, %v2767
      %vm4233 = vcmp.eq.f32.partialorder %v4232, 8.507059e+37
      %v4234 = vand.u32 %v2767, 2147483648
      %v4235 = vor.u32 1.1754944e-38, %v4234
      %v4236 = vsel %vm4233, %v4235, %v4231
      %v4237 = vmul.f32 1.0, %v4236
      %v4238 = vrcp.pop %v2768
      %v4239 = vmul.f32 %v2768, %v4238
      %v4240 = vsub.f32 1.0, %v4239
      %v4241 = vmul.f32 %v4238, %v4240
      %v4242 = vadd.f32 %v4238, %v4241
      %vm4243 = vweird.f32 %v2768
      %vm4244 = vweird.f32 %v4238
      %vm4245 = vmor %vm4243, %vm4244
      %v4246 = vsel %vm4245, %v4238, %v4242
      %v4247 = vand.u32 2147483647, %v2768
      %vm4248 = vcmp.eq.f32.partialorder %v4247, 8.507059e+37
      %v4249 = vand.u32 %v2768, 2147483648
      %v4250 = vor.u32 1.1754944e-38, %v4249
      %v4251 = vsel %vm4248, %v4250, %v4246
      %v4252 = vmul.f32 1.0, %v4251
      %v4253 = vrcp.pop %v2769
      %v4254 = vmul.f32 %v2769, %v4253
      %v4255 = vsub.f32 1.0, %v4254
      %v4256 = vmul.f32 %v4253, %v4255
      %v4257 = vadd.f32 %v4253, %v4256
      %vm4258 = vweird.f32 %v2769
      %vm4259 = vweird.f32 %v4253
      %vm4260 = vmor %vm4258, %vm4259
      %v4261 = vsel %vm4260, %v4253, %v4257
      %v4262 = vand.u32 2147483647, %v2769
      %vm4263 = vcmp.eq.f32.partialorder %v4262, 8.507059e+37
      %v4264 = vand.u32 %v2769, 2147483648
      %v4265 = vor.u32 1.1754944e-38, %v4264
      %v4266 = vsel %vm4263, %v4265, %v4261
      %v4267 = vmul.f32 1.0, %v4266
      %v4268 = vrcp.pop %v2770
      %v4269 = vmul.f32 %v2770, %v4268
      %v4270 = vsub.f32 1.0, %v4269
      %v4271 = vmul.f32 %v4268, %v4270
      %v4272 = vadd.f32 %v4268, %v4271
      %vm4273 = vweird.f32 %v2770
      %vm4274 = vweird.f32 %v4268
      %vm4275 = vmor %vm4273, %vm4274
      %v4276 = vsel %vm4275, %v4268, %v4272
      %v4277 = vand.u32 2147483647, %v2770
      %vm4278 = vcmp.eq.f32.partialorder %v4277, 8.507059e+37
      %v4279 = vand.u32 %v2770, 2147483648
      %v4280 = vor.u32 1.1754944e-38, %v4279
      %v4281 = vsel %vm4278, %v4280, %v4276
      %v4282 = vmul.f32 1.0, %v4281
      %v4283 = vrcp.pop %v2771
      %v4284 = vmul.f32 %v2771, %v4283
      %v4285 = vsub.f32 1.0, %v4284
      %v4286 = vmul.f32 %v4283, %v4285
      %v4287 = vadd.f32 %v4283, %v4286
      %vm4288 = vweird.f32 %v2771
      %vm4289 = vweird.f32 %v4283
      %vm4290 = vmor %vm4288, %vm4289
      %v4291 = vsel %vm4290, %v4283, %v4287
      %v4292 = vand.u32 2147483647, %v2771
      %vm4293 = vcmp.eq.f32.partialorder %v4292, 8.507059e+37
      %v4294 = vand.u32 %v2771, 2147483648
      %v4295 = vor.u32 1.1754944e-38, %v4294
      %v4296 = vsel %vm4293, %v4295, %v4291
      %v4297 = vmul.f32 1.0, %v4296
      %v4298 = vrcp.pop %v2772
      %v4299 = vmul.f32 %v2772, %v4298
      %v4300 = vsub.f32 1.0, %v4299
      %v4301 = vmul.f32 %v4298, %v4300
      %v4302 = vadd.f32 %v4298, %v4301
      %vm4303 = vweird.f32 %v2772
      %vm4304 = vweird.f32 %v4298
      %vm4305 = vmor %vm4303, %vm4304
      %v4306 = vsel %vm4305, %v4298, %v4302
      %v4307 = vand.u32 2147483647, %v2772
      %vm4308 = vcmp.eq.f32.partialorder %v4307, 8.507059e+37
      %v4309 = vand.u32 %v2772, 2147483648
      %v4310 = vor.u32 1.1754944e-38, %v4309
      %v4311 = vsel %vm4308, %v4310, %v4306
      %v4312 = vmul.f32 1.0, %v4311
      %v4313 = vrcp.pop %v2773
      %v4314 = vmul.f32 %v2773, %v4313
      %v4315 = vsub.f32 1.0, %v4314
      %v4316 = vmul.f32 %v4313, %v4315
      %v4317 = vadd.f32 %v4313, %v4316
      %vm4318 = vweird.f32 %v2773
      %vm4319 = vweird.f32 %v4313
      %vm4320 = vmor %vm4318, %vm4319
      %v4321 = vsel %vm4320, %v4313, %v4317
      %v4322 = vand.u32 2147483647, %v2773
      %vm4323 = vcmp.eq.f32.partialorder %v4322, 8.507059e+37
      %v4324 = vand.u32 %v2773, 2147483648
      %v4325 = vor.u32 1.1754944e-38, %v4324
      %v4326 = vsel %vm4323, %v4325, %v4321
      %v4327 = vmul.f32 1.0, %v4326
      %v4328 = vrcp.pop %v2774
      %v4329 = vmul.f32 %v2774, %v4328
      %v4330 = vsub.f32 1.0, %v4329
      %v4331 = vmul.f32 %v4328, %v4330
      %v4332 = vadd.f32 %v4328, %v4331
      %vm4333 = vweird.f32 %v2774
      %vm4334 = vweird.f32 %v4328
      %vm4335 = vmor %vm4333, %vm4334
      %v4336 = vsel %vm4335, %v4328, %v4332
      %v4337 = vand.u32 2147483647, %v2774
      %vm4338 = vcmp.eq.f32.partialorder %v4337, 8.507059e+37
      %v4339 = vand.u32 %v2774, 2147483648
      %v4340 = vor.u32 1.1754944e-38, %v4339
      %v4341 = vsel %vm4338, %v4340, %v4336
      %v4342 = vmul.f32 1.0, %v4341
      %v4343 = vrcp.pop %v2775
      %v4344 = vmul.f32 %v2775, %v4343
      %v4345 = vsub.f32 1.0, %v4344
      %v4346 = vmul.f32 %v4343, %v4345
      %v4347 = vadd.f32 %v4343, %v4346
      %vm4348 = vweird.f32 %v2775
      %vm4349 = vweird.f32 %v4343
      %vm4350 = vmor %vm4348, %vm4349
      %v4351 = vsel %vm4350, %v4343, %v4347
      %v4352 = vand.u32 2147483647, %v2775
      %vm4353 = vcmp.eq.f32.partialorder %v4352, 8.507059e+37
      %v4354 = vand.u32 %v2775, 2147483648
      %v4355 = vor.u32 1.1754944e-38, %v4354
      %v4356 = vsel %vm4353, %v4355, %v4351
      %v4357 = vmul.f32 1.0, %v4356
      %v4358 = vrcp.pop %v2776
      %v4359 = vmul.f32 %v2776, %v4358
      %v4360 = vsub.f32 1.0, %v4359
      %v4361 = vmul.f32 %v4358, %v4360
      %v4362 = vadd.f32 %v4358, %v4361
      %vm4363 = vweird.f32 %v2776
      %vm4364 = vweird.f32 %v4358
      %vm4365 = vmor %vm4363, %vm4364
      %v4366 = vsel %vm4365, %v4358, %v4362
      %v4367 = vand.u32 2147483647, %v2776
      %vm4368 = vcmp.eq.f32.partialorder %v4367, 8.507059e+37
      %v4369 = vand.u32 %v2776, 2147483648
      %v4370 = vor.u32 1.1754944e-38, %v4369
      %v4371 = vsel %vm4368, %v4370, %v4366
      %v4372 = vmul.f32 1.0, %v4371
      %v4373 = vrcp.pop %v2777
      %v4374 = vmul.f32 %v2777, %v4373
      %v4375 = vsub.f32 1.0, %v4374
      %v4376 = vmul.f32 %v4373, %v4375
      %v4377 = vadd.f32 %v4373, %v4376
      %vm4378 = vweird.f32 %v2777
      %vm4379 = vweird.f32 %v4373
      %vm4380 = vmor %vm4378, %vm4379
      %v4381 = vsel %vm4380, %v4373, %v4377
      %v4382 = vand.u32 2147483647, %v2777
      %vm4383 = vcmp.eq.f32.partialorder %v4382, 8.507059e+37
      %v4384 = vand.u32 %v2777, 2147483648
      %v4385 = vor.u32 1.1754944e-38, %v4384
      %v4386 = vsel %vm4383, %v4385, %v4381
      %v4387 = vmul.f32 1.0, %v4386
      %v4388 = vrcp.pop %v2778
      %v4389 = vmul.f32 %v2778, %v4388
      %v4390 = vsub.f32 1.0, %v4389
      %v4391 = vmul.f32 %v4388, %v4390
      %v4392 = vadd.f32 %v4388, %v4391
      %vm4393 = vweird.f32 %v2778
      %vm4394 = vweird.f32 %v4388
      %vm4395 = vmor %vm4393, %vm4394
      %v4396 = vsel %vm4395, %v4388, %v4392
      %v4397 = vand.u32 2147483647, %v2778
      %vm4398 = vcmp.eq.f32.partialorder %v4397, 8.507059e+37
      %v4399 = vand.u32 %v2778, 2147483648
      %v4400 = vor.u32 1.1754944e-38, %v4399
      %v4401 = vsel %vm4398, %v4400, %v4396
      %v4402 = vmul.f32 1.0, %v4401
      %v4403 = vrcp.pop %v2779
      %v4404 = vmul.f32 %v2779, %v4403
      %v4405 = vsub.f32 1.0, %v4404
      %v4406 = vmul.f32 %v4403, %v4405
      %v4407 = vadd.f32 %v4403, %v4406
      %vm4408 = vweird.f32 %v2779
      %vm4409 = vweird.f32 %v4403
      %vm4410 = vmor %vm4408, %vm4409
      %v4411 = vsel %vm4410, %v4403, %v4407
      %v4412 = vand.u32 2147483647, %v2779
      %vm4413 = vcmp.eq.f32.partialorder %v4412, 8.507059e+37
      %v4414 = vand.u32 %v2779, 2147483648
      %v4415 = vor.u32 1.1754944e-38, %v4414
      %v4416 = vsel %vm4413, %v4415, %v4411
      %v4417 = vmul.f32 1.0, %v4416
      %v4418 = vrcp.pop %v2780
      %v4419 = vmul.f32 %v2780, %v4418
      %v4420 = vsub.f32 1.0, %v4419
      %v4421 = vmul.f32 %v4418, %v4420
      %v4422 = vadd.f32 %v4418, %v4421
      %vm4423 = vweird.f32 %v2780
      %vm4424 = vweird.f32 %v4418
      %vm4425 = vmor %vm4423, %vm4424
      %v4426 = vsel %vm4425, %v4418, %v4422
      %v4427 = vand.u32 2147483647, %v2780
      %vm4428 = vcmp.eq.f32.partialorder %v4427, 8.507059e+37
      %v4429 = vand.u32 %v2780, 2147483648
      %v4430 = vor.u32 1.1754944e-38, %v4429
      %v4431 = vsel %vm4428, %v4430, %v4426
      %v4432 = vmul.f32 1.0, %v4431
      %v4433 = vrcp.pop %v2781
      %v4434 = vmul.f32 %v2781, %v4433
      %v4435 = vsub.f32 1.0, %v4434
      %v4436 = vmul.f32 %v4433, %v4435
      %v4437 = vadd.f32 %v4433, %v4436
      %vm4438 = vweird.f32 %v2781
      %vm4439 = vweird.f32 %v4433
      %vm4440 = vmor %vm4438, %vm4439
      %v4441 = vsel %vm4440, %v4433, %v4437
      %v4442 = vand.u32 2147483647, %v2781
      %vm4443 = vcmp.eq.f32.partialorder %v4442, 8.507059e+37
      %v4444 = vand.u32 %v2781, 2147483648
      %v4445 = vor.u32 1.1754944e-38, %v4444
      %v4446 = vsel %vm4443, %v4445, %v4441
      %v4447 = vmul.f32 1.0, %v4446
      %v4448 = vrcp.pop %v2782
      %v4449 = vmul.f32 %v2782, %v4448
      %v4450 = vsub.f32 1.0, %v4449
      %v4451 = vmul.f32 %v4448, %v4450
      %v4452 = vadd.f32 %v4448, %v4451
      %vm4453 = vweird.f32 %v2782
      %vm4454 = vweird.f32 %v4448
      %vm4455 = vmor %vm4453, %vm4454
      %v4456 = vsel %vm4455, %v4448, %v4452
      %v4457 = vand.u32 2147483647, %v2782
      %vm4458 = vcmp.eq.f32.partialorder %v4457, 8.507059e+37
      %v4459 = vand.u32 %v2782, 2147483648
      %v4460 = vor.u32 1.1754944e-38, %v4459
      %v4461 = vsel %vm4458, %v4460, %v4456
      %v4462 = vmul.f32 1.0, %v4461
      %v4463 = vrcp.pop %v2783
      %v4464 = vmul.f32 %v2783, %v4463
      %v4465 = vsub.f32 1.0, %v4464
      %v4466 = vmul.f32 %v4463, %v4465
      %v4467 = vadd.f32 %v4463, %v4466
      %vm4468 = vweird.f32 %v2783
      %vm4469 = vweird.f32 %v4463
      %vm4470 = vmor %vm4468, %vm4469
      %v4471 = vsel %vm4470, %v4463, %v4467
      %v4472 = vand.u32 2147483647, %v2783
      %vm4473 = vcmp.eq.f32.partialorder %v4472, 8.507059e+37
      %v4474 = vand.u32 %v2783, 2147483648
      %v4475 = vor.u32 1.1754944e-38, %v4474
      %v4476 = vsel %vm4473, %v4475, %v4471
      %v4477 = vmul.f32 1.0, %v4476
      %v4478 = vrcp.pop %v2784
      %v4479 = vmul.f32 %v2784, %v4478
      %v4480 = vsub.f32 1.0, %v4479
      %v4481 = vmul.f32 %v4478, %v4480
      %v4482 = vadd.f32 %v4478, %v4481
      %vm4483 = vweird.f32 %v2784
      %vm4484 = vweird.f32 %v4478
      %vm4485 = vmor %vm4483, %vm4484
      %v4486 = vsel %vm4485, %v4478, %v4482
      %v4487 = vand.u32 2147483647, %v2784
      %vm4488 = vcmp.eq.f32.partialorder %v4487, 8.507059e+37
      %v4489 = vand.u32 %v2784, 2147483648
      %v4490 = vor.u32 1.1754944e-38, %v4489
      %v4491 = vsel %vm4488, %v4490, %v4486
      %v4492 = vmul.f32 1.0, %v4491
      %v4493 = vrcp.pop %v2785
      %v4494 = vmul.f32 %v2785, %v4493
      %v4495 = vsub.f32 1.0, %v4494
      %v4496 = vmul.f32 %v4493, %v4495
      %v4497 = vadd.f32 %v4493, %v4496
      %vm4498 = vweird.f32 %v2785
      %vm4499 = vweird.f32 %v4493
      %vm4500 = vmor %vm4498, %vm4499
      %v4501 = vsel %vm4500, %v4493, %v4497
      %v4502 = vand.u32 2147483647, %v2785
      %vm4503 = vcmp.eq.f32.partialorder %v4502, 8.507059e+37
      %v4504 = vand.u32 %v2785, 2147483648
      %v4505 = vor.u32 1.1754944e-38, %v4504
      %v4506 = vsel %vm4503, %v4505, %v4501
      %v4507 = vmul.f32 1.0, %v4506
      %v4508 = vrcp.pop %v2786
      %v4509 = vmul.f32 %v2786, %v4508
      %v4510 = vsub.f32 1.0, %v4509
      %v4511 = vmul.f32 %v4508, %v4510
      %v4512 = vadd.f32 %v4508, %v4511
      %vm4513 = vweird.f32 %v2786
      %vm4514 = vweird.f32 %v4508
      %vm4515 = vmor %vm4513, %vm4514
      %v4516 = vsel %vm4515, %v4508, %v4512
      %v4517 = vand.u32 2147483647, %v2786
      %vm4518 = vcmp.eq.f32.partialorder %v4517, 8.507059e+37
      %v4519 = vand.u32 %v2786, 2147483648
      %v4520 = vor.u32 1.1754944e-38, %v4519
      %v4521 = vsel %vm4518, %v4520, %v4516
      %v4522 = vmul.f32 1.0, %v4521
      %v4523 = vrcp.pop %v2787
      %v4524 = vmul.f32 %v2787, %v4523
      %v4525 = vsub.f32 1.0, %v4524
      %v4526 = vmul.f32 %v4523, %v4525
      %v4527 = vadd.f32 %v4523, %v4526
      %vm4528 = vweird.f32 %v2787
      %vm4529 = vweird.f32 %v4523
      %vm4530 = vmor %vm4528, %vm4529
      %v4531 = vsel %vm4530, %v4523, %v4527
      %v4532 = vand.u32 2147483647, %v2787
      %vm4533 = vcmp.eq.f32.partialorder %v4532, 8.507059e+37
      %v4534 = vand.u32 %v2787, 2147483648
      %v4535 = vor.u32 1.1754944e-38, %v4534
      %v4536 = vsel %vm4533, %v4535, %v4531
      %v4537 = vmul.f32 1.0, %v4536
      %v4538 = vrcp.pop %v2788
      %v4539 = vmul.f32 %v2788, %v4538
      %v4540 = vsub.f32 1.0, %v4539
      %v4541 = vmul.f32 %v4538, %v4540
      %v4542 = vadd.f32 %v4538, %v4541
      %vm4543 = vweird.f32 %v2788
      %vm4544 = vweird.f32 %v4538
      %vm4545 = vmor %vm4543, %vm4544
      %v4546 = vsel %vm4545, %v4538, %v4542
      %v4547 = vand.u32 2147483647, %v2788
      %vm4548 = vcmp.eq.f32.partialorder %v4547, 8.507059e+37
      %v4549 = vand.u32 %v2788, 2147483648
      %v4550 = vor.u32 1.1754944e-38, %v4549
      %v4551 = vsel %vm4548, %v4550, %v4546
      %v4552 = vmul.f32 1.0, %v4551
      %v4553 = vrcp.pop %v2789
      %v4554 = vmul.f32 %v2789, %v4553
      %v4555 = vsub.f32 1.0, %v4554
      %v4556 = vmul.f32 %v4553, %v4555
      %v4557 = vadd.f32 %v4553, %v4556
      %vm4558 = vweird.f32 %v2789
      %vm4559 = vweird.f32 %v4553
      %vm4560 = vmor %vm4558, %vm4559
      %v4561 = vsel %vm4560, %v4553, %v4557
      %v4562 = vand.u32 2147483647, %v2789
      %vm4563 = vcmp.eq.f32.partialorder %v4562, 8.507059e+37
      %v4564 = vand.u32 %v2789, 2147483648
      %v4565 = vor.u32 1.1754944e-38, %v4564
      %v4566 = vsel %vm4563, %v4565, %v4561
      %v4567 = vmul.f32 1.0, %v4566
      %v4568 = vrcp.pop %v2790
      %v4569 = vmul.f32 %v2790, %v4568
      %v4570 = vsub.f32 1.0, %v4569
      %v4571 = vmul.f32 %v4568, %v4570
      %v4572 = vadd.f32 %v4568, %v4571
      %vm4573 = vweird.f32 %v2790
      %vm4574 = vweird.f32 %v4568
      %vm4575 = vmor %vm4573, %vm4574
      %v4576 = vsel %vm4575, %v4568, %v4572
      %v4577 = vand.u32 2147483647, %v2790
      %vm4578 = vcmp.eq.f32.partialorder %v4577, 8.507059e+37
      %v4579 = vand.u32 %v2790, 2147483648
      %v4580 = vor.u32 1.1754944e-38, %v4579
      %v4581 = vsel %vm4578, %v4580, %v4576
      %v4582 = vmul.f32 1.0, %v4581
      %v4583 = vrcp.pop %v2791
      %v4584 = vmul.f32 %v2791, %v4583
      %v4585 = vsub.f32 1.0, %v4584
      %v4586 = vmul.f32 %v4583, %v4585
      %v4587 = vadd.f32 %v4583, %v4586
      %vm4588 = vweird.f32 %v2791
      %vm4589 = vweird.f32 %v4583
      %vm4590 = vmor %vm4588, %vm4589
      %v4591 = vsel %vm4590, %v4583, %v4587
      %v4592 = vand.u32 2147483647, %v2791
      %vm4593 = vcmp.eq.f32.partialorder %v4592, 8.507059e+37
      %v4594 = vand.u32 %v2791, 2147483648
      %v4595 = vor.u32 1.1754944e-38, %v4594
      %v4596 = vsel %vm4593, %v4595, %v4591
      %v4597 = vmul.f32 1.0, %v4596
      %v4598 = vrcp.pop %v2792
      %v4599 = vmul.f32 %v2792, %v4598
      %v4600 = vsub.f32 1.0, %v4599
      %v4601 = vmul.f32 %v4598, %v4600
      %v4602 = vadd.f32 %v4598, %v4601
      %vm4603 = vweird.f32 %v2792
      %vm4604 = vweird.f32 %v4598
      %vm4605 = vmor %vm4603, %vm4604
      %v4606 = vsel %vm4605, %v4598, %v4602
      %v4607 = vand.u32 2147483647, %v2792
      %vm4608 = vcmp.eq.f32.partialorder %v4607, 8.507059e+37
      %v4609 = vand.u32 %v2792, 2147483648
      %v4610 = vor.u32 1.1754944e-38, %v4609
      %v4611 = vsel %vm4608, %v4610, %v4606
      %v4612 = vmul.f32 1.0, %v4611
      %v4613 = vrcp.pop %v2793
      %v4614 = vmul.f32 %v2793, %v4613
      %v4615 = vsub.f32 1.0, %v4614
      %v4616 = vmul.f32 %v4613, %v4615
      %v4617 = vadd.f32 %v4613, %v4616
      %vm4618 = vweird.f32 %v2793
      %vm4619 = vweird.f32 %v4613
      %vm4620 = vmor %vm4618, %vm4619
      %v4621 = vsel %vm4620, %v4613, %v4617
      %v4622 = vand.u32 2147483647, %v2793
      %vm4623 = vcmp.eq.f32.partialorder %v4622, 8.507059e+37
      %v4624 = vand.u32 %v2793, 2147483648
      %v4625 = vor.u32 1.1754944e-38, %v4624
      %v4626 = vsel %vm4623, %v4625, %v4621
      %v4627 = vmul.f32 1.0, %v4626
      %v4628 = vrcp.pop %v2794
      %v4629 = vmul.f32 %v2794, %v4628
      %v4630 = vsub.f32 1.0, %v4629
      %v4631 = vmul.f32 %v4628, %v4630
      %v4632 = vadd.f32 %v4628, %v4631
      %vm4633 = vweird.f32 %v2794
      %vm4634 = vweird.f32 %v4628
      %vm4635 = vmor %vm4633, %vm4634
      %v4636 = vsel %vm4635, %v4628, %v4632
      %v4637 = vand.u32 2147483647, %v2794
      %vm4638 = vcmp.eq.f32.partialorder %v4637, 8.507059e+37
      %v4639 = vand.u32 %v2794, 2147483648
      %v4640 = vor.u32 1.1754944e-38, %v4639
      %v4641 = vsel %vm4638, %v4640, %v4636
      %v4642 = vmul.f32 1.0, %v4641
      %v4643 = vrcp.pop %v2795
      %v4644 = vmul.f32 %v2795, %v4643
      %v4645 = vsub.f32 1.0, %v4644
      %v4646 = vmul.f32 %v4643, %v4645
      %v4647 = vadd.f32 %v4643, %v4646
      %vm4648 = vweird.f32 %v2795
      %vm4649 = vweird.f32 %v4643
      %vm4650 = vmor %vm4648, %vm4649
      %v4651 = vsel %vm4650, %v4643, %v4647
      %v4652 = vand.u32 2147483647, %v2795
      %vm4653 = vcmp.eq.f32.partialorder %v4652, 8.507059e+37
      %v4654 = vand.u32 %v2795, 2147483648
      %v4655 = vor.u32 1.1754944e-38, %v4654
      %v4656 = vsel %vm4653, %v4655, %v4651
      %v4657 = vmul.f32 1.0, %v4656
      %v4658 = vrcp.pop %v2796
      %v4659 = vmul.f32 %v2796, %v4658
      %v4660 = vsub.f32 1.0, %v4659
      %v4661 = vmul.f32 %v4658, %v4660
      %v4662 = vadd.f32 %v4658, %v4661
      %vm4663 = vweird.f32 %v2796
      %vm4664 = vweird.f32 %v4658
      %vm4665 = vmor %vm4663, %vm4664
      %v4666 = vsel %vm4665, %v4658, %v4662
      %v4667 = vand.u32 2147483647, %v2796
      %vm4668 = vcmp.eq.f32.partialorder %v4667, 8.507059e+37
      %v4669 = vand.u32 %v2796, 2147483648
      %v4670 = vor.u32 1.1754944e-38, %v4669
      %v4671 = vsel %vm4668, %v4670, %v4666
      %v4672 = vmul.f32 1.0, %v4671
      %v4673 = vrcp.pop %v2797
      %v4674 = vmul.f32 %v2797, %v4673
      %v4675 = vsub.f32 1.0, %v4674
      %v4676 = vmul.f32 %v4673, %v4675
      %v4677 = vadd.f32 %v4673, %v4676
      %vm4678 = vweird.f32 %v2797
      %vm4679 = vweird.f32 %v4673
      %vm4680 = vmor %vm4678, %vm4679
      %v4681 = vsel %vm4680, %v4673, %v4677
      %v4682 = vand.u32 2147483647, %v2797
      %vm4683 = vcmp.eq.f32.partialorder %v4682, 8.507059e+37
      %v4684 = vand.u32 %v2797, 2147483648
      %v4685 = vor.u32 1.1754944e-38, %v4684
      %v4686 = vsel %vm4683, %v4685, %v4681
      %v4687 = vmul.f32 1.0, %v4686
      %v4688 = vrcp.pop %v2798
      %v4689 = vmul.f32 %v2798, %v4688
      %v4690 = vsub.f32 1.0, %v4689
      %v4691 = vmul.f32 %v4688, %v4690
      %v4692 = vadd.f32 %v4688, %v4691
      %vm4693 = vweird.f32 %v2798
      %vm4694 = vweird.f32 %v4688
      %vm4695 = vmor %vm4693, %vm4694
      %v4696 = vsel %vm4695, %v4688, %v4692
      %v4697 = vand.u32 2147483647, %v2798
      %vm4698 = vcmp.eq.f32.partialorder %v4697, 8.507059e+37
      %v4699 = vand.u32 %v2798, 2147483648
      %v4700 = vor.u32 1.1754944e-38, %v4699
      %v4701 = vsel %vm4698, %v4700, %v4696
      %v4702 = vmul.f32 1.0, %v4701
      %v4703 = vrcp.pop %v2799
      %v4704 = vmul.f32 %v2799, %v4703
      %v4705 = vsub.f32 1.0, %v4704
      %v4706 = vmul.f32 %v4703, %v4705
      %v4707 = vadd.f32 %v4703, %v4706
      %vm4708 = vweird.f32 %v2799
      %vm4709 = vweird.f32 %v4703
      %vm4710 = vmor %vm4708, %vm4709
      %v4711 = vsel %vm4710, %v4703, %v4707
      %v4712 = vand.u32 2147483647, %v2799
      %vm4713 = vcmp.eq.f32.partialorder %v4712, 8.507059e+37
      %v4714 = vand.u32 %v2799, 2147483648
      %v4715 = vor.u32 1.1754944e-38, %v4714
      %v4716 = vsel %vm4713, %v4715, %v4711
      %v4717 = vmul.f32 1.0, %v4716
      %v4718 = vrcp.pop %v2800
      %v4719 = vmul.f32 %v2800, %v4718
      %v4720 = vsub.f32 1.0, %v4719
      %v4721 = vmul.f32 %v4718, %v4720
      %v4722 = vadd.f32 %v4718, %v4721
      %vm4723 = vweird.f32 %v2800
      %vm4724 = vweird.f32 %v4718
      %vm4725 = vmor %vm4723, %vm4724
      %v4726 = vsel %vm4725, %v4718, %v4722
      %v4727 = vand.u32 2147483647, %v2800
      %vm4728 = vcmp.eq.f32.partialorder %v4727, 8.507059e+37
      %v4729 = vand.u32 %v2800, 2147483648
      %v4730 = vor.u32 1.1754944e-38, %v4729
      %v4731 = vsel %vm4728, %v4730, %v4726
      %v4732 = vmul.f32 1.0, %v4731
      %v4733 = vrcp.pop %v2801
      %v4734 = vmul.f32 %v2801, %v4733
      %v4735 = vsub.f32 1.0, %v4734
      %v4736 = vmul.f32 %v4733, %v4735
      %v4737 = vadd.f32 %v4733, %v4736
      %vm4738 = vweird.f32 %v2801
      %vm4739 = vweird.f32 %v4733
      %vm4740 = vmor %vm4738, %vm4739
      %v4741 = vsel %vm4740, %v4733, %v4737
      %v4742 = vand.u32 2147483647, %v2801
      %vm4743 = vcmp.eq.f32.partialorder %v4742, 8.507059e+37
      %v4744 = vand.u32 %v2801, 2147483648
      %v4745 = vor.u32 1.1754944e-38, %v4744
      %v4746 = vsel %vm4743, %v4745, %v4741
      %v4747 = vmul.f32 1.0, %v4746
      %v4748 = vrcp.pop %v2802
      %v4749 = vmul.f32 %v2802, %v4748
      %v4750 = vsub.f32 1.0, %v4749
      %v4751 = vmul.f32 %v4748, %v4750
      %v4752 = vadd.f32 %v4748, %v4751
      %vm4753 = vweird.f32 %v2802
      %vm4754 = vweird.f32 %v4748
      %vm4755 = vmor %vm4753, %vm4754
      %v4756 = vsel %vm4755, %v4748, %v4752
      %v4757 = vand.u32 2147483647, %v2802
      %vm4758 = vcmp.eq.f32.partialorder %v4757, 8.507059e+37
      %v4759 = vand.u32 %v2802, 2147483648
      %v4760 = vor.u32 1.1754944e-38, %v4759
      %v4761 = vsel %vm4758, %v4760, %v4756
      %v4762 = vmul.f32 1.0, %v4761
      %v4763 = vrcp.pop %v2803
      %v4764 = vmul.f32 %v2803, %v4763
      %v4765 = vsub.f32 1.0, %v4764
      %v4766 = vmul.f32 %v4763, %v4765
      %v4767 = vadd.f32 %v4763, %v4766
      %vm4768 = vweird.f32 %v2803
      %vm4769 = vweird.f32 %v4763
      %vm4770 = vmor %vm4768, %vm4769
      %v4771 = vsel %vm4770, %v4763, %v4767
      %v4772 = vand.u32 2147483647, %v2803
      %vm4773 = vcmp.eq.f32.partialorder %v4772, 8.507059e+37
      %v4774 = vand.u32 %v2803, 2147483648
      %v4775 = vor.u32 1.1754944e-38, %v4774
      %v4776 = vsel %vm4773, %v4775, %v4771
      %v4777 = vmul.f32 1.0, %v4776
      %v4778 = vrcp.pop %v2804
      %v4779 = vmul.f32 %v2804, %v4778
      %v4780 = vsub.f32 1.0, %v4779
      %v4781 = vmul.f32 %v4778, %v4780
      %v4782 = vadd.f32 %v4778, %v4781
      %vm4783 = vweird.f32 %v2804
      %vm4784 = vweird.f32 %v4778
      %vm4785 = vmor %vm4783, %vm4784
      %v4786 = vsel %vm4785, %v4778, %v4782
      %v4787 = vand.u32 2147483647, %v2804
      %vm4788 = vcmp.eq.f32.partialorder %v4787, 8.507059e+37
      %v4789 = vand.u32 %v2804, 2147483648
      %v4790 = vor.u32 1.1754944e-38, %v4789
      %v4791 = vsel %vm4788, %v4790, %v4786
      %v4792 = vmul.f32 1.0, %v4791
      %v4793 = vrcp.pop %v2805
      %v4794 = vmul.f32 %v2805, %v4793
      %v4795 = vsub.f32 1.0, %v4794
      %v4796 = vmul.f32 %v4793, %v4795
      %v4797 = vadd.f32 %v4793, %v4796
      %vm4798 = vweird.f32 %v2805
      %vm4799 = vweird.f32 %v4793
      %vm4800 = vmor %vm4798, %vm4799
      %v4801 = vsel %vm4800, %v4793, %v4797
      %v4802 = vand.u32 2147483647, %v2805
      %vm4803 = vcmp.eq.f32.partialorder %v4802, 8.507059e+37
      %v4804 = vand.u32 %v2805, 2147483648
      %v4805 = vor.u32 1.1754944e-38, %v4804
      %v4806 = vsel %vm4803, %v4805, %v4801
      %v4807 = vmul.f32 1.0, %v4806
      %v4808 = vrcp.pop %v2806
      %v4809 = vmul.f32 %v2806, %v4808
      %v4810 = vsub.f32 1.0, %v4809
      %v4811 = vmul.f32 %v4808, %v4810
      %v4812 = vadd.f32 %v4808, %v4811
      %vm4813 = vweird.f32 %v2806
      %vm4814 = vweird.f32 %v4808
      %vm4815 = vmor %vm4813, %vm4814
      %v4816 = vsel %vm4815, %v4808, %v4812
      %v4817 = vand.u32 2147483647, %v2806
      %vm4818 = vcmp.eq.f32.partialorder %v4817, 8.507059e+37
      %v4819 = vand.u32 %v2806, 2147483648
      %v4820 = vor.u32 1.1754944e-38, %v4819
      %v4821 = vsel %vm4818, %v4820, %v4816
      %v4822 = vmul.f32 1.0, %v4821
      %v4823 = vrcp.pop %v2807
      %v4824 = vmul.f32 %v2807, %v4823
      %v4825 = vsub.f32 1.0, %v4824
      %v4826 = vmul.f32 %v4823, %v4825
      %v4827 = vadd.f32 %v4823, %v4826
      %vm4828 = vweird.f32 %v2807
      %vm4829 = vweird.f32 %v4823
      %vm4830 = vmor %vm4828, %vm4829
      %v4831 = vsel %vm4830, %v4823, %v4827
      %v4832 = vand.u32 2147483647, %v2807
      %vm4833 = vcmp.eq.f32.partialorder %v4832, 8.507059e+37
      %v4834 = vand.u32 %v2807, 2147483648
      %v4835 = vor.u32 1.1754944e-38, %v4834
      %v4836 = vsel %vm4833, %v4835, %v4831
      %v4837 = vmul.f32 1.0, %v4836
      %v4838 = vrcp.pop %v2808
      %v4839 = vmul.f32 %v2808, %v4838
      %v4840 = vsub.f32 1.0, %v4839
      %v4841 = vmul.f32 %v4838, %v4840
      %v4842 = vadd.f32 %v4838, %v4841
      %vm4843 = vweird.f32 %v2808
      %vm4844 = vweird.f32 %v4838
      %vm4845 = vmor %vm4843, %vm4844
      %v4846 = vsel %vm4845, %v4838, %v4842
      %v4847 = vand.u32 2147483647, %v2808
      %vm4848 = vcmp.eq.f32.partialorder %v4847, 8.507059e+37
      %v4849 = vand.u32 %v2808, 2147483648
      %v4850 = vor.u32 1.1754944e-38, %v4849
      %v4851 = vsel %vm4848, %v4850, %v4846
      %v4852 = vmul.f32 1.0, %v4851
      %v4853 = vrcp.pop %v2809
      %v4854 = vmul.f32 %v2809, %v4853
      %v4855 = vsub.f32 1.0, %v4854
      %v4856 = vmul.f32 %v4853, %v4855
      %v4857 = vadd.f32 %v4853, %v4856
      %vm4858 = vweird.f32 %v2809
      %vm4859 = vweird.f32 %v4853
      %vm4860 = vmor %vm4858, %vm4859
      %v4861 = vsel %vm4860, %v4853, %v4857
      %v4862 = vand.u32 2147483647, %v2809
      %vm4863 = vcmp.eq.f32.partialorder %v4862, 8.507059e+37
      %v4864 = vand.u32 %v2809, 2147483648
      %v4865 = vor.u32 1.1754944e-38, %v4864
      %v4866 = vsel %vm4863, %v4865, %v4861
      %v4867 = vmul.f32 1.0, %v4866
      %v4868 = vrcp.pop %v2810
      %v4869 = vmul.f32 %v2810, %v4868
      %v4870 = vsub.f32 1.0, %v4869
      %v4871 = vmul.f32 %v4868, %v4870
      %v4872 = vadd.f32 %v4868, %v4871
      %vm4873 = vweird.f32 %v2810
      %vm4874 = vweird.f32 %v4868
      %vm4875 = vmor %vm4873, %vm4874
      %v4876 = vsel %vm4875, %v4868, %v4872
      %v4877 = vand.u32 2147483647, %v2810
      %vm4878 = vcmp.eq.f32.partialorder %v4877, 8.507059e+37
      %v4879 = vand.u32 %v2810, 2147483648
      %v4880 = vor.u32 1.1754944e-38, %v4879
      %v4881 = vsel %vm4878, %v4880, %v4876
      %v4882 = vmul.f32 1.0, %v4881
      %v4883 = vrcp.pop %v2811
      %v4884 = vmul.f32 %v2811, %v4883
      %v4885 = vsub.f32 1.0, %v4884
      %v4886 = vmul.f32 %v4883, %v4885
      %v4887 = vadd.f32 %v4883, %v4886
      %vm4888 = vweird.f32 %v2811
      %vm4889 = vweird.f32 %v4883
      %vm4890 = vmor %vm4888, %vm4889
      %v4891 = vsel %vm4890, %v4883, %v4887
      %v4892 = vand.u32 2147483647, %v2811
      %vm4893 = vcmp.eq.f32.partialorder %v4892, 8.507059e+37
      %v4894 = vand.u32 %v2811, 2147483648
      %v4895 = vor.u32 1.1754944e-38, %v4894
      %v4896 = vsel %vm4893, %v4895, %v4891
      %v4897 = vmul.f32 1.0, %v4896
      %v4898 = vrcp.pop %v2812
      %v4899 = vmul.f32 %v2812, %v4898
      %v4900 = vsub.f32 1.0, %v4899
      %v4901 = vmul.f32 %v4898, %v4900
      %v4902 = vadd.f32 %v4898, %v4901
      %vm4903 = vweird.f32 %v2812
      %vm4904 = vweird.f32 %v4898
      %vm4905 = vmor %vm4903, %vm4904
      %v4906 = vsel %vm4905, %v4898, %v4902
      %v4907 = vand.u32 2147483647, %v2812
      %vm4908 = vcmp.eq.f32.partialorder %v4907, 8.507059e+37
      %v4909 = vand.u32 %v2812, 2147483648
      %v4910 = vor.u32 1.1754944e-38, %v4909
      %v4911 = vsel %vm4908, %v4910, %v4906
      %v4912 = vmul.f32 1.0, %v4911
      %v4913 = vrcp.pop %v2813
      %v4914 = vmul.f32 %v2813, %v4913
      %v4915 = vsub.f32 1.0, %v4914
      %v4916 = vmul.f32 %v4913, %v4915
      %v4917 = vadd.f32 %v4913, %v4916
      %vm4918 = vweird.f32 %v2813
      %vm4919 = vweird.f32 %v4913
      %vm4920 = vmor %vm4918, %vm4919
      %v4921 = vsel %vm4920, %v4913, %v4917
      %v4922 = vand.u32 2147483647, %v2813
      %vm4923 = vcmp.eq.f32.partialorder %v4922, 8.507059e+37
      %v4924 = vand.u32 %v2813, 2147483648
      %v4925 = vor.u32 1.1754944e-38, %v4924
      %v4926 = vsel %vm4923, %v4925, %v4921
      %v4927 = vmul.f32 1.0, %v4926
      %v4928 = vrcp.pop %v2814
      %v4929 = vmul.f32 %v2814, %v4928
      %v4930 = vsub.f32 1.0, %v4929
      %v4931 = vmul.f32 %v4928, %v4930
      %v4932 = vadd.f32 %v4928, %v4931
      %vm4933 = vweird.f32 %v2814
      %vm4934 = vweird.f32 %v4928
      %vm4935 = vmor %vm4933, %vm4934
      %v4936 = vsel %vm4935, %v4928, %v4932
      %v4937 = vand.u32 2147483647, %v2814
      %vm4938 = vcmp.eq.f32.partialorder %v4937, 8.507059e+37
      %v4939 = vand.u32 %v2814, 2147483648
      %v4940 = vor.u32 1.1754944e-38, %v4939
      %v4941 = vsel %vm4938, %v4940, %v4936
      %v4942 = vmul.f32 1.0, %v4941
      %v4943 = vrcp.pop %v2815
      %v4944 = vmul.f32 %v2815, %v4943
      %v4945 = vsub.f32 1.0, %v4944
      %v4946 = vmul.f32 %v4943, %v4945
      %v4947 = vadd.f32 %v4943, %v4946
      %vm4948 = vweird.f32 %v2815
      %vm4949 = vweird.f32 %v4943
      %vm4950 = vmor %vm4948, %vm4949
      %v4951 = vsel %vm4950, %v4943, %v4947
      %v4952 = vand.u32 2147483647, %v2815
      %vm4953 = vcmp.eq.f32.partialorder %v4952, 8.507059e+37
      %v4954 = vand.u32 %v2815, 2147483648
      %v4955 = vor.u32 1.1754944e-38, %v4954
      %v4956 = vsel %vm4953, %v4955, %v4951
      %v4957 = vmul.f32 1.0, %v4956
      %v4958 = vrcp.pop %v2816
      %v4959 = vmul.f32 %v2816, %v4958
      %v4960 = vsub.f32 1.0, %v4959
      %v4961 = vmul.f32 %v4958, %v4960
      %v4962 = vadd.f32 %v4958, %v4961
      %vm4963 = vweird.f32 %v2816
      %vm4964 = vweird.f32 %v4958
      %vm4965 = vmor %vm4963, %vm4964
      %v4966 = vsel %vm4965, %v4958, %v4962
      %v4967 = vand.u32 2147483647, %v2816
      %vm4968 = vcmp.eq.f32.partialorder %v4967, 8.507059e+37
      %v4969 = vand.u32 %v2816, 2147483648
      %v4970 = vor.u32 1.1754944e-38, %v4969
      %v4971 = vsel %vm4968, %v4970, %v4966
      %v4972 = vmul.f32 1.0, %v4971
      %v4973 = vrcp.pop %v2817
      %v4974 = vmul.f32 %v2817, %v4973
      %v4975 = vsub.f32 1.0, %v4974
      %v4976 = vmul.f32 %v4973, %v4975
      %v4977 = vadd.f32 %v4973, %v4976
      %vm4978 = vweird.f32 %v2817
      %vm4979 = vweird.f32 %v4973
      %vm4980 = vmor %vm4978, %vm4979
      %v4981 = vsel %vm4980, %v4973, %v4977
      %v4982 = vand.u32 2147483647, %v2817
      %vm4983 = vcmp.eq.f32.partialorder %v4982, 8.507059e+37
      %v4984 = vand.u32 %v2817, 2147483648
      %v4985 = vor.u32 1.1754944e-38, %v4984
      %v4986 = vsel %vm4983, %v4985, %v4981
      %v4987 = vmul.f32 1.0, %v4986
      %v4988 = vrcp.pop %v2818
      %v4989 = vmul.f32 %v2818, %v4988
      %v4990 = vsub.f32 1.0, %v4989
      %v4991 = vmul.f32 %v4988, %v4990
      %v4992 = vadd.f32 %v4988, %v4991
      %vm4993 = vweird.f32 %v2818
      %vm4994 = vweird.f32 %v4988
      %vm4995 = vmor %vm4993, %vm4994
      %v4996 = vsel %vm4995, %v4988, %v4992
      %v4997 = vand.u32 2147483647, %v2818
      %vm4998 = vcmp.eq.f32.partialorder %v4997, 8.507059e+37
      %v4999 = vand.u32 %v2818, 2147483648
      %v5000 = vor.u32 1.1754944e-38, %v4999
      %v5001 = vsel %vm4998, %v5000, %v4996
      %v5002 = vmul.f32 1.0, %v5001
      %v5003 = vrcp.pop %v2819
      %v5004 = vmul.f32 %v2819, %v5003
      %v5005 = vsub.f32 1.0, %v5004
      %v5006 = vmul.f32 %v5003, %v5005
      %v5007 = vadd.f32 %v5003, %v5006
      %vm5008 = vweird.f32 %v2819
      %vm5009 = vweird.f32 %v5003
      %vm5010 = vmor %vm5008, %vm5009
      %v5011 = vsel %vm5010, %v5003, %v5007
      %v5012 = vand.u32 2147483647, %v2819
      %vm5013 = vcmp.eq.f32.partialorder %v5012, 8.507059e+37
      %v5014 = vand.u32 %v2819, 2147483648
      %v5015 = vor.u32 1.1754944e-38, %v5014
      %v5016 = vsel %vm5013, %v5015, %v5011
      %v5017 = vmul.f32 1.0, %v5016
      %v5018 = vrcp.pop %v2820
      %v5019 = vmul.f32 %v2820, %v5018
      %v5020 = vsub.f32 1.0, %v5019
      %v5021 = vmul.f32 %v5018, %v5020
      %v5022 = vadd.f32 %v5018, %v5021
      %vm5023 = vweird.f32 %v2820
      %vm5024 = vweird.f32 %v5018
      %vm5025 = vmor %vm5023, %vm5024
      %v5026 = vsel %vm5025, %v5018, %v5022
      %v5027 = vand.u32 2147483647, %v2820
      %vm5028 = vcmp.eq.f32.partialorder %v5027, 8.507059e+37
      %v5029 = vand.u32 %v2820, 2147483648
      %v5030 = vor.u32 1.1754944e-38, %v5029
      %v5031 = vsel %vm5028, %v5030, %v5026
      %v5032 = vmul.f32 1.0, %v5031
      %v5033 = vrcp.pop %v2821
      %v5034 = vmul.f32 %v2821, %v5033
      %v5035 = vsub.f32 1.0, %v5034
      %v5036 = vmul.f32 %v5033, %v5035
      %v5037 = vadd.f32 %v5033, %v5036
      %vm5038 = vweird.f32 %v2821
      %vm5039 = vweird.f32 %v5033
      %vm5040 = vmor %vm5038, %vm5039
      %v5041 = vsel %vm5040, %v5033, %v5037
      %v5042 = vand.u32 2147483647, %v2821
      %vm5043 = vcmp.eq.f32.partialorder %v5042, 8.507059e+37
      %v5044 = vand.u32 %v2821, 2147483648
      %v5045 = vor.u32 1.1754944e-38, %v5044
      %v5046 = vsel %vm5043, %v5045, %v5041
      %v5047 = vmul.f32 1.0, %v5046
      %v5048 = vrcp.pop %v2822
      %v5049 = vmul.f32 %v2822, %v5048
      %v5050 = vsub.f32 1.0, %v5049
      %v5051 = vmul.f32 %v5048, %v5050
      %v5052 = vadd.f32 %v5048, %v5051
      %vm5053 = vweird.f32 %v2822
      %vm5054 = vweird.f32 %v5048
      %vm5055 = vmor %vm5053, %vm5054
      %v5056 = vsel %vm5055, %v5048, %v5052
      %v5057 = vand.u32 2147483647, %v2822
      %vm5058 = vcmp.eq.f32.partialorder %v5057, 8.507059e+37
      %v5059 = vand.u32 %v2822, 2147483648
      %v5060 = vor.u32 1.1754944e-38, %v5059
      %v5061 = vsel %vm5058, %v5060, %v5056
      %v5062 = vmul.f32 1.0, %v5061
      %v5063 = vrcp.pop %v2823
      %v5064 = vmul.f32 %v2823, %v5063
      %v5065 = vsub.f32 1.0, %v5064
      %v5066 = vmul.f32 %v5063, %v5065
      %v5067 = vadd.f32 %v5063, %v5066
      %vm5068 = vweird.f32 %v2823
      %vm5069 = vweird.f32 %v5063
      %vm5070 = vmor %vm5068, %vm5069
      %v5071 = vsel %vm5070, %v5063, %v5067
      %v5072 = vand.u32 2147483647, %v2823
      %vm5073 = vcmp.eq.f32.partialorder %v5072, 8.507059e+37
      %v5074 = vand.u32 %v2823, 2147483648
      %v5075 = vor.u32 1.1754944e-38, %v5074
      %v5076 = vsel %vm5073, %v5075, %v5071
      %v5077 = vmul.f32 1.0, %v5076
      %v5078 = vrcp.pop %v2824
      %v5079 = vmul.f32 %v2824, %v5078
      %v5080 = vsub.f32 1.0, %v5079
      %v5081 = vmul.f32 %v5078, %v5080
      %v5082 = vadd.f32 %v5078, %v5081
      %vm5083 = vweird.f32 %v2824
      %vm5084 = vweird.f32 %v5078
      %vm5085 = vmor %vm5083, %vm5084
      %v5086 = vsel %vm5085, %v5078, %v5082
      %v5087 = vand.u32 2147483647, %v2824
      %vm5088 = vcmp.eq.f32.partialorder %v5087, 8.507059e+37
      %v5089 = vand.u32 %v2824, 2147483648
      %v5090 = vor.u32 1.1754944e-38, %v5089
      %v5091 = vsel %vm5088, %v5090, %v5086
      %v5092 = vmul.f32 1.0, %v5091
      %v5093 = vrcp.pop %v2825
      %v5094 = vmul.f32 %v2825, %v5093
      %v5095 = vsub.f32 1.0, %v5094
      %v5096 = vmul.f32 %v5093, %v5095
      %v5097 = vadd.f32 %v5093, %v5096
      %vm5098 = vweird.f32 %v2825
      %vm5099 = vweird.f32 %v5093
      %vm5100 = vmor %vm5098, %vm5099
      %v5101 = vsel %vm5100, %v5093, %v5097
      %v5102 = vand.u32 2147483647, %v2825
      %vm5103 = vcmp.eq.f32.partialorder %v5102, 8.507059e+37
      %v5104 = vand.u32 %v2825, 2147483648
      %v5105 = vor.u32 1.1754944e-38, %v5104
      %v5106 = vsel %vm5103, %v5105, %v5101
      %v5107 = vmul.f32 1.0, %v5106
      %v5108 = vrcp.pop %v2826
      %v5109 = vmul.f32 %v2826, %v5108
      %v5110 = vsub.f32 1.0, %v5109
      %v5111 = vmul.f32 %v5108, %v5110
      %v5112 = vadd.f32 %v5108, %v5111
      %vm5113 = vweird.f32 %v2826
      %vm5114 = vweird.f32 %v5108
      %vm5115 = vmor %vm5113, %vm5114
      %v5116 = vsel %vm5115, %v5108, %v5112
      %v5117 = vand.u32 2147483647, %v2826
      %vm5118 = vcmp.eq.f32.partialorder %v5117, 8.507059e+37
      %v5119 = vand.u32 %v2826, 2147483648
      %v5120 = vor.u32 1.1754944e-38, %v5119
      %v5121 = vsel %vm5118, %v5120, %v5116
      %v5122 = vmul.f32 1.0, %v5121
      %v5123 = vrcp.pop %v2827
      %v5124 = vmul.f32 %v2827, %v5123
      %v5125 = vsub.f32 1.0, %v5124
      %v5126 = vmul.f32 %v5123, %v5125
      %v5127 = vadd.f32 %v5123, %v5126
      %vm5128 = vweird.f32 %v2827
      %vm5129 = vweird.f32 %v5123
      %vm5130 = vmor %vm5128, %vm5129
      %v5131 = vsel %vm5130, %v5123, %v5127
      %v5132 = vand.u32 2147483647, %v2827
      %vm5133 = vcmp.eq.f32.partialorder %v5132, 8.507059e+37
      %v5134 = vand.u32 %v2827, 2147483648
      %v5135 = vor.u32 1.1754944e-38, %v5134
      %v5136 = vsel %vm5133, %v5135, %v5131
      %v5137 = vmul.f32 1.0, %v5136
      %v5138 = vrcp.pop %v2828
      %v5139 = vmul.f32 %v2828, %v5138
      %v5140 = vsub.f32 1.0, %v5139
      %v5141 = vmul.f32 %v5138, %v5140
      %v5142 = vadd.f32 %v5138, %v5141
      %vm5143 = vweird.f32 %v2828
      %vm5144 = vweird.f32 %v5138
      %vm5145 = vmor %vm5143, %vm5144
      %v5146 = vsel %vm5145, %v5138, %v5142
      %v5147 = vand.u32 2147483647, %v2828
      %vm5148 = vcmp.eq.f32.partialorder %v5147, 8.507059e+37
      %v5149 = vand.u32 %v2828, 2147483648
      %v5150 = vor.u32 1.1754944e-38, %v5149
      %v5151 = vsel %vm5148, %v5150, %v5146
      %v5152 = vmul.f32 1.0, %v5151
      %v5153 = vrcp.pop %v2829
      %v5154 = vmul.f32 %v2829, %v5153
      %v5155 = vsub.f32 1.0, %v5154
      %v5156 = vmul.f32 %v5153, %v5155
      %v5157 = vadd.f32 %v5153, %v5156
      %vm5158 = vweird.f32 %v2829
      %vm5159 = vweird.f32 %v5153
      %vm5160 = vmor %vm5158, %vm5159
      %v5161 = vsel %vm5160, %v5153, %v5157
      %v5162 = vand.u32 2147483647, %v2829
      %vm5163 = vcmp.eq.f32.partialorder %v5162, 8.507059e+37
      %v5164 = vand.u32 %v2829, 2147483648
      %v5165 = vor.u32 1.1754944e-38, %v5164
      %v5166 = vsel %vm5163, %v5165, %v5161
      %v5167 = vmul.f32 1.0, %v5166
      %v5168 = vrcp.pop %v2830
      %v5169 = vmul.f32 %v2830, %v5168
      %v5170 = vsub.f32 1.0, %v5169
      %v5171 = vmul.f32 %v5168, %v5170
      %v5172 = vadd.f32 %v5168, %v5171
      %vm5173 = vweird.f32 %v2830
      %vm5174 = vweird.f32 %v5168
      %vm5175 = vmor %vm5173, %vm5174
      %v5176 = vsel %vm5175, %v5168, %v5172
      %v5177 = vand.u32 2147483647, %v2830
      %vm5178 = vcmp.eq.f32.partialorder %v5177, 8.507059e+37
      %v5179 = vand.u32 %v2830, 2147483648
      %v5180 = vor.u32 1.1754944e-38, %v5179
      %v5181 = vsel %vm5178, %v5180, %v5176
      %v5182 = vmul.f32 1.0, %v5181
      %v5183 = vrcp.pop %v2831
      %v5184 = vmul.f32 %v2831, %v5183
      %v5185 = vsub.f32 1.0, %v5184
      %v5186 = vmul.f32 %v5183, %v5185
      %v5187 = vadd.f32 %v5183, %v5186
      %vm5188 = vweird.f32 %v2831
      %vm5189 = vweird.f32 %v5183
      %vm5190 = vmor %vm5188, %vm5189
      %v5191 = vsel %vm5190, %v5183, %v5187
      %v5192 = vand.u32 2147483647, %v2831
      %vm5193 = vcmp.eq.f32.partialorder %v5192, 8.507059e+37
      %v5194 = vand.u32 %v2831, 2147483648
      %v5195 = vor.u32 1.1754944e-38, %v5194
      %v5196 = vsel %vm5193, %v5195, %v5191
      %v5197 = vmul.f32 1.0, %v5196
      %v5198 = vrcp.pop %v2832
      %v5199 = vmul.f32 %v2832, %v5198
      %v5200 = vsub.f32 1.0, %v5199
      %v5201 = vmul.f32 %v5198, %v5200
      %v5202 = vadd.f32 %v5198, %v5201
      %vm5203 = vweird.f32 %v2832
      %vm5204 = vweird.f32 %v5198
      %vm5205 = vmor %vm5203, %vm5204
      %v5206 = vsel %vm5205, %v5198, %v5202
      %v5207 = vand.u32 2147483647, %v2832
      %vm5208 = vcmp.eq.f32.partialorder %v5207, 8.507059e+37
      %v5209 = vand.u32 %v2832, 2147483648
      %v5210 = vor.u32 1.1754944e-38, %v5209
      %v5211 = vsel %vm5208, %v5210, %v5206
      %v5212 = vmul.f32 1.0, %v5211
      %v5213 = vrcp.pop %v2833
      %v5214 = vmul.f32 %v2833, %v5213
      %v5215 = vsub.f32 1.0, %v5214
      %v5216 = vmul.f32 %v5213, %v5215
      %v5217 = vadd.f32 %v5213, %v5216
      %vm5218 = vweird.f32 %v2833
      %vm5219 = vweird.f32 %v5213
      %vm5220 = vmor %vm5218, %vm5219
      %v5221 = vsel %vm5220, %v5213, %v5217
      %v5222 = vand.u32 2147483647, %v2833
      %vm5223 = vcmp.eq.f32.partialorder %v5222, 8.507059e+37
      %v5224 = vand.u32 %v2833, 2147483648
      %v5225 = vor.u32 1.1754944e-38, %v5224
      %v5226 = vsel %vm5223, %v5225, %v5221
      %v5227 = vmul.f32 1.0, %v5226
      %v5228 = vrcp.pop %v2834
      %v5229 = vmul.f32 %v2834, %v5228
      %v5230 = vsub.f32 1.0, %v5229
      %v5231 = vmul.f32 %v5228, %v5230
      %v5232 = vadd.f32 %v5228, %v5231
      %vm5233 = vweird.f32 %v2834
      %vm5234 = vweird.f32 %v5228
      %vm5235 = vmor %vm5233, %vm5234
      %v5236 = vsel %vm5235, %v5228, %v5232
      %v5237 = vand.u32 2147483647, %v2834
      %vm5238 = vcmp.eq.f32.partialorder %v5237, 8.507059e+37
      %v5239 = vand.u32 %v2834, 2147483648
      %v5240 = vor.u32 1.1754944e-38, %v5239
      %v5241 = vsel %vm5238, %v5240, %v5236
      %v5242 = vmul.f32 1.0, %v5241
      %v5243 = vrcp.pop %v2835
      %v5244 = vmul.f32 %v2835, %v5243
      %v5245 = vsub.f32 1.0, %v5244
      %v5246 = vmul.f32 %v5243, %v5245
      %v5247 = vadd.f32 %v5243, %v5246
      %vm5248 = vweird.f32 %v2835
      %vm5249 = vweird.f32 %v5243
      %vm5250 = vmor %vm5248, %vm5249
      %v5251 = vsel %vm5250, %v5243, %v5247
      %v5252 = vand.u32 2147483647, %v2835
      %vm5253 = vcmp.eq.f32.partialorder %v5252, 8.507059e+37
      %v5254 = vand.u32 %v2835, 2147483648
      %v5255 = vor.u32 1.1754944e-38, %v5254
      %v5256 = vsel %vm5253, %v5255, %v5251
      %v5257 = vmul.f32 1.0, %v5256
      %v5258 = vrcp.pop %v2836
      %v5259 = vmul.f32 %v2836, %v5258
      %v5260 = vsub.f32 1.0, %v5259
      %v5261 = vmul.f32 %v5258, %v5260
      %v5262 = vadd.f32 %v5258, %v5261
      %vm5263 = vweird.f32 %v2836
      %vm5264 = vweird.f32 %v5258
      %vm5265 = vmor %vm5263, %vm5264
      %v5266 = vsel %vm5265, %v5258, %v5262
      %v5267 = vand.u32 2147483647, %v2836
      %vm5268 = vcmp.eq.f32.partialorder %v5267, 8.507059e+37
      %v5269 = vand.u32 %v2836, 2147483648
      %v5270 = vor.u32 1.1754944e-38, %v5269
      %v5271 = vsel %vm5268, %v5270, %v5266
      %v5272 = vmul.f32 1.0, %v5271
      %v5273 = vrcp.pop %v2837
      %v5274 = vmul.f32 %v2837, %v5273
      %v5275 = vsub.f32 1.0, %v5274
      %v5276 = vmul.f32 %v5273, %v5275
      %v5277 = vadd.f32 %v5273, %v5276
      %vm5278 = vweird.f32 %v2837
      %vm5279 = vweird.f32 %v5273
      %vm5280 = vmor %vm5278, %vm5279
      %v5281 = vsel %vm5280, %v5273, %v5277
      %v5282 = vand.u32 2147483647, %v2837
      %vm5283 = vcmp.eq.f32.partialorder %v5282, 8.507059e+37
      %v5284 = vand.u32 %v2837, 2147483648
      %v5285 = vor.u32 1.1754944e-38, %v5284
      %v5286 = vsel %vm5283, %v5285, %v5281
      %v5287 = vmul.f32 1.0, %v5286
      %v5288 = vrcp.pop %v2838
      %v5289 = vmul.f32 %v2838, %v5288
      %v5290 = vsub.f32 1.0, %v5289
      %v5291 = vmul.f32 %v5288, %v5290
      %v5292 = vadd.f32 %v5288, %v5291
      %vm5293 = vweird.f32 %v2838
      %vm5294 = vweird.f32 %v5288
      %vm5295 = vmor %vm5293, %vm5294
      %v5296 = vsel %vm5295, %v5288, %v5292
      %v5297 = vand.u32 2147483647, %v2838
      %vm5298 = vcmp.eq.f32.partialorder %v5297, 8.507059e+37
      %v5299 = vand.u32 %v2838, 2147483648
      %v5300 = vor.u32 1.1754944e-38, %v5299
      %v5301 = vsel %vm5298, %v5300, %v5296
      %v5302 = vmul.f32 1.0, %v5301
      %v5303 = vrcp.pop %v2839
      %v5304 = vmul.f32 %v2839, %v5303
      %v5305 = vsub.f32 1.0, %v5304
      %v5306 = vmul.f32 %v5303, %v5305
      %v5307 = vadd.f32 %v5303, %v5306
      %vm5308 = vweird.f32 %v2839
      %vm5309 = vweird.f32 %v5303
      %vm5310 = vmor %vm5308, %vm5309
      %v5311 = vsel %vm5310, %v5303, %v5307
      %v5312 = vand.u32 2147483647, %v2839
      %vm5313 = vcmp.eq.f32.partialorder %v5312, 8.507059e+37
      %v5314 = vand.u32 %v2839, 2147483648
      %v5315 = vor.u32 1.1754944e-38, %v5314
      %v5316 = vsel %vm5313, %v5315, %v5311
      %v5317 = vmul.f32 1.0, %v5316
      %v5318 = vrcp.pop %v2840
      %v5319 = vmul.f32 %v2840, %v5318
      %v5320 = vsub.f32 1.0, %v5319
      %v5321 = vmul.f32 %v5318, %v5320
      %v5322 = vadd.f32 %v5318, %v5321
      %vm5323 = vweird.f32 %v2840
      %vm5324 = vweird.f32 %v5318
      %vm5325 = vmor %vm5323, %vm5324
      %v5326 = vsel %vm5325, %v5318, %v5322
      %v5327 = vand.u32 2147483647, %v2840
      %vm5328 = vcmp.eq.f32.partialorder %v5327, 8.507059e+37
      %v5329 = vand.u32 %v2840, 2147483648
      %v5330 = vor.u32 1.1754944e-38, %v5329
      %v5331 = vsel %vm5328, %v5330, %v5326
      %v5332 = vmul.f32 1.0, %v5331
      %v5333 = vrcp.pop %v2841
      %v5334 = vmul.f32 %v2841, %v5333
      %v5335 = vsub.f32 1.0, %v5334
      %v5336 = vmul.f32 %v5333, %v5335
      %v5337 = vadd.f32 %v5333, %v5336
      %vm5338 = vweird.f32 %v2841
      %vm5339 = vweird.f32 %v5333
      %vm5340 = vmor %vm5338, %vm5339
      %v5341 = vsel %vm5340, %v5333, %v5337
      %v5342 = vand.u32 2147483647, %v2841
      %vm5343 = vcmp.eq.f32.partialorder %v5342, 8.507059e+37
      %v5344 = vand.u32 %v2841, 2147483648
      %v5345 = vor.u32 1.1754944e-38, %v5344
      %v5346 = vsel %vm5343, %v5345, %v5341
      %v5347 = vmul.f32 1.0, %v5346
      %v5348 = vrcp.pop %v2842
      %v5349 = vmul.f32 %v2842, %v5348
      %v5350 = vsub.f32 1.0, %v5349
      %v5351 = vmul.f32 %v5348, %v5350
      %v5352 = vadd.f32 %v5348, %v5351
      %vm5353 = vweird.f32 %v2842
      %vm5354 = vweird.f32 %v5348
      %vm5355 = vmor %vm5353, %vm5354
      %v5356 = vsel %vm5355, %v5348, %v5352
      %v5357 = vand.u32 2147483647, %v2842
      %vm5358 = vcmp.eq.f32.partialorder %v5357, 8.507059e+37
      %v5359 = vand.u32 %v2842, 2147483648
      %v5360 = vor.u32 1.1754944e-38, %v5359
      %v5361 = vsel %vm5358, %v5360, %v5356
      %v5362 = vmul.f32 1.0, %v5361
      %v5363 = vrcp.pop %v2843
      %v5364 = vmul.f32 %v2843, %v5363
      %v5365 = vsub.f32 1.0, %v5364
      %v5366 = vmul.f32 %v5363, %v5365
      %v5367 = vadd.f32 %v5363, %v5366
      %vm5368 = vweird.f32 %v2843
      %vm5369 = vweird.f32 %v5363
      %vm5370 = vmor %vm5368, %vm5369
      %v5371 = vsel %vm5370, %v5363, %v5367
      %v5372 = vand.u32 2147483647, %v2843
      %vm5373 = vcmp.eq.f32.partialorder %v5372, 8.507059e+37
      %v5374 = vand.u32 %v2843, 2147483648
      %v5375 = vor.u32 1.1754944e-38, %v5374
      %v5376 = vsel %vm5373, %v5375, %v5371
      %v5377 = vmul.f32 1.0, %v5376
      %v5378 = vrcp.pop %v2844
      %v5379 = vmul.f32 %v2844, %v5378
      %v5380 = vsub.f32 1.0, %v5379
      %v5381 = vmul.f32 %v5378, %v5380
      %v5382 = vadd.f32 %v5378, %v5381
      %vm5383 = vweird.f32 %v2844
      %vm5384 = vweird.f32 %v5378
      %vm5385 = vmor %vm5383, %vm5384
      %v5386 = vsel %vm5385, %v5378, %v5382
      %v5387 = vand.u32 2147483647, %v2844
      %vm5388 = vcmp.eq.f32.partialorder %v5387, 8.507059e+37
      %v5389 = vand.u32 %v2844, 2147483648
      %v5390 = vor.u32 1.1754944e-38, %v5389
      %v5391 = vsel %vm5388, %v5390, %v5386
      %v5392 = vmul.f32 1.0, %v5391
      %v5393 = vrcp.pop %v2845
      %v5394 = vmul.f32 %v2845, %v5393
      %v5395 = vsub.f32 1.0, %v5394
      %v5396 = vmul.f32 %v5393, %v5395
      %v5397 = vadd.f32 %v5393, %v5396
      %vm5398 = vweird.f32 %v2845
      %vm5399 = vweird.f32 %v5393
      %vm5400 = vmor %vm5398, %vm5399
      %v5401 = vsel %vm5400, %v5393, %v5397
      %v5402 = vand.u32 2147483647, %v2845
      %vm5403 = vcmp.eq.f32.partialorder %v5402, 8.507059e+37
      %v5404 = vand.u32 %v2845, 2147483648
      %v5405 = vor.u32 1.1754944e-38, %v5404
      %v5406 = vsel %vm5403, %v5405, %v5401
      %v5407 = vmul.f32 1.0, %v5406
      %v5408 = vrcp.pop %v2846
      %v5409 = vmul.f32 %v2846, %v5408
      %v5410 = vsub.f32 1.0, %v5409
      %v5411 = vmul.f32 %v5408, %v5410
      %v5412 = vadd.f32 %v5408, %v5411
      %vm5413 = vweird.f32 %v2846
      %vm5414 = vweird.f32 %v5408
      %vm5415 = vmor %vm5413, %vm5414
      %v5416 = vsel %vm5415, %v5408, %v5412
      %v5417 = vand.u32 2147483647, %v2846
      %vm5418 = vcmp.eq.f32.partialorder %v5417, 8.507059e+37
      %v5419 = vand.u32 %v2846, 2147483648
      %v5420 = vor.u32 1.1754944e-38, %v5419
      %v5421 = vsel %vm5418, %v5420, %v5416
      %v5422 = vmul.f32 1.0, %v5421
      %v5423 = vrcp.pop %v2847
      %v5424 = vmul.f32 %v2847, %v5423
      %v5425 = vsub.f32 1.0, %v5424
      %v5426 = vmul.f32 %v5423, %v5425
      %v5427 = vadd.f32 %v5423, %v5426
      %vm5428 = vweird.f32 %v2847
      %vm5429 = vweird.f32 %v5423
      %vm5430 = vmor %vm5428, %vm5429
      %v5431 = vsel %vm5430, %v5423, %v5427
      %v5432 = vand.u32 2147483647, %v2847
      %vm5433 = vcmp.eq.f32.partialorder %v5432, 8.507059e+37
      %v5434 = vand.u32 %v2847, 2147483648
      %v5435 = vor.u32 1.1754944e-38, %v5434
      %v5436 = vsel %vm5433, %v5435, %v5431
      %v5437 = vmul.f32 1.0, %v5436
      %v5438 = vrcp.pop %v2848
      %v5439 = vmul.f32 %v2848, %v5438
      %v5440 = vsub.f32 1.0, %v5439
      %v5441 = vmul.f32 %v5438, %v5440
      %v5442 = vadd.f32 %v5438, %v5441
      %vm5443 = vweird.f32 %v2848
      %vm5444 = vweird.f32 %v5438
      %vm5445 = vmor %vm5443, %vm5444
      %v5446 = vsel %vm5445, %v5438, %v5442
      %v5447 = vand.u32 2147483647, %v2848
      %vm5448 = vcmp.eq.f32.partialorder %v5447, 8.507059e+37
      %v5449 = vand.u32 %v2848, 2147483648
      %v5450 = vor.u32 1.1754944e-38, %v5449
      %v5451 = vsel %vm5448, %v5450, %v5446
      %v5452 = vmul.f32 1.0, %v5451
      %v5453 = vrcp.pop %v2849
      %v5454 = vmul.f32 %v2849, %v5453
      %v5455 = vsub.f32 1.0, %v5454
      %v5456 = vmul.f32 %v5453, %v5455
      %v5457 = vadd.f32 %v5453, %v5456
      %vm5458 = vweird.f32 %v2849
      %vm5459 = vweird.f32 %v5453
      %vm5460 = vmor %vm5458, %vm5459
      %v5461 = vsel %vm5460, %v5453, %v5457
      %v5462 = vand.u32 2147483647, %v2849
      %vm5463 = vcmp.eq.f32.partialorder %v5462, 8.507059e+37
      %v5464 = vand.u32 %v2849, 2147483648
      %v5465 = vor.u32 1.1754944e-38, %v5464
      %v5466 = vsel %vm5463, %v5465, %v5461
      %v5467 = vmul.f32 1.0, %v5466
      %v5468 = vrcp.pop %v2850
      %v5469 = vmul.f32 %v2850, %v5468
      %v5470 = vsub.f32 1.0, %v5469
      %v5471 = vmul.f32 %v5468, %v5470
      %v5472 = vadd.f32 %v5468, %v5471
      %vm5473 = vweird.f32 %v2850
      %vm5474 = vweird.f32 %v5468
      %vm5475 = vmor %vm5473, %vm5474
      %v5476 = vsel %vm5475, %v5468, %v5472
      %v5477 = vand.u32 2147483647, %v2850
      %vm5478 = vcmp.eq.f32.partialorder %v5477, 8.507059e+37
      %v5479 = vand.u32 %v2850, 2147483648
      %v5480 = vor.u32 1.1754944e-38, %v5479
      %v5481 = vsel %vm5478, %v5480, %v5476
      %v5482 = vmul.f32 1.0, %v5481
      %v5483 = vrcp.pop %v2851
      %v5484 = vmul.f32 %v2851, %v5483
      %v5485 = vsub.f32 1.0, %v5484
      %v5486 = vmul.f32 %v5483, %v5485
      %v5487 = vadd.f32 %v5483, %v5486
      %vm5488 = vweird.f32 %v2851
      %vm5489 = vweird.f32 %v5483
      %vm5490 = vmor %vm5488, %vm5489
      %v5491 = vsel %vm5490, %v5483, %v5487
      %v5492 = vand.u32 2147483647, %v2851
      %vm5493 = vcmp.eq.f32.partialorder %v5492, 8.507059e+37
      %v5494 = vand.u32 %v2851, 2147483648
      %v5495 = vor.u32 1.1754944e-38, %v5494
      %v5496 = vsel %vm5493, %v5495, %v5491
      %v5497 = vmul.f32 1.0, %v5496
      %v5498 = vrcp.pop %v2852
      %v5499 = vmul.f32 %v2852, %v5498
      %v5500 = vsub.f32 1.0, %v5499
      %v5501 = vmul.f32 %v5498, %v5500
      %v5502 = vadd.f32 %v5498, %v5501
      %vm5503 = vweird.f32 %v2852
      %vm5504 = vweird.f32 %v5498
      %vm5505 = vmor %vm5503, %vm5504
      %v5506 = vsel %vm5505, %v5498, %v5502
      %v5507 = vand.u32 2147483647, %v2852
      %vm5508 = vcmp.eq.f32.partialorder %v5507, 8.507059e+37
      %v5509 = vand.u32 %v2852, 2147483648
      %v5510 = vor.u32 1.1754944e-38, %v5509
      %v5511 = vsel %vm5508, %v5510, %v5506
      %v5512 = vmul.f32 1.0, %v5511
      %v5513 = vrcp.pop %v2853
      %v5514 = vmul.f32 %v2853, %v5513
      %v5515 = vsub.f32 1.0, %v5514
      %v5516 = vmul.f32 %v5513, %v5515
      %v5517 = vadd.f32 %v5513, %v5516
      %vm5518 = vweird.f32 %v2853
      %vm5519 = vweird.f32 %v5513
      %vm5520 = vmor %vm5518, %vm5519
      %v5521 = vsel %vm5520, %v5513, %v5517
      %v5522 = vand.u32 2147483647, %v2853
      %vm5523 = vcmp.eq.f32.partialorder %v5522, 8.507059e+37
      %v5524 = vand.u32 %v2853, 2147483648
      %v5525 = vor.u32 1.1754944e-38, %v5524
      %v5526 = vsel %vm5523, %v5525, %v5521
      %v5527 = vmul.f32 1.0, %v5526
      %v5528 = vrcp.pop %v2854
      %v5529 = vmul.f32 %v2854, %v5528
      %v5530 = vsub.f32 1.0, %v5529
      %v5531 = vmul.f32 %v5528, %v5530
      %v5532 = vadd.f32 %v5528, %v5531
      %vm5533 = vweird.f32 %v2854
      %vm5534 = vweird.f32 %v5528
      %vm5535 = vmor %vm5533, %vm5534
      %v5536 = vsel %vm5535, %v5528, %v5532
      %v5537 = vand.u32 2147483647, %v2854
      %vm5538 = vcmp.eq.f32.partialorder %v5537, 8.507059e+37
      %v5539 = vand.u32 %v2854, 2147483648
      %v5540 = vor.u32 1.1754944e-38, %v5539
      %v5541 = vsel %vm5538, %v5540, %v5536
      %v5542 = vmul.f32 1.0, %v5541
      %v5543 = vrcp.pop %v2855
      %v5544 = vmul.f32 %v2855, %v5543
      %v5545 = vsub.f32 1.0, %v5544
      %v5546 = vmul.f32 %v5543, %v5545
      %v5547 = vadd.f32 %v5543, %v5546
      %vm5548 = vweird.f32 %v2855
      %vm5549 = vweird.f32 %v5543
      %vm5550 = vmor %vm5548, %vm5549
      %v5551 = vsel %vm5550, %v5543, %v5547
      %v5552 = vand.u32 2147483647, %v2855
      %vm5553 = vcmp.eq.f32.partialorder %v5552, 8.507059e+37
      %v5554 = vand.u32 %v2855, 2147483648
      %v5555 = vor.u32 1.1754944e-38, %v5554
      %v5556 = vsel %vm5553, %v5555, %v5551
      %v5557 = vmul.f32 1.0, %v5556
      %v5558 = vrcp.pop %v2856
      %v5559 = vmul.f32 %v2856, %v5558
      %v5560 = vsub.f32 1.0, %v5559
      %v5561 = vmul.f32 %v5558, %v5560
      %v5562 = vadd.f32 %v5558, %v5561
      %vm5563 = vweird.f32 %v2856
      %vm5564 = vweird.f32 %v5558
      %vm5565 = vmor %vm5563, %vm5564
      %v5566 = vsel %vm5565, %v5558, %v5562
      %v5567 = vand.u32 2147483647, %v2856
      %vm5568 = vcmp.eq.f32.partialorder %v5567, 8.507059e+37
      %v5569 = vand.u32 %v2856, 2147483648
      %v5570 = vor.u32 1.1754944e-38, %v5569
      %v5571 = vsel %vm5568, %v5570, %v5566
      %v5572 = vmul.f32 1.0, %v5571
      %v5573 = vrcp.pop %v2857
      %v5574 = vmul.f32 %v2857, %v5573
      %v5575 = vsub.f32 1.0, %v5574
      %v5576 = vmul.f32 %v5573, %v5575
      %v5577 = vadd.f32 %v5573, %v5576
      %vm5578 = vweird.f32 %v2857
      %vm5579 = vweird.f32 %v5573
      %vm5580 = vmor %vm5578, %vm5579
      %v5581 = vsel %vm5580, %v5573, %v5577
      %v5582 = vand.u32 2147483647, %v2857
      %vm5583 = vcmp.eq.f32.partialorder %v5582, 8.507059e+37
      %v5584 = vand.u32 %v2857, 2147483648
      %v5585 = vor.u32 1.1754944e-38, %v5584
      %v5586 = vsel %vm5583, %v5585, %v5581
      %v5587 = vmul.f32 1.0, %v5586
      %v5588 = vrcp.pop %v2858
      %v5589 = vmul.f32 %v2858, %v5588
      %v5590 = vsub.f32 1.0, %v5589
      %v5591 = vmul.f32 %v5588, %v5590
      %v5592 = vadd.f32 %v5588, %v5591
      %vm5593 = vweird.f32 %v2858
      %vm5594 = vweird.f32 %v5588
      %vm5595 = vmor %vm5593, %vm5594
      %v5596 = vsel %vm5595, %v5588, %v5592
      %v5597 = vand.u32 2147483647, %v2858
      %vm5598 = vcmp.eq.f32.partialorder %v5597, 8.507059e+37
      %v5599 = vand.u32 %v2858, 2147483648
      %v5600 = vor.u32 1.1754944e-38, %v5599
      %v5601 = vsel %vm5598, %v5600, %v5596
      %v5602 = vmul.f32 1.0, %v5601
      %v5603 = vrcp.pop %v2859
      %v5604 = vmul.f32 %v2859, %v5603
      %v5605 = vsub.f32 1.0, %v5604
      %v5606 = vmul.f32 %v5603, %v5605
      %v5607 = vadd.f32 %v5603, %v5606
      %vm5608 = vweird.f32 %v2859
      %vm5609 = vweird.f32 %v5603
      %vm5610 = vmor %vm5608, %vm5609
      %v5611 = vsel %vm5610, %v5603, %v5607
      %v5612 = vand.u32 2147483647, %v2859
      %vm5613 = vcmp.eq.f32.partialorder %v5612, 8.507059e+37
      %v5614 = vand.u32 %v2859, 2147483648
      %v5615 = vor.u32 1.1754944e-38, %v5614
      %v5616 = vsel %vm5613, %v5615, %v5611
      %v5617 = vmul.f32 1.0, %v5616
      %v5618 = vrcp.pop %v2860
      %v5619 = vmul.f32 %v2860, %v5618
      %v5620 = vsub.f32 1.0, %v5619
      %v5621 = vmul.f32 %v5618, %v5620
      %v5622 = vadd.f32 %v5618, %v5621
      %vm5623 = vweird.f32 %v2860
      %vm5624 = vweird.f32 %v5618
      %vm5625 = vmor %vm5623, %vm5624
      %v5626 = vsel %vm5625, %v5618, %v5622
      %v5627 = vand.u32 2147483647, %v2860
      %vm5628 = vcmp.eq.f32.partialorder %v5627, 8.507059e+37
      %v5629 = vand.u32 %v2860, 2147483648
      %v5630 = vor.u32 1.1754944e-38, %v5629
      %v5631 = vsel %vm5628, %v5630, %v5626
      %v5632 = vmul.f32 1.0, %v5631
      %v5633 = vrcp.pop %v2861
      %v5634 = vmul.f32 %v2861, %v5633
      %v5635 = vsub.f32 1.0, %v5634
      %v5636 = vmul.f32 %v5633, %v5635
      %v5637 = vadd.f32 %v5633, %v5636
      %vm5638 = vweird.f32 %v2861
      %vm5639 = vweird.f32 %v5633
      %vm5640 = vmor %vm5638, %vm5639
      %v5641 = vsel %vm5640, %v5633, %v5637
      %v5642 = vand.u32 2147483647, %v2861
      %vm5643 = vcmp.eq.f32.partialorder %v5642, 8.507059e+37
      %v5644 = vand.u32 %v2861, 2147483648
      %v5645 = vor.u32 1.1754944e-38, %v5644
      %v5646 = vsel %vm5643, %v5645, %v5641
      %v5647 = vmul.f32 1.0, %v5646
      %v5648 = vrcp.pop %v2862
      %v5649 = vmul.f32 %v2862, %v5648
      %v5650 = vsub.f32 1.0, %v5649
      %v5651 = vmul.f32 %v5648, %v5650
      %v5652 = vadd.f32 %v5648, %v5651
      %vm5653 = vweird.f32 %v2862
      %vm5654 = vweird.f32 %v5648
      %vm5655 = vmor %vm5653, %vm5654
      %v5656 = vsel %vm5655, %v5648, %v5652
      %v5657 = vand.u32 2147483647, %v2862
      %vm5658 = vcmp.eq.f32.partialorder %v5657, 8.507059e+37
      %v5659 = vand.u32 %v2862, 2147483648
      %v5660 = vor.u32 1.1754944e-38, %v5659
      %v5661 = vsel %vm5658, %v5660, %v5656
      %v5662 = vmul.f32 1.0, %v5661
      %v5663 = vrcp.pop %v2863
      %v5664 = vmul.f32 %v2863, %v5663
      %v5665 = vsub.f32 1.0, %v5664
      %v5666 = vmul.f32 %v5663, %v5665
      %v5667 = vadd.f32 %v5663, %v5666
      %vm5668 = vweird.f32 %v2863
      %vm5669 = vweird.f32 %v5663
      %vm5670 = vmor %vm5668, %vm5669
      %v5671 = vsel %vm5670, %v5663, %v5667
      %v5672 = vand.u32 2147483647, %v2863
      %vm5673 = vcmp.eq.f32.partialorder %v5672, 8.507059e+37
      %v5674 = vand.u32 %v2863, 2147483648
      %v5675 = vor.u32 1.1754944e-38, %v5674
      %v5676 = vsel %vm5673, %v5675, %v5671
      %v5677 = vmul.f32 1.0, %v5676
      %v5678 = vrcp.pop %v2864
      %v5679 = vmul.f32 %v2864, %v5678
      %v5680 = vsub.f32 1.0, %v5679
      %v5681 = vmul.f32 %v5678, %v5680
      %v5682 = vadd.f32 %v5678, %v5681
      %vm5683 = vweird.f32 %v2864
      %vm5684 = vweird.f32 %v5678
      %vm5685 = vmor %vm5683, %vm5684
      %v5686 = vsel %vm5685, %v5678, %v5682
      %v5687 = vand.u32 2147483647, %v2864
      %vm5688 = vcmp.eq.f32.partialorder %v5687, 8.507059e+37
      %v5689 = vand.u32 %v2864, 2147483648
      %v5690 = vor.u32 1.1754944e-38, %v5689
      %v5691 = vsel %vm5688, %v5690, %v5686
      %v5692 = vmul.f32 1.0, %v5691
      %v5693 = vrcp.pop %v2865
      %v5694 = vmul.f32 %v2865, %v5693
      %v5695 = vsub.f32 1.0, %v5694
      %v5696 = vmul.f32 %v5693, %v5695
      %v5697 = vadd.f32 %v5693, %v5696
      %vm5698 = vweird.f32 %v2865
      %vm5699 = vweird.f32 %v5693
      %vm5700 = vmor %vm5698, %vm5699
      %v5701 = vsel %vm5700, %v5693, %v5697
      %v5702 = vand.u32 2147483647, %v2865
      %vm5703 = vcmp.eq.f32.partialorder %v5702, 8.507059e+37
      %v5704 = vand.u32 %v2865, 2147483648
      %v5705 = vor.u32 1.1754944e-38, %v5704
      %v5706 = vsel %vm5703, %v5705, %v5701
      %v5707 = vmul.f32 1.0, %v5706
      %v5708 = vrcp.pop %v2866
      %v5709 = vmul.f32 %v2866, %v5708
      %v5710 = vsub.f32 1.0, %v5709
      %v5711 = vmul.f32 %v5708, %v5710
      %v5712 = vadd.f32 %v5708, %v5711
      %vm5713 = vweird.f32 %v2866
      %vm5714 = vweird.f32 %v5708
      %vm5715 = vmor %vm5713, %vm5714
      %v5716 = vsel %vm5715, %v5708, %v5712
      %v5717 = vand.u32 2147483647, %v2866
      %vm5718 = vcmp.eq.f32.partialorder %v5717, 8.507059e+37
      %v5719 = vand.u32 %v2866, 2147483648
      %v5720 = vor.u32 1.1754944e-38, %v5719
      %v5721 = vsel %vm5718, %v5720, %v5716
      %v5722 = vmul.f32 1.0, %v5721
      %v5723 = vrcp.pop %v2867
      %v5724 = vmul.f32 %v2867, %v5723
      %v5725 = vsub.f32 1.0, %v5724
      %v5726 = vmul.f32 %v5723, %v5725
      %v5727 = vadd.f32 %v5723, %v5726
      %vm5728 = vweird.f32 %v2867
      %vm5729 = vweird.f32 %v5723
      %vm5730 = vmor %vm5728, %vm5729
      %v5731 = vsel %vm5730, %v5723, %v5727
      %v5732 = vand.u32 2147483647, %v2867
      %vm5733 = vcmp.eq.f32.partialorder %v5732, 8.507059e+37
      %v5734 = vand.u32 %v2867, 2147483648
      %v5735 = vor.u32 1.1754944e-38, %v5734
      %v5736 = vsel %vm5733, %v5735, %v5731
      %v5737 = vmul.f32 1.0, %v5736
      %v5738 = vrcp.pop %v2868
      %v5739 = vmul.f32 %v2868, %v5738
      %v5740 = vsub.f32 1.0, %v5739
      %v5741 = vmul.f32 %v5738, %v5740
      %v5742 = vadd.f32 %v5738, %v5741
      %vm5743 = vweird.f32 %v2868
      %vm5744 = vweird.f32 %v5738
      %vm5745 = vmor %vm5743, %vm5744
      %v5746 = vsel %vm5745, %v5738, %v5742
      %v5747 = vand.u32 2147483647, %v2868
      %vm5748 = vcmp.eq.f32.partialorder %v5747, 8.507059e+37
      %v5749 = vand.u32 %v2868, 2147483648
      %v5750 = vor.u32 1.1754944e-38, %v5749
      %v5751 = vsel %vm5748, %v5750, %v5746
      %v5752 = vmul.f32 1.0, %v5751
      %v5753 = vrcp.pop %v2869
      %v5754 = vmul.f32 %v2869, %v5753
      %v5755 = vsub.f32 1.0, %v5754
      %v5756 = vmul.f32 %v5753, %v5755
      %v5757 = vadd.f32 %v5753, %v5756
      %vm5758 = vweird.f32 %v2869
      %vm5759 = vweird.f32 %v5753
      %vm5760 = vmor %vm5758, %vm5759
      %v5761 = vsel %vm5760, %v5753, %v5757
      %v5762 = vand.u32 2147483647, %v2869
      %vm5763 = vcmp.eq.f32.partialorder %v5762, 8.507059e+37
      %v5764 = vand.u32 %v2869, 2147483648
      %v5765 = vor.u32 1.1754944e-38, %v5764
      %v5766 = vsel %vm5763, %v5765, %v5761
      %v5767 = vmul.f32 1.0, %v5766
      %v5768 = vrcp.pop %v2870
      %v5769 = vmul.f32 %v2870, %v5768
      %v5770 = vsub.f32 1.0, %v5769
      %v5771 = vmul.f32 %v5768, %v5770
      %v5772 = vadd.f32 %v5768, %v5771
      %vm5773 = vweird.f32 %v2870
      %vm5774 = vweird.f32 %v5768
      %vm5775 = vmor %vm5773, %vm5774
      %v5776 = vsel %vm5775, %v5768, %v5772
      %v5777 = vand.u32 2147483647, %v2870
      %vm5778 = vcmp.eq.f32.partialorder %v5777, 8.507059e+37
      %v5779 = vand.u32 %v2870, 2147483648
      %v5780 = vor.u32 1.1754944e-38, %v5779
      %v5781 = vsel %vm5778, %v5780, %v5776
      %v5782 = vmul.f32 1.0, %v5781
      %v5783 = vrcp.pop %v2871
      %v5784 = vmul.f32 %v2871, %v5783
      %v5785 = vsub.f32 1.0, %v5784
      %v5786 = vmul.f32 %v5783, %v5785
      %v5787 = vadd.f32 %v5783, %v5786
      %vm5788 = vweird.f32 %v2871
      %vm5789 = vweird.f32 %v5783
      %vm5790 = vmor %vm5788, %vm5789
      %v5791 = vsel %vm5790, %v5783, %v5787
      %v5792 = vand.u32 2147483647, %v2871
      %vm5793 = vcmp.eq.f32.partialorder %v5792, 8.507059e+37
      %v5794 = vand.u32 %v2871, 2147483648
      %v5795 = vor.u32 1.1754944e-38, %v5794
      %v5796 = vsel %vm5793, %v5795, %v5791
      %v5797 = vmul.f32 1.0, %v5796
      %v5798 = vrcp.pop %v2872
      %v5799 = vmul.f32 %v2872, %v5798
      %v5800 = vsub.f32 1.0, %v5799
      %v5801 = vmul.f32 %v5798, %v5800
      %v5802 = vadd.f32 %v5798, %v5801
      %vm5803 = vweird.f32 %v2872
      %vm5804 = vweird.f32 %v5798
      %vm5805 = vmor %vm5803, %vm5804
      %v5806 = vsel %vm5805, %v5798, %v5802
      %v5807 = vand.u32 2147483647, %v2872
      %vm5808 = vcmp.eq.f32.partialorder %v5807, 8.507059e+37
      %v5809 = vand.u32 %v2872, 2147483648
      %v5810 = vor.u32 1.1754944e-38, %v5809
      %v5811 = vsel %vm5808, %v5810, %v5806
      %v5812 = vmul.f32 1.0, %v5811
      %v5813 = vrcp.pop %v2873
      %v5814 = vmul.f32 %v2873, %v5813
      %v5815 = vsub.f32 1.0, %v5814
      %v5816 = vmul.f32 %v5813, %v5815
      %v5817 = vadd.f32 %v5813, %v5816
      %vm5818 = vweird.f32 %v2873
      %vm5819 = vweird.f32 %v5813
      %vm5820 = vmor %vm5818, %vm5819
      %v5821 = vsel %vm5820, %v5813, %v5817
      %v5822 = vand.u32 2147483647, %v2873
      %vm5823 = vcmp.eq.f32.partialorder %v5822, 8.507059e+37
      %v5824 = vand.u32 %v2873, 2147483648
      %v5825 = vor.u32 1.1754944e-38, %v5824
      %v5826 = vsel %vm5823, %v5825, %v5821
      %v5827 = vmul.f32 1.0, %v5826
      %v5828 = vrcp.pop %v2874
      %v5829 = vmul.f32 %v2874, %v5828
      %v5830 = vsub.f32 1.0, %v5829
      %v5831 = vmul.f32 %v5828, %v5830
      %v5832 = vadd.f32 %v5828, %v5831
      %vm5833 = vweird.f32 %v2874
      %vm5834 = vweird.f32 %v5828
      %vm5835 = vmor %vm5833, %vm5834
      %v5836 = vsel %vm5835, %v5828, %v5832
      %v5837 = vand.u32 2147483647, %v2874
      %vm5838 = vcmp.eq.f32.partialorder %v5837, 8.507059e+37
      %v5839 = vand.u32 %v2874, 2147483648
      %v5840 = vor.u32 1.1754944e-38, %v5839
      %v5841 = vsel %vm5838, %v5840, %v5836
      %v5842 = vmul.f32 1.0, %v5841
      %v5843 = vrcp.pop %v2875
      %v5844 = vmul.f32 %v2875, %v5843
      %v5845 = vsub.f32 1.0, %v5844
      %v5846 = vmul.f32 %v5843, %v5845
      %v5847 = vadd.f32 %v5843, %v5846
      %vm5848 = vweird.f32 %v2875
      %vm5849 = vweird.f32 %v5843
      %vm5850 = vmor %vm5848, %vm5849
      %v5851 = vsel %vm5850, %v5843, %v5847
      %v5852 = vand.u32 2147483647, %v2875
      %vm5853 = vcmp.eq.f32.partialorder %v5852, 8.507059e+37
      %v5854 = vand.u32 %v2875, 2147483648
      %v5855 = vor.u32 1.1754944e-38, %v5854
      %v5856 = vsel %vm5853, %v5855, %v5851
      %v5857 = vmul.f32 1.0, %v5856
      %v5858 = vrcp.pop %v2876
      %v5859 = vmul.f32 %v2876, %v5858
      %v5860 = vsub.f32 1.0, %v5859
      %v5861 = vmul.f32 %v5858, %v5860
      %v5862 = vadd.f32 %v5858, %v5861
      %vm5863 = vweird.f32 %v2876
      %vm5864 = vweird.f32 %v5858
      %vm5865 = vmor %vm5863, %vm5864
      %v5866 = vsel %vm5865, %v5858, %v5862
      %v5867 = vand.u32 2147483647, %v2876
      %vm5868 = vcmp.eq.f32.partialorder %v5867, 8.507059e+37
      %v5869 = vand.u32 %v2876, 2147483648
      %v5870 = vor.u32 1.1754944e-38, %v5869
      %v5871 = vsel %vm5868, %v5870, %v5866
      %v5872 = vmul.f32 1.0, %v5871
      %v5873 = vrcp.pop %v2877
      %v5874 = vmul.f32 %v2877, %v5873
      %v5875 = vsub.f32 1.0, %v5874
      %v5876 = vmul.f32 %v5873, %v5875
      %v5877 = vadd.f32 %v5873, %v5876
      %vm5878 = vweird.f32 %v2877
      %vm5879 = vweird.f32 %v5873
      %vm5880 = vmor %vm5878, %vm5879
      %v5881 = vsel %vm5880, %v5873, %v5877
      %v5882 = vand.u32 2147483647, %v2877
      %vm5883 = vcmp.eq.f32.partialorder %v5882, 8.507059e+37
      %v5884 = vand.u32 %v2877, 2147483648
      %v5885 = vor.u32 1.1754944e-38, %v5884
      %v5886 = vsel %vm5883, %v5885, %v5881
      %v5887 = vmul.f32 1.0, %v5886
      %v5888 = vrcp.pop %v2878
      %v5889 = vmul.f32 %v2878, %v5888
      %v5890 = vsub.f32 1.0, %v5889
      %v5891 = vmul.f32 %v5888, %v5890
      %v5892 = vadd.f32 %v5888, %v5891
      %vm5893 = vweird.f32 %v2878
      %vm5894 = vweird.f32 %v5888
      %vm5895 = vmor %vm5893, %vm5894
      %v5896 = vsel %vm5895, %v5888, %v5892
      %v5897 = vand.u32 2147483647, %v2878
      %vm5898 = vcmp.eq.f32.partialorder %v5897, 8.507059e+37
      %v5899 = vand.u32 %v2878, 2147483648
      %v5900 = vor.u32 1.1754944e-38, %v5899
      %v5901 = vsel %vm5898, %v5900, %v5896
      %v5902 = vmul.f32 1.0, %v5901
      %v5903 = vrcp.pop %v2879
      %v5904 = vmul.f32 %v2879, %v5903
      %v5905 = vsub.f32 1.0, %v5904
      %v5906 = vmul.f32 %v5903, %v5905
      %v5907 = vadd.f32 %v5903, %v5906
      %vm5908 = vweird.f32 %v2879
      %vm5909 = vweird.f32 %v5903
      %vm5910 = vmor %vm5908, %vm5909
      %v5911 = vsel %vm5910, %v5903, %v5907
      %v5912 = vand.u32 2147483647, %v2879
      %vm5913 = vcmp.eq.f32.partialorder %v5912, 8.507059e+37
      %v5914 = vand.u32 %v2879, 2147483648
      %v5915 = vor.u32 1.1754944e-38, %v5914
      %v5916 = vsel %vm5913, %v5915, %v5911
      %v5917 = vmul.f32 1.0, %v5916
      %v5918 = vrcp.pop %v2880
      %v5919 = vmul.f32 %v2880, %v5918
      %v5920 = vsub.f32 1.0, %v5919
      %v5921 = vmul.f32 %v5918, %v5920
      %v5922 = vadd.f32 %v5918, %v5921
      %vm5923 = vweird.f32 %v2880
      %vm5924 = vweird.f32 %v5918
      %vm5925 = vmor %vm5923, %vm5924
      %v5926 = vsel %vm5925, %v5918, %v5922
      %v5927 = vand.u32 2147483647, %v2880
      %vm5928 = vcmp.eq.f32.partialorder %v5927, 8.507059e+37
      %v5929 = vand.u32 %v2880, 2147483648
      %v5930 = vor.u32 1.1754944e-38, %v5929
      %v5931 = vsel %vm5928, %v5930, %v5926
      %v5932 = vmul.f32 1.0, %v5931
      %v5933 = vrcp.pop %v2881
      %v5934 = vmul.f32 %v2881, %v5933
      %v5935 = vsub.f32 1.0, %v5934
      %v5936 = vmul.f32 %v5933, %v5935
      %v5937 = vadd.f32 %v5933, %v5936
      %vm5938 = vweird.f32 %v2881
      %vm5939 = vweird.f32 %v5933
      %vm5940 = vmor %vm5938, %vm5939
      %v5941 = vsel %vm5940, %v5933, %v5937
      %v5942 = vand.u32 2147483647, %v2881
      %vm5943 = vcmp.eq.f32.partialorder %v5942, 8.507059e+37
      %v5944 = vand.u32 %v2881, 2147483648
      %v5945 = vor.u32 1.1754944e-38, %v5944
      %v5946 = vsel %vm5943, %v5945, %v5941
      %v5947 = vmul.f32 1.0, %v5946
      %v5948 = vrcp.pop %v2882
      %v5949 = vmul.f32 %v2882, %v5948
      %v5950 = vsub.f32 1.0, %v5949
      %v5951 = vmul.f32 %v5948, %v5950
      %v5952 = vadd.f32 %v5948, %v5951
      %vm5953 = vweird.f32 %v2882
      %vm5954 = vweird.f32 %v5948
      %vm5955 = vmor %vm5953, %vm5954
      %v5956 = vsel %vm5955, %v5948, %v5952
      %v5957 = vand.u32 2147483647, %v2882
      %vm5958 = vcmp.eq.f32.partialorder %v5957, 8.507059e+37
      %v5959 = vand.u32 %v2882, 2147483648
      %v5960 = vor.u32 1.1754944e-38, %v5959
      %v5961 = vsel %vm5958, %v5960, %v5956
      %v5962 = vmul.f32 1.0, %v5961
      %v5963 = vrcp.pop %v2883
      %v5964 = vmul.f32 %v2883, %v5963
      %v5965 = vsub.f32 1.0, %v5964
      %v5966 = vmul.f32 %v5963, %v5965
      %v5967 = vadd.f32 %v5963, %v5966
      %vm5968 = vweird.f32 %v2883
      %vm5969 = vweird.f32 %v5963
      %vm5970 = vmor %vm5968, %vm5969
      %v5971 = vsel %vm5970, %v5963, %v5967
      %v5972 = vand.u32 2147483647, %v2883
      %vm5973 = vcmp.eq.f32.partialorder %v5972, 8.507059e+37
      %v5974 = vand.u32 %v2883, 2147483648
      %v5975 = vor.u32 1.1754944e-38, %v5974
      %v5976 = vsel %vm5973, %v5975, %v5971
      %v5977 = vmul.f32 1.0, %v5976
      %v5978 = vrcp.pop %v2884
      %v5979 = vmul.f32 %v2884, %v5978
      %v5980 = vsub.f32 1.0, %v5979
      %v5981 = vmul.f32 %v5978, %v5980
      %v5982 = vadd.f32 %v5978, %v5981
      %vm5983 = vweird.f32 %v2884
      %vm5984 = vweird.f32 %v5978
      %vm5985 = vmor %vm5983, %vm5984
      %v5986 = vsel %vm5985, %v5978, %v5982
      %v5987 = vand.u32 2147483647, %v2884
      %vm5988 = vcmp.eq.f32.partialorder %v5987, 8.507059e+37
      %v5989 = vand.u32 %v2884, 2147483648
      %v5990 = vor.u32 1.1754944e-38, %v5989
      %v5991 = vsel %vm5988, %v5990, %v5986
      %v5992 = vmul.f32 1.0, %v5991
      %v5993 = vrcp.pop %v2885
      %v5994 = vmul.f32 %v2885, %v5993
      %v5995 = vsub.f32 1.0, %v5994
      %v5996 = vmul.f32 %v5993, %v5995
      %v5997 = vadd.f32 %v5993, %v5996
      %vm5998 = vweird.f32 %v2885
      %vm5999 = vweird.f32 %v5993
      %vm6000 = vmor %vm5998, %vm5999
      %v6001 = vsel %vm6000, %v5993, %v5997
      %v6002 = vand.u32 2147483647, %v2885
      %vm6003 = vcmp.eq.f32.partialorder %v6002, 8.507059e+37
      %v6004 = vand.u32 %v2885, 2147483648
      %v6005 = vor.u32 1.1754944e-38, %v6004
      %v6006 = vsel %vm6003, %v6005, %v6001
      %v6007 = vmul.f32 1.0, %v6006
      %v6008 = vrcp.pop %v2886
      %v6009 = vmul.f32 %v2886, %v6008
      %v6010 = vsub.f32 1.0, %v6009
      %v6011 = vmul.f32 %v6008, %v6010
      %v6012 = vadd.f32 %v6008, %v6011
      %vm6013 = vweird.f32 %v2886
      %vm6014 = vweird.f32 %v6008
      %vm6015 = vmor %vm6013, %vm6014
      %v6016 = vsel %vm6015, %v6008, %v6012
      %v6017 = vand.u32 2147483647, %v2886
      %vm6018 = vcmp.eq.f32.partialorder %v6017, 8.507059e+37
      %v6019 = vand.u32 %v2886, 2147483648
      %v6020 = vor.u32 1.1754944e-38, %v6019
      %v6021 = vsel %vm6018, %v6020, %v6016
      %v6022 = vmul.f32 1.0, %v6021
      %v6023 = vrcp.pop %v2887
      %v6024 = vmul.f32 %v2887, %v6023
      %v6025 = vsub.f32 1.0, %v6024
      %v6026 = vmul.f32 %v6023, %v6025
      %v6027 = vadd.f32 %v6023, %v6026
      %vm6028 = vweird.f32 %v2887
      %vm6029 = vweird.f32 %v6023
      %vm6030 = vmor %vm6028, %vm6029
      %v6031 = vsel %vm6030, %v6023, %v6027
      %v6032 = vand.u32 2147483647, %v2887
      %vm6033 = vcmp.eq.f32.partialorder %v6032, 8.507059e+37
      %v6034 = vand.u32 %v2887, 2147483648
      %v6035 = vor.u32 1.1754944e-38, %v6034
      %v6036 = vsel %vm6033, %v6035, %v6031
      %v6037 = vmul.f32 1.0, %v6036
      %v6038 = vrcp.pop %v2888
      %v6039 = vmul.f32 %v2888, %v6038
      %v6040 = vsub.f32 1.0, %v6039
      %v6041 = vmul.f32 %v6038, %v6040
      %v6042 = vadd.f32 %v6038, %v6041
      %vm6043 = vweird.f32 %v2888
      %vm6044 = vweird.f32 %v6038
      %vm6045 = vmor %vm6043, %vm6044
      %v6046 = vsel %vm6045, %v6038, %v6042
      %v6047 = vand.u32 2147483647, %v2888
      %vm6048 = vcmp.eq.f32.partialorder %v6047, 8.507059e+37
      %v6049 = vand.u32 %v2888, 2147483648
      %v6050 = vor.u32 1.1754944e-38, %v6049
      %v6051 = vsel %vm6048, %v6050, %v6046
      %v6052 = vmul.f32 1.0, %v6051
      %v6053 = vrcp.pop %v2889
      %v6054 = vmul.f32 %v2889, %v6053
      %v6055 = vsub.f32 1.0, %v6054
      %v6056 = vmul.f32 %v6053, %v6055
      %v6057 = vadd.f32 %v6053, %v6056
      %vm6058 = vweird.f32 %v2889
      %vm6059 = vweird.f32 %v6053
      %vm6060 = vmor %vm6058, %vm6059
      %v6061 = vsel %vm6060, %v6053, %v6057
      %v6062 = vand.u32 2147483647, %v2889
      %vm6063 = vcmp.eq.f32.partialorder %v6062, 8.507059e+37
      %v6064 = vand.u32 %v2889, 2147483648
      %v6065 = vor.u32 1.1754944e-38, %v6064
      %v6066 = vsel %vm6063, %v6065, %v6061
      %v6067 = vmul.f32 1.0, %v6066
      %v6068 = vrcp.pop %v2890
      %v6069 = vmul.f32 %v2890, %v6068
      %v6070 = vsub.f32 1.0, %v6069
      %v6071 = vmul.f32 %v6068, %v6070
      %v6072 = vadd.f32 %v6068, %v6071
      %vm6073 = vweird.f32 %v2890
      %vm6074 = vweird.f32 %v6068
      %vm6075 = vmor %vm6073, %vm6074
      %v6076 = vsel %vm6075, %v6068, %v6072
      %v6077 = vand.u32 2147483647, %v2890
      %vm6078 = vcmp.eq.f32.partialorder %v6077, 8.507059e+37
      %v6079 = vand.u32 %v2890, 2147483648
      %v6080 = vor.u32 1.1754944e-38, %v6079
      %v6081 = vsel %vm6078, %v6080, %v6076
      %v6082 = vmul.f32 1.0, %v6081
      %v6083 = vrcp.pop %v2891
      %v6084 = vmul.f32 %v2891, %v6083
      %v6085 = vsub.f32 1.0, %v6084
      %v6086 = vmul.f32 %v6083, %v6085
      %v6087 = vadd.f32 %v6083, %v6086
      %vm6088 = vweird.f32 %v2891
      %vm6089 = vweird.f32 %v6083
      %vm6090 = vmor %vm6088, %vm6089
      %v6091 = vsel %vm6090, %v6083, %v6087
      %v6092 = vand.u32 2147483647, %v2891
      %vm6093 = vcmp.eq.f32.partialorder %v6092, 8.507059e+37
      %v6094 = vand.u32 %v2891, 2147483648
      %v6095 = vor.u32 1.1754944e-38, %v6094
      %v6096 = vsel %vm6093, %v6095, %v6091
      %v6097 = vmul.f32 1.0, %v6096
      %v6098 = vrcp.pop %v2892
      %v6099 = vmul.f32 %v2892, %v6098
      %v6100 = vsub.f32 1.0, %v6099
      %v6101 = vmul.f32 %v6098, %v6100
      %v6102 = vadd.f32 %v6098, %v6101
      %vm6103 = vweird.f32 %v2892
      %vm6104 = vweird.f32 %v6098
      %vm6105 = vmor %vm6103, %vm6104
      %v6106 = vsel %vm6105, %v6098, %v6102
      %v6107 = vand.u32 2147483647, %v2892
      %vm6108 = vcmp.eq.f32.partialorder %v6107, 8.507059e+37
      %v6109 = vand.u32 %v2892, 2147483648
      %v6110 = vor.u32 1.1754944e-38, %v6109
      %v6111 = vsel %vm6108, %v6110, %v6106
      %v6112 = vmul.f32 1.0, %v6111
      %v6113 = vrcp.pop %v2893
      %v6114 = vmul.f32 %v2893, %v6113
      %v6115 = vsub.f32 1.0, %v6114
      %v6116 = vmul.f32 %v6113, %v6115
      %v6117 = vadd.f32 %v6113, %v6116
      %vm6118 = vweird.f32 %v2893
      %vm6119 = vweird.f32 %v6113
      %vm6120 = vmor %vm6118, %vm6119
      %v6121 = vsel %vm6120, %v6113, %v6117
      %v6122 = vand.u32 2147483647, %v2893
      %vm6123 = vcmp.eq.f32.partialorder %v6122, 8.507059e+37
      %v6124 = vand.u32 %v2893, 2147483648
      %v6125 = vor.u32 1.1754944e-38, %v6124
      %v6126 = vsel %vm6123, %v6125, %v6121
      %v6127 = vmul.f32 1.0, %v6126
      %v6128 = vrcp.pop %v2894
      %v6129 = vmul.f32 %v2894, %v6128
      %v6130 = vsub.f32 1.0, %v6129
      %v6131 = vmul.f32 %v6128, %v6130
      %v6132 = vadd.f32 %v6128, %v6131
      %vm6133 = vweird.f32 %v2894
      %vm6134 = vweird.f32 %v6128
      %vm6135 = vmor %vm6133, %vm6134
      %v6136 = vsel %vm6135, %v6128, %v6132
      %v6137 = vand.u32 2147483647, %v2894
      %vm6138 = vcmp.eq.f32.partialorder %v6137, 8.507059e+37
      %v6139 = vand.u32 %v2894, 2147483648
      %v6140 = vor.u32 1.1754944e-38, %v6139
      %v6141 = vsel %vm6138, %v6140, %v6136
      %v6142 = vmul.f32 1.0, %v6141
      %v6143 = vrcp.pop %v2895
      %v6144 = vmul.f32 %v2895, %v6143
      %v6145 = vsub.f32 1.0, %v6144
      %v6146 = vmul.f32 %v6143, %v6145
      %v6147 = vadd.f32 %v6143, %v6146
      %vm6148 = vweird.f32 %v2895
      %vm6149 = vweird.f32 %v6143
      %vm6150 = vmor %vm6148, %vm6149
      %v6151 = vsel %vm6150, %v6143, %v6147
      %v6152 = vand.u32 2147483647, %v2895
      %vm6153 = vcmp.eq.f32.partialorder %v6152, 8.507059e+37
      %v6154 = vand.u32 %v2895, 2147483648
      %v6155 = vor.u32 1.1754944e-38, %v6154
      %v6156 = vsel %vm6153, %v6155, %v6151
      %v6157 = vmul.f32 1.0, %v6156
      %v6158 = vrcp.pop %v2896
      %v6159 = vmul.f32 %v2896, %v6158
      %v6160 = vsub.f32 1.0, %v6159
      %v6161 = vmul.f32 %v6158, %v6160
      %v6162 = vadd.f32 %v6158, %v6161
      %vm6163 = vweird.f32 %v2896
      %vm6164 = vweird.f32 %v6158
      %vm6165 = vmor %vm6163, %vm6164
      %v6166 = vsel %vm6165, %v6158, %v6162
      %v6167 = vand.u32 2147483647, %v2896
      %vm6168 = vcmp.eq.f32.partialorder %v6167, 8.507059e+37
      %v6169 = vand.u32 %v2896, 2147483648
      %v6170 = vor.u32 1.1754944e-38, %v6169
      %v6171 = vsel %vm6168, %v6170, %v6166
      %v6172 = vmul.f32 1.0, %v6171
      %v6173 = vrcp.pop %v2897
      %v6174 = vmul.f32 %v2897, %v6173
      %v6175 = vsub.f32 1.0, %v6174
      %v6176 = vmul.f32 %v6173, %v6175
      %v6177 = vadd.f32 %v6173, %v6176
      %vm6178 = vweird.f32 %v2897
      %vm6179 = vweird.f32 %v6173
      %vm6180 = vmor %vm6178, %vm6179
      %v6181 = vsel %vm6180, %v6173, %v6177
      %v6182 = vand.u32 2147483647, %v2897
      %vm6183 = vcmp.eq.f32.partialorder %v6182, 8.507059e+37
      %v6184 = vand.u32 %v2897, 2147483648
      %v6185 = vor.u32 1.1754944e-38, %v6184
      %v6186 = vsel %vm6183, %v6185, %v6181
      %v6187 = vmul.f32 1.0, %v6186
      %v6188 = vrcp.pop %v2898
      %v6189 = vmul.f32 %v2898, %v6188
      %v6190 = vsub.f32 1.0, %v6189
      %v6191 = vmul.f32 %v6188, %v6190
      %v6192 = vadd.f32 %v6188, %v6191
      %vm6193 = vweird.f32 %v2898
      %vm6194 = vweird.f32 %v6188
      %vm6195 = vmor %vm6193, %vm6194
      %v6196 = vsel %vm6195, %v6188, %v6192
      %v6197 = vand.u32 2147483647, %v2898
      %vm6198 = vcmp.eq.f32.partialorder %v6197, 8.507059e+37
      %v6199 = vand.u32 %v2898, 2147483648
      %v6200 = vor.u32 1.1754944e-38, %v6199
      %v6201 = vsel %vm6198, %v6200, %v6196
      %v6202 = vmul.f32 1.0, %v6201
      %v6203 = vrcp.pop %v2899
      %v6204 = vmul.f32 %v2899, %v6203
      %v6205 = vsub.f32 1.0, %v6204
      %v6206 = vmul.f32 %v6203, %v6205
      %v6207 = vadd.f32 %v6203, %v6206
      %vm6208 = vweird.f32 %v2899
      %vm6209 = vweird.f32 %v6203
      %vm6210 = vmor %vm6208, %vm6209
      %v6211 = vsel %vm6210, %v6203, %v6207
      %v6212 = vand.u32 2147483647, %v2899
      %vm6213 = vcmp.eq.f32.partialorder %v6212, 8.507059e+37
      %v6214 = vand.u32 %v2899, 2147483648
      %v6215 = vor.u32 1.1754944e-38, %v6214
      %v6216 = vsel %vm6213, %v6215, %v6211
      %v6217 = vmul.f32 1.0, %v6216
      %v6218 = vrcp.pop %v2900
      %v6219 = vmul.f32 %v2900, %v6218
      %v6220 = vsub.f32 1.0, %v6219
      %v6221 = vmul.f32 %v6218, %v6220
      %v6222 = vadd.f32 %v6218, %v6221
      %vm6223 = vweird.f32 %v2900
      %vm6224 = vweird.f32 %v6218
      %vm6225 = vmor %vm6223, %vm6224
      %v6226 = vsel %vm6225, %v6218, %v6222
      %v6227 = vand.u32 2147483647, %v2900
      %vm6228 = vcmp.eq.f32.partialorder %v6227, 8.507059e+37
      %v6229 = vand.u32 %v2900, 2147483648
      %v6230 = vor.u32 1.1754944e-38, %v6229
      %v6231 = vsel %vm6228, %v6230, %v6226
      %v6232 = vmul.f32 1.0, %v6231
      %v6233 = vrcp.pop %v2901
      %v6234 = vmul.f32 %v2901, %v6233
      %v6235 = vsub.f32 1.0, %v6234
      %v6236 = vmul.f32 %v6233, %v6235
      %v6237 = vadd.f32 %v6233, %v6236
      %vm6238 = vweird.f32 %v2901
      %vm6239 = vweird.f32 %v6233
      %vm6240 = vmor %vm6238, %vm6239
      %v6241 = vsel %vm6240, %v6233, %v6237
      %v6242 = vand.u32 2147483647, %v2901
      %vm6243 = vcmp.eq.f32.partialorder %v6242, 8.507059e+37
      %v6244 = vand.u32 %v2901, 2147483648
      %v6245 = vor.u32 1.1754944e-38, %v6244
      %v6246 = vsel %vm6243, %v6245, %v6241
      %v6247 = vmul.f32 1.0, %v6246
      %v6248 = vrcp.pop %v2902
      %v6249 = vmul.f32 %v2902, %v6248
      %v6250 = vsub.f32 1.0, %v6249
      %v6251 = vmul.f32 %v6248, %v6250
      %v6252 = vadd.f32 %v6248, %v6251
      %vm6253 = vweird.f32 %v2902
      %vm6254 = vweird.f32 %v6248
      %vm6255 = vmor %vm6253, %vm6254
      %v6256 = vsel %vm6255, %v6248, %v6252
      %v6257 = vand.u32 2147483647, %v2902
      %vm6258 = vcmp.eq.f32.partialorder %v6257, 8.507059e+37
      %v6259 = vand.u32 %v2902, 2147483648
      %v6260 = vor.u32 1.1754944e-38, %v6259
      %v6261 = vsel %vm6258, %v6260, %v6256
      %v6262 = vmul.f32 1.0, %v6261
      %6263 = vst [vmem:[%s336] sm:$0xff] %v2917
      %6264 = vst [vmem:[%s336 + $0x8] sm:$0xff] %v2932
      %6265 = vst [vmem:[%s336 + $0x10] sm:$0xff] %v2947
      %6266 = vst [vmem:[%s336 + $0x18] sm:$0xff] %v2962
      %6267 = vst [vmem:[%s336 + $0x20] sm:$0xff] %v2977
      %6268 = vst [vmem:[%s336 + $0x28] sm:$0xff] %v2992
      %6269 = vst [vmem:[%s336 + $0x30] sm:$0xff] %v3007
      %6270 = vst [vmem:[%s336 + $0x38] sm:$0xff] %v3022
      %6271 = vst [vmem:[%s336 + $0x40] sm:$0xff] %v3037
      %6272 = vst [vmem:[%s336 + $0x48] sm:$0xff] %v3052
      %6273 = vst [vmem:[%s336 + $0x50] sm:$0xff] %v3067
      %6274 = vst [vmem:[%s336 + $0x58] sm:$0xff] %v3082
      %6275 = vst [vmem:[%s336 + $0x60] sm:$0xff] %v3097
      %6276 = vst [vmem:[%s336 + $0x68] sm:$0xff] %v3112
      %6277 = vst [vmem:[%s336 + $0x70] sm:$0xff] %v3127
      %6278 = vst [vmem:[%s336 + $0x78] sm:$0xff] %v3142
      %6279 = vst [vmem:[%s336 + $0x80] sm:$0xff] %v3157
      %6280 = vst [vmem:[%s336 + $0x88] sm:$0xff] %v3172
      %6281 = vst [vmem:[%s336 + $0x90] sm:$0xff] %v3187
      %6282 = vst [vmem:[%s336 + $0x98] sm:$0xff] %v3202
      %6283 = vst [vmem:[%s336 + $0xa0] sm:$0xff] %v3217
      %6284 = vst [vmem:[%s336 + $0xa8] sm:$0xff] %v3232
      %6285 = vst [vmem:[%s336 + $0xb0] sm:$0xff] %v3247
      %6286 = vst [vmem:[%s336 + $0xb8] sm:$0xff] %v3262
      %6287 = vst [vmem:[%s336 + $0xc0] sm:$0xff] %v3277
      %6288 = vst [vmem:[%s336 + $0xc8] sm:$0xff] %v3292
      %6289 = vst [vmem:[%s336 + $0xd0] sm:$0xff] %v3307
      %6290 = vst [vmem:[%s336 + $0xd8] sm:$0xff] %v3322
      %6291 = vst [vmem:[%s336 + $0xe0] sm:$0xff] %v3337
      %6292 = vst [vmem:[%s336 + $0xe8] sm:$0xff] %v3352
      %6293 = vst [vmem:[%s336 + $0xf0] sm:$0xff] %v3367
      %6294 = vst [vmem:[%s336 + $0xf8] sm:$0xff] %v3382
      %6295 = vst [vmem:[%s336 + $0x100] sm:$0xff] %v3397
      %6296 = vst [vmem:[%s336 + $0x108] sm:$0xff] %v3412
      %6297 = vst [vmem:[%s336 + $0x110] sm:$0xff] %v3427
      %6298 = vst [vmem:[%s336 + $0x118] sm:$0xff] %v3442
      %6299 = vst [vmem:[%s336 + $0x120] sm:$0xff] %v3457
      %6300 = vst [vmem:[%s336 + $0x128] sm:$0xff] %v3472
      %6301 = vst [vmem:[%s336 + $0x130] sm:$0xff] %v3487
      %6302 = vst [vmem:[%s336 + $0x138] sm:$0xff] %v3502
      %6303 = vst [vmem:[%s336 + $0x140] sm:$0xff] %v3517
      %6304 = vst [vmem:[%s336 + $0x148] sm:$0xff] %v3532
      %6305 = vst [vmem:[%s336 + $0x150] sm:$0xff] %v3547
      %6306 = vst [vmem:[%s336 + $0x158] sm:$0xff] %v3562
      %6307 = vst [vmem:[%s336 + $0x160] sm:$0xff] %v3577
      %6308 = vst [vmem:[%s336 + $0x168] sm:$0xff] %v3592
      %6309 = vst [vmem:[%s336 + $0x170] sm:$0xff] %v3607
      %6310 = vst [vmem:[%s336 + $0x178] sm:$0xff] %v3622
      %6311 = vst [vmem:[%s336 + $0x180] sm:$0xff] %v3637
      %6312 = vst [vmem:[%s336 + $0x188] sm:$0xff] %v3652
      %6313 = vst [vmem:[%s336 + $0x190] sm:$0xff] %v3667
      %6314 = vst [vmem:[%s336 + $0x198] sm:$0xff] %v3682
      %6315 = vst [vmem:[%s336 + $0x1a0] sm:$0xff] %v3697
      %6316 = vst [vmem:[%s336 + $0x1a8] sm:$0xff] %v3712
      %6317 = vst [vmem:[%s336 + $0x1b0] sm:$0xff] %v3727
      %6318 = vst [vmem:[%s336 + $0x1b8] sm:$0xff] %v3742
      %6319 = vst [vmem:[%s336 + $0x1c0] sm:$0xff] %v3757
      %6320 = vst [vmem:[%s336 + $0x1c8] sm:$0xff] %v3772
      %6321 = vst [vmem:[%s336 + $0x1d0] sm:$0xff] %v3787
      %6322 = vst [vmem:[%s336 + $0x1d8] sm:$0xff] %v3802
      %6323 = vst [vmem:[%s336 + $0x1e0] sm:$0xff] %v3817
      %6324 = vst [vmem:[%s336 + $0x1e8] sm:$0xff] %v3832
      %6325 = vst [vmem:[%s336 + $0x1f0] sm:$0xff] %v3847
      %6326 = vst [vmem:[%s336 + $0x1f8] sm:$0xff] %v3862
      %6327 = vst [vmem:[%s336 + $0x200] sm:$0xff] %v3877
      %6328 = vst [vmem:[%s336 + $0x208] sm:$0xff] %v3892
      %6329 = vst [vmem:[%s336 + $0x210] sm:$0xff] %v3907
      %6330 = vst [vmem:[%s336 + $0x218] sm:$0xff] %v3922
      %6331 = vst [vmem:[%s336 + $0x220] sm:$0xff] %v3937
      %6332 = vst [vmem:[%s336 + $0x228] sm:$0xff] %v3952
      %6333 = vst [vmem:[%s336 + $0x230] sm:$0xff] %v3967
      %6334 = vst [vmem:[%s336 + $0x238] sm:$0xff] %v3982
      %6335 = vst [vmem:[%s336 + $0x240] sm:$0xff] %v3997
      %6336 = vst [vmem:[%s336 + $0x248] sm:$0xff] %v4012
      %6337 = vst [vmem:[%s336 + $0x250] sm:$0xff] %v4027
      %6338 = vst [vmem:[%s336 + $0x258] sm:$0xff] %v4042
      %6339 = vst [vmem:[%s336 + $0x260] sm:$0xff] %v4057
      %6340 = vst [vmem:[%s336 + $0x268] sm:$0xff] %v4072
      %6341 = vst [vmem:[%s336 + $0x270] sm:$0xff] %v4087
      %6342 = vst [vmem:[%s336 + $0x278] sm:$0xff] %v4102
      %6343 = vst [vmem:[%s336 + $0x280] sm:$0xff] %v4117
      %6344 = vst [vmem:[%s336 + $0x288] sm:$0xff] %v4132
      %6345 = vst [vmem:[%s336 + $0x290] sm:$0xff] %v4147
      %6346 = vst [vmem:[%s336 + $0x298] sm:$0xff] %v4162
      %6347 = vst [vmem:[%s336 + $0x2a0] sm:$0xff] %v4177
      %6348 = vst [vmem:[%s336 + $0x2a8] sm:$0xff] %v4192
      %6349 = vst [vmem:[%s336 + $0x2b0] sm:$0xff] %v4207
      %6350 = vst [vmem:[%s336 + $0x2b8] sm:$0xff] %v4222
      %6351 = vst [vmem:[%s336 + $0x2c0] sm:$0xff] %v4237
      %6352 = vst [vmem:[%s336 + $0x2c8] sm:$0xff] %v4252
      %6353 = vst [vmem:[%s336 + $0x2d0] sm:$0xff] %v4267
      %6354 = vst [vmem:[%s336 + $0x2d8] sm:$0xff] %v4282
      %6355 = vst [vmem:[%s336 + $0x2e0] sm:$0xff] %v4297
      %6356 = vst [vmem:[%s336 + $0x2e8] sm:$0xff] %v4312
      %6357 = vst [vmem:[%s336 + $0x2f0] sm:$0xff] %v4327
      %6358 = vst [vmem:[%s336 + $0x2f8] sm:$0xff] %v4342
      %6359 = vst [vmem:[%s336 + $0x300] sm:$0xff] %v4357
      %6360 = vst [vmem:[%s336 + $0x308] sm:$0xff] %v4372
      %6361 = vst [vmem:[%s336 + $0x310] sm:$0xff] %v4387
      %6362 = vst [vmem:[%s336 + $0x318] sm:$0xff] %v4402
      %6363 = vst [vmem:[%s336 + $0x320] sm:$0xff] %v4417
      %6364 = vst [vmem:[%s336 + $0x328] sm:$0xff] %v4432
      %6365 = vst [vmem:[%s336 + $0x330] sm:$0xff] %v4447
      %6366 = vst [vmem:[%s336 + $0x338] sm:$0xff] %v4462
      %6367 = vst [vmem:[%s336 + $0x340] sm:$0xff] %v4477
      %6368 = vst [vmem:[%s336 + $0x348] sm:$0xff] %v4492
      %6369 = vst [vmem:[%s336 + $0x350] sm:$0xff] %v4507
      %6370 = vst [vmem:[%s336 + $0x358] sm:$0xff] %v4522
      %6371 = vst [vmem:[%s336 + $0x360] sm:$0xff] %v4537
      %6372 = vst [vmem:[%s336 + $0x368] sm:$0xff] %v4552
      %6373 = vst [vmem:[%s336 + $0x370] sm:$0xff] %v4567
      %6374 = vst [vmem:[%s336 + $0x378] sm:$0xff] %v4582
      %6375 = vst [vmem:[%s336 + $0x380] sm:$0xff] %v4597
      %6376 = vst [vmem:[%s336 + $0x388] sm:$0xff] %v4612
      %6377 = vst [vmem:[%s336 + $0x390] sm:$0xff] %v4627
      %6378 = vst [vmem:[%s336 + $0x398] sm:$0xff] %v4642
      %6379 = vst [vmem:[%s336 + $0x3a0] sm:$0xff] %v4657
      %6380 = vst [vmem:[%s336 + $0x3a8] sm:$0xff] %v4672
      %6381 = vst [vmem:[%s336 + $0x3b0] sm:$0xff] %v4687
      %6382 = vst [vmem:[%s336 + $0x3b8] sm:$0xff] %v4702
      %6383 = vst [vmem:[%s336 + $0x3c0] sm:$0xff] %v4717
      %6384 = vst [vmem:[%s336 + $0x3c8] sm:$0xff] %v4732
      %6385 = vst [vmem:[%s336 + $0x3d0] sm:$0xff] %v4747
      %6386 = vst [vmem:[%s336 + $0x3d8] sm:$0xff] %v4762
      %6387 = vst [vmem:[%s336 + $0x3e0] sm:$0xff] %v4777
      %6388 = vst [vmem:[%s336 + $0x3e8] sm:$0xff] %v4792
      %6389 = vst [vmem:[%s336 + $0x3f0] sm:$0xff] %v4807
      %6390 = vst [vmem:[%s336 + $0x3f8] sm:$0xff] %v4822
      %6391 = vst [vmem:[%s336 + $0x400] sm:$0xff] %v4837
      %6392 = vst [vmem:[%s336 + $0x408] sm:$0xff] %v4852
      %6393 = vst [vmem:[%s336 + $0x410] sm:$0xff] %v4867
      %6394 = vst [vmem:[%s336 + $0x418] sm:$0xff] %v4882
      %6395 = vst [vmem:[%s336 + $0x420] sm:$0xff] %v4897
      %6396 = vst [vmem:[%s336 + $0x428] sm:$0xff] %v4912
      %6397 = vst [vmem:[%s336 + $0x430] sm:$0xff] %v4927
      %6398 = vst [vmem:[%s336 + $0x438] sm:$0xff] %v4942
      %6399 = vst [vmem:[%s336 + $0x440] sm:$0xff] %v4957
      %6400 = vst [vmem:[%s336 + $0x448] sm:$0xff] %v4972
      %6401 = vst [vmem:[%s336 + $0x450] sm:$0xff] %v4987
      %6402 = vst [vmem:[%s336 + $0x458] sm:$0xff] %v5002
      %6403 = vst [vmem:[%s336 + $0x460] sm:$0xff] %v5017
      %6404 = vst [vmem:[%s336 + $0x468] sm:$0xff] %v5032
      %6405 = vst [vmem:[%s336 + $0x470] sm:$0xff] %v5047
      %6406 = vst [vmem:[%s336 + $0x478] sm:$0xff] %v5062
      %6407 = vst [vmem:[%s336 + $0x480] sm:$0xff] %v5077
      %6408 = vst [vmem:[%s336 + $0x488] sm:$0xff] %v5092
      %6409 = vst [vmem:[%s336 + $0x490] sm:$0xff] %v5107
      %6410 = vst [vmem:[%s336 + $0x498] sm:$0xff] %v5122
      %6411 = vst [vmem:[%s336 + $0x4a0] sm:$0xff] %v5137
      %6412 = vst [vmem:[%s336 + $0x4a8] sm:$0xff] %v5152
      %6413 = vst [vmem:[%s336 + $0x4b0] sm:$0xff] %v5167
      %6414 = vst [vmem:[%s336 + $0x4b8] sm:$0xff] %v5182
      %6415 = vst [vmem:[%s336 + $0x4c0] sm:$0xff] %v5197
      %6416 = vst [vmem:[%s336 + $0x4c8] sm:$0xff] %v5212
      %6417 = vst [vmem:[%s336 + $0x4d0] sm:$0xff] %v5227
      %6418 = vst [vmem:[%s336 + $0x4d8] sm:$0xff] %v5242
      %6419 = vst [vmem:[%s336 + $0x4e0] sm:$0xff] %v5257
      %6420 = vst [vmem:[%s336 + $0x4e8] sm:$0xff] %v5272
      %6421 = vst [vmem:[%s336 + $0x4f0] sm:$0xff] %v5287
      %6422 = vst [vmem:[%s336 + $0x4f8] sm:$0xff] %v5302
      %6423 = vst [vmem:[%s336 + $0x500] sm:$0xff] %v5317
      %6424 = vst [vmem:[%s336 + $0x508] sm:$0xff] %v5332
      %6425 = vst [vmem:[%s336 + $0x510] sm:$0xff] %v5347
      %6426 = vst [vmem:[%s336 + $0x518] sm:$0xff] %v5362
      %6427 = vst [vmem:[%s336 + $0x520] sm:$0xff] %v5377
      %6428 = vst [vmem:[%s336 + $0x528] sm:$0xff] %v5392
      %6429 = vst [vmem:[%s336 + $0x530] sm:$0xff] %v5407
      %6430 = vst [vmem:[%s336 + $0x538] sm:$0xff] %v5422
      %6431 = vst [vmem:[%s336 + $0x540] sm:$0xff] %v5437
      %6432 = vst [vmem:[%s336 + $0x548] sm:$0xff] %v5452
      %6433 = vst [vmem:[%s336 + $0x550] sm:$0xff] %v5467
      %6434 = vst [vmem:[%s336 + $0x558] sm:$0xff] %v5482
      %6435 = vst [vmem:[%s336 + $0x560] sm:$0xff] %v5497
      %6436 = vst [vmem:[%s336 + $0x568] sm:$0xff] %v5512
      %6437 = vst [vmem:[%s336 + $0x570] sm:$0xff] %v5527
      %6438 = vst [vmem:[%s336 + $0x578] sm:$0xff] %v5542
      %6439 = vst [vmem:[%s336 + $0x580] sm:$0xff] %v5557
      %6440 = vst [vmem:[%s336 + $0x588] sm:$0xff] %v5572
      %6441 = vst [vmem:[%s336 + $0x590] sm:$0xff] %v5587
      %6442 = vst [vmem:[%s336 + $0x598] sm:$0xff] %v5602
      %6443 = vst [vmem:[%s336 + $0x5a0] sm:$0xff] %v5617
      %6444 = vst [vmem:[%s336 + $0x5a8] sm:$0xff] %v5632
      %6445 = vst [vmem:[%s336 + $0x5b0] sm:$0xff] %v5647
      %6446 = vst [vmem:[%s336 + $0x5b8] sm:$0xff] %v5662
      %6447 = vst [vmem:[%s336 + $0x5c0] sm:$0xff] %v5677
      %6448 = vst [vmem:[%s336 + $0x5c8] sm:$0xff] %v5692
      %6449 = vst [vmem:[%s336 + $0x5d0] sm:$0xff] %v5707
      %6450 = vst [vmem:[%s336 + $0x5d8] sm:$0xff] %v5722
      %6451 = vst [vmem:[%s336 + $0x5e0] sm:$0xff] %v5737
      %6452 = vst [vmem:[%s336 + $0x5e8] sm:$0xff] %v5752
      %6453 = vst [vmem:[%s336 + $0x5f0] sm:$0xff] %v5767
      %6454 = vst [vmem:[%s336 + $0x5f8] sm:$0xff] %v5782
      %6455 = vst [vmem:[%s336 + $0x600] sm:$0xff] %v5797
      %6456 = vst [vmem:[%s336 + $0x608] sm:$0xff] %v5812
      %6457 = vst [vmem:[%s336 + $0x610] sm:$0xff] %v5827
      %6458 = vst [vmem:[%s336 + $0x618] sm:$0xff] %v5842
      %6459 = vst [vmem:[%s336 + $0x620] sm:$0xff] %v5857
      %6460 = vst [vmem:[%s336 + $0x628] sm:$0xff] %v5872
      %6461 = vst [vmem:[%s336 + $0x630] sm:$0xff] %v5887
      %6462 = vst [vmem:[%s336 + $0x638] sm:$0xff] %v5902
      %6463 = vst [vmem:[%s336 + $0x640] sm:$0xff] %v5917
      %6464 = vst [vmem:[%s336 + $0x648] sm:$0xff] %v5932
      %6465 = vst [vmem:[%s336 + $0x650] sm:$0xff] %v5947
      %6466 = vst [vmem:[%s336 + $0x658] sm:$0xff] %v5962
      %6467 = vst [vmem:[%s336 + $0x660] sm:$0xff] %v5977
      %6468 = vst [vmem:[%s336 + $0x668] sm:$0xff] %v5992
      %6469 = vst [vmem:[%s336 + $0x670] sm:$0xff] %v6007
      %6470 = vst [vmem:[%s336 + $0x678] sm:$0xff] %v6022
      %6471 = vst [vmem:[%s336 + $0x680] sm:$0xff] %v6037
      %6472 = vst [vmem:[%s336 + $0x688] sm:$0xff] %v6052
      %6473 = vst [vmem:[%s336 + $0x690] sm:$0xff] %v6067
      %6474 = vst [vmem:[%s336 + $0x698] sm:$0xff] %v6082
      %6475 = vst [vmem:[%s336 + $0x6a0] sm:$0xff] %v6097
      %6476 = vst [vmem:[%s336 + $0x6a8] sm:$0xff] %v6112
      %6477 = vst [vmem:[%s336 + $0x6b0] sm:$0xff] %v6127
      %6478 = vst [vmem:[%s336 + $0x6b8] sm:$0xff] %v6142
      %6479 = vst [vmem:[%s336 + $0x6c0] sm:$0xff] %v6157
      %6480 = vst [vmem:[%s336 + $0x6c8] sm:$0xff] %v6172
      %6481 = vst [vmem:[%s336 + $0x6d0] sm:$0xff] %v6187
      %6482 = vst [vmem:[%s336 + $0x6d8] sm:$0xff] %v6202
      %6483 = vst [vmem:[%s336 + $0x6e0] sm:$0xff] %v6217
      %6484 = vst [vmem:[%s336 + $0x6e8] sm:$0xff] %v6232
      %6485 = vst [vmem:[%s336 + $0x6f0] sm:$0xff] %v6247
      %6486 = vst [vmem:[%s336 + $0x6f8] sm:$0xff] %v6262
      %s6487 = smul.u32 32, %s20
      %p6488 = scmp.lt.s32.totalorder %s6487, 63
      %s6489 = scalar_select %p6488, %s6487, 63
      %s6490 = smul.addr %s6489, 7
      %s6491 = smul.addr %s6490, 8
      %s6492 = scalar_lea.vmem %s9, %s6491
      // Predicated region
      $region57: #{decoder_forward.1} parent=55 // pred_check
        %p6493 = pneg %p232
      $region58: #{decoder_forward.1} parent=55 // pred_check_branch
        %6495 = sbr.rel (%p6493) target = $region60
      $region59: #{decoder_forward.1} parent=55 // pred_region
        %s6496 = smul.u32 32, %s20
      $region60: #{decoder_forward.1} parent=55 // pred_fallthru
        _
    $region56: #{decoder_forward.1} parent=5 // pred_fallthru
      _
    %p6497 = scmp.le.s32.totalorder 2, %s15
    // Predicated region
    $region61: #{decoder_forward.1} parent=5 // pred_check
      %p6498 = pneg %p6497
    $region62: #{decoder_forward.1} parent=5 // pred_check_branch
      %6500 = sbr.rel (%p6498) target = $region64
    $region63: #{decoder_forward.1} parent=5 // pred_region
      %s6501 = ssub.s32 %s15, 2
      // Predicated region
      $region65: #{decoder_forward.1} parent=63 // pred_check
        %p6502 = pneg %p238
      $region66: #{decoder_forward.1} parent=63 // pred_check_branch
        %6504 = sbr.rel (%p6502) target = $region68
      $region67: #{decoder_forward.1} parent=63 // pred_region
        %s6505 = smul.u32 32, %s21
        %p6506 = scmp.lt.s32.totalorder %s6505, 63
        %s6507 = scalar_select %p6506, %s6505, 63
        %s6508 = smul.addr %s6507, 7
        %s6509 = smul.addr %s6508, 8
        %s6510 = scalar_lea.vmem %s9, %s6509
      $region68: #{decoder_forward.1} parent=63 // pred_fallthru
        _
    $region64: #{decoder_forward.1} parent=5 // pred_fallthru
      _
  $region6: #{decoder_forward.1} parent=0 // loop_footer
    %s19 = sadd.s32 1, %s15
  $region7: #{decoder_forward.1} parent=0 // loop_footer_branch
    %14 = sbr.rel target = $region3
  $region8: #{decoder_forward.1} parent=0 // loop_exit
    _

</llo_original>
